<compile_context>
chip_gen: v7x
topology: tpu7x:2x2x1
jax: 0.10.0
libtpu: 0.0.40
codegen_flags: <defaults>
</compile_context>

<pallas_src>
import jax
import jax.numpy as jnp
from jax.experimental import pallas as pl
from jax.experimental.pallas import tpu as pltpu


def _se_scale_kernel(x_ref, w_ref, b_ref, feat_ref, out_ref):
    # x:    [1, Cin]     squeeze input (Cin on lanes)
    # w:    [Cout, Cin]  native 1x1-conv weight layout (Cout on sublanes)
    # b:    [Cout, 1]    bias as a column
    # feat: [Cout, HW]   native NCHW feature map, spatial flattened onto lanes
    # out:  [Cout, HW]
    xb = x_ref[...].astype(jnp.float32)                        # [1, Cin]
    w = w_ref[...].astype(jnp.float32)                         # [Cout, Cin]
    # Matvec: VPU broadcast-multiply + XLU lane reduce (no M=1 MXU matmul).
    y = jnp.sum(w * xb, axis=-1, keepdims=True)                # [Cout, 1] f32
    y = y + b_ref[...].astype(jnp.float32)
    s = jax.nn.sigmoid(y)                                      # [Cout, 1] f32
    # Scale the feature map in f32, cast only on the final store.
    out_ref[...] = (feat_ref[...].astype(jnp.float32) * s).astype(out_ref.dtype)


def se_conv_sigmoid_mul(x583, x580, weight, bias):
    """Pallas equivalent of: sigmoid(Conv2d1x1(x583)) * x580.

    x583:   [1, Cin, 1, 1]
    x580:   [1, Cout, H, W]
    weight: [Cout, Cin, 1, 1]
    bias:   [Cout]
    returns [1, Cout, H, W]  (dtype of x580)
    """
    n, cin, _, _ = x583.shape
    _, cout, h, wsp = x580.shape
    assert n == 1 and x580.shape[0] == 1
    hw = h * wsp

    # All reshapes below preserve the contiguous NCHW memory layout (no copies,
    # no transposes, no pads):
    x2d = x583.reshape(1, cin)          # [1, Cin]
    w2d = weight.reshape(cout, cin)     # [Cout, Cin]   (native layout)
    b2d = bias.reshape(cout, 1)         # [Cout, 1]
    feat2d = x580.reshape(cout, hw)     # [Cout, HW]    (native layout)

    out2d = pl.pallas_call(
        _se_scale_kernel,
        out_shape=jax.ShapeDtypeStruct((cout, hw), x580.dtype),
        grid=(1,),                      # single step: op is tiny & DMA-bound
        in_specs=[
            pl.BlockSpec((1, cin), lambda i: (0, 0)),       # squeeze input
            pl.BlockSpec((cout, cin), lambda i: (0, 0)),    # conv weight
            pl.BlockSpec((cout, 1), lambda i: (0, 0)),      # bias
            pl.BlockSpec((cout, hw), lambda i: (0, 0)),     # feature map
        ],
        out_specs=pl.BlockSpec((cout, hw), lambda i: (0, 0)),
        compiler_params=pltpu.CompilerParams(
            dimension_semantics=("arbitrary",),
        ),
    )(x2d, w2d, b2d, feat2d)

    return out2d.reshape(1, cout, h, wsp)   # free reshape back to NCHW


def _reference(x583, x580, weight, bias):
    # plain-JAX reference for sanity check
    w2d = weight.reshape(weight.shape[0], weight.shape[1])
    y = (w2d @ x583.reshape(-1, 1)) + bias.reshape(-1, 1)      # [Cout, 1]
    s = jax.nn.sigmoid(y).reshape(1, -1, 1, 1)
    return s * x580


if __name__ == "__main__":
    # Shapes implied by the module: Conv2d(76, 1824, 1x1) on a 1x1 squeeze,
    # scaling a [1, 1824, 7, 7] feature map.
    CIN, COUT, H, W = 76, 1824, 7, 7

    key = jax.random.PRNGKey(0)
    k1, k2, k3, k4 = jax.random.split(key, 4)

    x583 = jax.random.normal(k1, (1, CIN, 1, 1), dtype=jnp.float32)
    x580 = jax.random.normal(k2, (1, COUT, H, W), dtype=jnp.float32)
    # deterministic synthetic Conv2d(76, 1824, 1x1) parameters
    weight = jax.random.normal(k3, (COUT, CIN, 1, 1), dtype=jnp.float32) * 0.05
    bias = jax.random.normal(k4, (COUT,), dtype=jnp.float32) * 0.05

    out = se_conv_sigmoid_mul(x583, x580, weight, bias)
    out = jax.block_until_ready(out)

    ref = _reference(x583, x580, weight, bias)
    assert out.shape == (1, COUT, H, W)
    assert jnp.allclose(out, ref, atol=1e-5, rtol=1e-5)

    print("KERNEL_OK")
</pallas_src>

<mosaic_0001>
module attributes {stable_mosaic.version = 11 : i64} {
  func.func @_se_scale_kernel(%arg0: i32, %arg1: memref<1x76xf32, #tpu.memory_space<vmem>>, %arg2: memref<1824x76xf32, #tpu.memory_space<vmem>>, %arg3: memref<1824x1xf32, #tpu.memory_space<vmem>>, %arg4: memref<1824x49xf32, #tpu.memory_space<vmem>>, %arg5: memref<1824x49xf32, #tpu.memory_space<vmem>>) attributes {dimension_semantics = [#tpu.dimension_semantics<arbitrary>], iteration_bounds = array<i64: 1>, scalar_prefetch = 0 : i64, scratch_operands = 0 : i64, tpu.core_type = #tpu.core_type<tc>, window_params = [{pipeline_mode = #tpu.pipeline_mode<synchronous>, transform_indices = @transform_0, window_bounds = array<i64: 1, 76>}, {pipeline_mode = #tpu.pipeline_mode<synchronous>, transform_indices = @transform_1, window_bounds = array<i64: 1824, 76>}, {pipeline_mode = #tpu.pipeline_mode<synchronous>, transform_indices = @transform_2, window_bounds = array<i64: 1824, 1>}, {pipeline_mode = #tpu.pipeline_mode<synchronous>, transform_indices = @transform_3, window_bounds = array<i64: 1824, 49>}, {pipeline_mode = #tpu.pipeline_mode<synchronous>, transform_indices = @transform_4, window_bounds = array<i64: 1824, 49>}]} {
    %c0 = arith.constant 0 : index
    %c0_0 = arith.constant 0 : index
    %0 = vector.load %arg1[%c0, %c0_0] : memref<1x76xf32, #tpu.memory_space<vmem>>, vector<1x76xf32>
    %c0_1 = arith.constant 0 : index
    %c0_2 = arith.constant 0 : index
    %1 = vector.load %arg2[%c0_1, %c0_2] : memref<1824x76xf32, #tpu.memory_space<vmem>>, vector<1824x76xf32>
    %2 = vector.broadcast %0 : vector<1x76xf32> to vector<1824x76xf32>
    %3 = arith.mulf %1, %2 : vector<1824x76xf32>
    %cst = arith.constant dense<0.000000e+00> : vector<1824xf32>
    %4 = vector.multi_reduction <add>, %3, %cst [1] : vector<1824x76xf32> to vector<1824xf32>
    %5 = vector.shape_cast %4 : vector<1824xf32> to vector<1824x1xf32>
    %c0_3 = arith.constant 0 : index
    %c0_4 = arith.constant 0 : index
    %6 = vector.load %arg3[%c0_3, %c0_4] : memref<1824x1xf32, #tpu.memory_space<vmem>>, vector<1824x1xf32>
    %7 = arith.addf %5, %6 : vector<1824x1xf32>
    %8 = arith.negf %7 : vector<1824x1xf32>
    %9 = math.exp %8 : vector<1824x1xf32>
    %cst_5 = arith.constant 1.000000e+00 : f32
    %10 = vector.broadcast %cst_5 : f32 to vector<1824x1xf32>
    %11 = arith.addf %10, %9 : vector<1824x1xf32>
    %12 = arith.divf %10, %11 : vector<1824x1xf32>
    %c0_6 = arith.constant 0 : index
    %c0_7 = arith.constant 0 : index
    %13 = vector.load %arg4[%c0_6, %c0_7] : memref<1824x49xf32, #tpu.memory_space<vmem>>, vector<1824x49xf32>
    %14 = vector.broadcast %12 : vector<1824x1xf32> to vector<1824x49xf32>
    %15 = arith.mulf %13, %14 : vector<1824x49xf32>
    %c0_8 = arith.constant 0 : index
    %c0_9 = arith.constant 0 : index
    %16 = vector.load %arg5[%c0_8, %c0_9] : memref<1824x49xf32, #tpu.memory_space<vmem>>, vector<1824x49xf32>
    tpu.vector_store %arg5[%c0_8, %c0_9], %15 {strides = array<i32>} : memref<1824x49xf32, #tpu.memory_space<vmem>>, vector<1824x49xf32>,
    return
  }
  func.func @transform_0(%arg0: i32) -> (i32, i32) {
    %c0_i32 = arith.constant 0 : i32
    %c0_i32_0 = arith.constant 0 : i32
    %c0_i32_1 = arith.constant 0 : i32
    return %c0_i32, %c0_i32_0 : i32, i32
  }
  func.func @transform_1(%arg0: i32) -> (i32, i32) {
    %c0_i32 = arith.constant 0 : i32
    %c0_i32_0 = arith.constant 0 : i32
    %c0_i32_1 = arith.constant 0 : i32
    return %c0_i32, %c0_i32_0 : i32, i32
  }
  func.func @transform_2(%arg0: i32) -> (i32, i32) {
    %c0_i32 = arith.constant 0 : i32
    %c0_i32_0 = arith.constant 0 : i32
    %c0_i32_1 = arith.constant 0 : i32
    return %c0_i32, %c0_i32_0 : i32, i32
  }
  func.func @transform_3(%arg0: i32) -> (i32, i32) {
    %c0_i32 = arith.constant 0 : i32
    %c0_i32_0 = arith.constant 0 : i32
    %c0_i32_1 = arith.constant 0 : i32
    return %c0_i32, %c0_i32_0 : i32, i32
  }
  func.func @transform_4(%arg0: i32) -> (i32, i32) {
    %c0_i32 = arith.constant 0 : i32
    %c0_i32_0 = arith.constant 0 : i32
    %c0_i32_1 = arith.constant 0 : i32
    return %c0_i32, %c0_i32_0 : i32, i32
  }
}

</mosaic_0001>

<llo_original>
// kernel: tpu_custom_call.1
$region0: #{tpu_custom_call.1}
  #allocation0 [shape = 'u32[]', space=smem, size = 0x4, offset = 0x4, fixed_abs, tag = 'smem constant byte address 0x4 - core index']
  #allocation1 [shape = 'u32[144,128]{1,0:T(1,128)}', space=vmem, size = 0x12000, scoped, tag = 'internal scratch']
  %s0 = inlined_call_operand.vmem [shape: f32[1,76], index: 0, kind: input, shape index: {}]
  %s1 = inlined_call_operand.vmem [shape: f32[1824,76], index: 1, kind: input, shape index: {}]
  %s2 = inlined_call_operand.vmem [shape: f32[1824,1], index: 2, kind: input, shape index: {}]
  %s3 = inlined_call_operand.vmem [shape: f32[1824,49], index: 3, kind: input, shape index: {}]
  %s4 = inlined_call_operand.vmem [shape: f32[1824,49], index: 4, kind: output, shape index: {}]
  %s5 = sld [smem:[#allocation0]]
  $region26: #{tpu_custom_call.1} parent=0
    _
  %s7 = ssub.s32 1, %s5
  %s8 = scalar_select 0, %s7, %s5
  // Predicated region
  $region2: #{tpu_custom_call.1} parent=0 // pred_check
    _
  $region3: #{tpu_custom_call.1} parent=0 // pred_check_branch
    %10 = sbr.rel (0) target = $region5
  $region4: #{tpu_custom_call.1} parent=0 // pred_region
    _
  $region5: #{tpu_custom_call.1} parent=0 // pred_fallthru
    _
  // Predicated region
  $region6: #{tpu_custom_call.1} parent=0 // pred_check
    _
  $region7: #{tpu_custom_call.1} parent=0 // pred_check_branch
    %12 = sbr.rel (0) target = $region9
  $region8: #{tpu_custom_call.1} parent=0 // pred_region
    _
  $region9: #{tpu_custom_call.1} parent=0 // pred_fallthru
    _
  // Predicated region
  $region10: #{tpu_custom_call.1} parent=0 // pred_check
    _
  $region11: #{tpu_custom_call.1} parent=0 // pred_check_branch
    %14 = sbr.rel (0) target = $region13
  $region12: #{tpu_custom_call.1} parent=0 // pred_region
    _
  $region13: #{tpu_custom_call.1} parent=0 // pred_fallthru
    _
  // Predicated region
  $region14: #{tpu_custom_call.1} parent=0 // pred_check
    _
  $region15: #{tpu_custom_call.1} parent=0 // pred_check_branch
    %16 = sbr.rel (0) target = $region17
  $region16: #{tpu_custom_call.1} parent=0 // pred_region
    _
  $region17: #{tpu_custom_call.1} parent=0 // pred_fallthru
    _
  %v17 = vld [vmem:[%s0] sm:$0x1]
  %v18 = vld [vmem:[%s1] sm:$0xff]
  %v19 = vld [vmem:[%s1 + $0x8] sm:$0xff]
  %v20 = vld [vmem:[%s1 + $0x10] sm:$0xff]
  %v21 = vld [vmem:[%s1 + $0x18] sm:$0xff]
  %v22 = vld [vmem:[%s1 + $0x20] sm:$0xff]
  %v23 = vld [vmem:[%s1 + $0x28] sm:$0xff]
  %v24 = vld [vmem:[%s1 + $0x30] sm:$0xff]
  %v25 = vld [vmem:[%s1 + $0x38] sm:$0xff]
  %v26 = vld [vmem:[%s1 + $0x40] sm:$0xff]
  %v27 = vld [vmem:[%s1 + $0x48] sm:$0xff]
  %v28 = vld [vmem:[%s1 + $0x50] sm:$0xff]
  %v29 = vld [vmem:[%s1 + $0x58] sm:$0xff]
  %v30 = vld [vmem:[%s1 + $0x60] sm:$0xff]
  %v31 = vld [vmem:[%s1 + $0x68] sm:$0xff]
  %v32 = vld [vmem:[%s1 + $0x70] sm:$0xff]
  %v33 = vld [vmem:[%s1 + $0x78] sm:$0xff]
  %v34 = vld [vmem:[%s1 + $0x80] sm:$0xff]
  %v35 = vld [vmem:[%s1 + $0x88] sm:$0xff]
  %v36 = vld [vmem:[%s1 + $0x90] sm:$0xff]
  %v37 = vld [vmem:[%s1 + $0x98] sm:$0xff]
  %v38 = vld [vmem:[%s1 + $0xa0] sm:$0xff]
  %v39 = vld [vmem:[%s1 + $0xa8] sm:$0xff]
  %v40 = vld [vmem:[%s1 + $0xb0] sm:$0xff]
  %v41 = vld [vmem:[%s1 + $0xb8] sm:$0xff]
  %v42 = vld [vmem:[%s1 + $0xc0] sm:$0xff]
  %v43 = vld [vmem:[%s1 + $0xc8] sm:$0xff]
  %v44 = vld [vmem:[%s1 + $0xd0] sm:$0xff]
  %v45 = vld [vmem:[%s1 + $0xd8] sm:$0xff]
  %v46 = vld [vmem:[%s1 + $0xe0] sm:$0xff]
  %v47 = vld [vmem:[%s1 + $0xe8] sm:$0xff]
  %v48 = vld [vmem:[%s1 + $0xf0] sm:$0xff]
  %v49 = vld [vmem:[%s1 + $0xf8] sm:$0xff]
  %v50 = vld [vmem:[%s1 + $0x100] sm:$0xff]
  %v51 = vld [vmem:[%s1 + $0x108] sm:$0xff]
  %v52 = vld [vmem:[%s1 + $0x110] sm:$0xff]
  %v53 = vld [vmem:[%s1 + $0x118] sm:$0xff]
  %v54 = vld [vmem:[%s1 + $0x120] sm:$0xff]
  %v55 = vld [vmem:[%s1 + $0x128] sm:$0xff]
  %v56 = vld [vmem:[%s1 + $0x130] sm:$0xff]
  %v57 = vld [vmem:[%s1 + $0x138] sm:$0xff]
  %v58 = vld [vmem:[%s1 + $0x140] sm:$0xff]
  %v59 = vld [vmem:[%s1 + $0x148] sm:$0xff]
  %v60 = vld [vmem:[%s1 + $0x150] sm:$0xff]
  %v61 = vld [vmem:[%s1 + $0x158] sm:$0xff]
  %v62 = vld [vmem:[%s1 + $0x160] sm:$0xff]
  %v63 = vld [vmem:[%s1 + $0x168] sm:$0xff]
  %v64 = vld [vmem:[%s1 + $0x170] sm:$0xff]
  %v65 = vld [vmem:[%s1 + $0x178] sm:$0xff]
  %v66 = vld [vmem:[%s1 + $0x180] sm:$0xff]
  %v67 = vld [vmem:[%s1 + $0x188] sm:$0xff]
  %v68 = vld [vmem:[%s1 + $0x190] sm:$0xff]
  %v69 = vld [vmem:[%s1 + $0x198] sm:$0xff]
  %v70 = vld [vmem:[%s1 + $0x1a0] sm:$0xff]
  %v71 = vld [vmem:[%s1 + $0x1a8] sm:$0xff]
  %v72 = vld [vmem:[%s1 + $0x1b0] sm:$0xff]
  %v73 = vld [vmem:[%s1 + $0x1b8] sm:$0xff]
  %v74 = vld [vmem:[%s1 + $0x1c0] sm:$0xff]
  %v75 = vld [vmem:[%s1 + $0x1c8] sm:$0xff]
  %v76 = vld [vmem:[%s1 + $0x1d0] sm:$0xff]
  %v77 = vld [vmem:[%s1 + $0x1d8] sm:$0xff]
  %v78 = vld [vmem:[%s1 + $0x1e0] sm:$0xff]
  %v79 = vld [vmem:[%s1 + $0x1e8] sm:$0xff]
  %v80 = vld [vmem:[%s1 + $0x1f0] sm:$0xff]
  %v81 = vld [vmem:[%s1 + $0x1f8] sm:$0xff]
  %v82 = vld [vmem:[%s1 + $0x200] sm:$0xff]
  %v83 = vld [vmem:[%s1 + $0x208] sm:$0xff]
  %v84 = vld [vmem:[%s1 + $0x210] sm:$0xff]
  %v85 = vld [vmem:[%s1 + $0x218] sm:$0xff]
  %v86 = vld [vmem:[%s1 + $0x220] sm:$0xff]
  %v87 = vld [vmem:[%s1 + $0x228] sm:$0xff]
  %v88 = vld [vmem:[%s1 + $0x230] sm:$0xff]
  %v89 = vld [vmem:[%s1 + $0x238] sm:$0xff]
  %v90 = vld [vmem:[%s1 + $0x240] sm:$0xff]
  %v91 = vld [vmem:[%s1 + $0x248] sm:$0xff]
  %v92 = vld [vmem:[%s1 + $0x250] sm:$0xff]
  %v93 = vld [vmem:[%s1 + $0x258] sm:$0xff]
  %v94 = vld [vmem:[%s1 + $0x260] sm:$0xff]
  %v95 = vld [vmem:[%s1 + $0x268] sm:$0xff]
  %v96 = vld [vmem:[%s1 + $0x270] sm:$0xff]
  %v97 = vld [vmem:[%s1 + $0x278] sm:$0xff]
  %v98 = vld [vmem:[%s1 + $0x280] sm:$0xff]
  %v99 = vld [vmem:[%s1 + $0x288] sm:$0xff]
  %v100 = vld [vmem:[%s1 + $0x290] sm:$0xff]
  %v101 = vld [vmem:[%s1 + $0x298] sm:$0xff]
  %v102 = vld [vmem:[%s1 + $0x2a0] sm:$0xff]
  %v103 = vld [vmem:[%s1 + $0x2a8] sm:$0xff]
  %v104 = vld [vmem:[%s1 + $0x2b0] sm:$0xff]
  %v105 = vld [vmem:[%s1 + $0x2b8] sm:$0xff]
  %v106 = vld [vmem:[%s1 + $0x2c0] sm:$0xff]
  %v107 = vld [vmem:[%s1 + $0x2c8] sm:$0xff]
  %v108 = vld [vmem:[%s1 + $0x2d0] sm:$0xff]
  %v109 = vld [vmem:[%s1 + $0x2d8] sm:$0xff]
  %v110 = vld [vmem:[%s1 + $0x2e0] sm:$0xff]
  %v111 = vld [vmem:[%s1 + $0x2e8] sm:$0xff]
  %v112 = vld [vmem:[%s1 + $0x2f0] sm:$0xff]
  %v113 = vld [vmem:[%s1 + $0x2f8] sm:$0xff]
  %v114 = vld [vmem:[%s1 + $0x300] sm:$0xff]
  %v115 = vld [vmem:[%s1 + $0x308] sm:$0xff]
  %v116 = vld [vmem:[%s1 + $0x310] sm:$0xff]
  %v117 = vld [vmem:[%s1 + $0x318] sm:$0xff]
  %v118 = vld [vmem:[%s1 + $0x320] sm:$0xff]
  %v119 = vld [vmem:[%s1 + $0x328] sm:$0xff]
  %v120 = vld [vmem:[%s1 + $0x330] sm:$0xff]
  %v121 = vld [vmem:[%s1 + $0x338] sm:$0xff]
  %v122 = vld [vmem:[%s1 + $0x340] sm:$0xff]
  %v123 = vld [vmem:[%s1 + $0x348] sm:$0xff]
  %v124 = vld [vmem:[%s1 + $0x350] sm:$0xff]
  %v125 = vld [vmem:[%s1 + $0x358] sm:$0xff]
  %v126 = vld [vmem:[%s1 + $0x360] sm:$0xff]
  %v127 = vld [vmem:[%s1 + $0x368] sm:$0xff]
  %v128 = vld [vmem:[%s1 + $0x370] sm:$0xff]
  %v129 = vld [vmem:[%s1 + $0x378] sm:$0xff]
  %v130 = vld [vmem:[%s1 + $0x380] sm:$0xff]
  %v131 = vld [vmem:[%s1 + $0x388] sm:$0xff]
  %v132 = vld [vmem:[%s1 + $0x390] sm:$0xff]
  %v133 = vld [vmem:[%s1 + $0x398] sm:$0xff]
  %v134 = vld [vmem:[%s1 + $0x3a0] sm:$0xff]
  %v135 = vld [vmem:[%s1 + $0x3a8] sm:$0xff]
  %v136 = vld [vmem:[%s1 + $0x3b0] sm:$0xff]
  %v137 = vld [vmem:[%s1 + $0x3b8] sm:$0xff]
  %v138 = vld [vmem:[%s1 + $0x3c0] sm:$0xff]
  %v139 = vld [vmem:[%s1 + $0x3c8] sm:$0xff]
  %v140 = vld [vmem:[%s1 + $0x3d0] sm:$0xff]
  %v141 = vld [vmem:[%s1 + $0x3d8] sm:$0xff]
  %v142 = vld [vmem:[%s1 + $0x3e0] sm:$0xff]
  %v143 = vld [vmem:[%s1 + $0x3e8] sm:$0xff]
  %v144 = vld [vmem:[%s1 + $0x3f0] sm:$0xff]
  %v145 = vld [vmem:[%s1 + $0x3f8] sm:$0xff]
  %v146 = vld [vmem:[%s1 + $0x400] sm:$0xff]
  %v147 = vld [vmem:[%s1 + $0x408] sm:$0xff]
  %v148 = vld [vmem:[%s1 + $0x410] sm:$0xff]
  %v149 = vld [vmem:[%s1 + $0x418] sm:$0xff]
  %v150 = vld [vmem:[%s1 + $0x420] sm:$0xff]
  %v151 = vld [vmem:[%s1 + $0x428] sm:$0xff]
  %v152 = vld [vmem:[%s1 + $0x430] sm:$0xff]
  %v153 = vld [vmem:[%s1 + $0x438] sm:$0xff]
  %v154 = vld [vmem:[%s1 + $0x440] sm:$0xff]
  %v155 = vld [vmem:[%s1 + $0x448] sm:$0xff]
  %v156 = vld [vmem:[%s1 + $0x450] sm:$0xff]
  %v157 = vld [vmem:[%s1 + $0x458] sm:$0xff]
  %v158 = vld [vmem:[%s1 + $0x460] sm:$0xff]
  %v159 = vld [vmem:[%s1 + $0x468] sm:$0xff]
  %v160 = vld [vmem:[%s1 + $0x470] sm:$0xff]
  %v161 = vld [vmem:[%s1 + $0x478] sm:$0xff]
  %v162 = vld [vmem:[%s1 + $0x480] sm:$0xff]
  %v163 = vld [vmem:[%s1 + $0x488] sm:$0xff]
  %v164 = vld [vmem:[%s1 + $0x490] sm:$0xff]
  %v165 = vld [vmem:[%s1 + $0x498] sm:$0xff]
  %v166 = vld [vmem:[%s1 + $0x4a0] sm:$0xff]
  %v167 = vld [vmem:[%s1 + $0x4a8] sm:$0xff]
  %v168 = vld [vmem:[%s1 + $0x4b0] sm:$0xff]
  %v169 = vld [vmem:[%s1 + $0x4b8] sm:$0xff]
  %v170 = vld [vmem:[%s1 + $0x4c0] sm:$0xff]
  %v171 = vld [vmem:[%s1 + $0x4c8] sm:$0xff]
  %v172 = vld [vmem:[%s1 + $0x4d0] sm:$0xff]
  %v173 = vld [vmem:[%s1 + $0x4d8] sm:$0xff]
  %v174 = vld [vmem:[%s1 + $0x4e0] sm:$0xff]
  %v175 = vld [vmem:[%s1 + $0x4e8] sm:$0xff]
  %v176 = vld [vmem:[%s1 + $0x4f0] sm:$0xff]
  %v177 = vld [vmem:[%s1 + $0x4f8] sm:$0xff]
  %v178 = vld [vmem:[%s1 + $0x500] sm:$0xff]
  %v179 = vld [vmem:[%s1 + $0x508] sm:$0xff]
  %v180 = vld [vmem:[%s1 + $0x510] sm:$0xff]
  %v181 = vld [vmem:[%s1 + $0x518] sm:$0xff]
  %v182 = vld [vmem:[%s1 + $0x520] sm:$0xff]
  %v183 = vld [vmem:[%s1 + $0x528] sm:$0xff]
  %v184 = vld [vmem:[%s1 + $0x530] sm:$0xff]
  %v185 = vld [vmem:[%s1 + $0x538] sm:$0xff]
  %v186 = vld [vmem:[%s1 + $0x540] sm:$0xff]
  %v187 = vld [vmem:[%s1 + $0x548] sm:$0xff]
  %v188 = vld [vmem:[%s1 + $0x550] sm:$0xff]
  %v189 = vld [vmem:[%s1 + $0x558] sm:$0xff]
  %v190 = vld [vmem:[%s1 + $0x560] sm:$0xff]
  %v191 = vld [vmem:[%s1 + $0x568] sm:$0xff]
  %v192 = vld [vmem:[%s1 + $0x570] sm:$0xff]
  %v193 = vld [vmem:[%s1 + $0x578] sm:$0xff]
  %v194 = vld [vmem:[%s1 + $0x580] sm:$0xff]
  %v195 = vld [vmem:[%s1 + $0x588] sm:$0xff]
  %v196 = vld [vmem:[%s1 + $0x590] sm:$0xff]
  %v197 = vld [vmem:[%s1 + $0x598] sm:$0xff]
  %v198 = vld [vmem:[%s1 + $0x5a0] sm:$0xff]
  %v199 = vld [vmem:[%s1 + $0x5a8] sm:$0xff]
  %v200 = vld [vmem:[%s1 + $0x5b0] sm:$0xff]
  %v201 = vld [vmem:[%s1 + $0x5b8] sm:$0xff]
  %v202 = vld [vmem:[%s1 + $0x5c0] sm:$0xff]
  %v203 = vld [vmem:[%s1 + $0x5c8] sm:$0xff]
  %v204 = vld [vmem:[%s1 + $0x5d0] sm:$0xff]
  %v205 = vld [vmem:[%s1 + $0x5d8] sm:$0xff]
  %v206 = vld [vmem:[%s1 + $0x5e0] sm:$0xff]
  %v207 = vld [vmem:[%s1 + $0x5e8] sm:$0xff]
  %v208 = vld [vmem:[%s1 + $0x5f0] sm:$0xff]
  %v209 = vld [vmem:[%s1 + $0x5f8] sm:$0xff]
  %v210 = vld [vmem:[%s1 + $0x600] sm:$0xff]
  %v211 = vld [vmem:[%s1 + $0x608] sm:$0xff]
  %v212 = vld [vmem:[%s1 + $0x610] sm:$0xff]
  %v213 = vld [vmem:[%s1 + $0x618] sm:$0xff]
  %v214 = vld [vmem:[%s1 + $0x620] sm:$0xff]
  %v215 = vld [vmem:[%s1 + $0x628] sm:$0xff]
  %v216 = vld [vmem:[%s1 + $0x630] sm:$0xff]
  %v217 = vld [vmem:[%s1 + $0x638] sm:$0xff]
  %v218 = vld [vmem:[%s1 + $0x640] sm:$0xff]
  %v219 = vld [vmem:[%s1 + $0x648] sm:$0xff]
  %v220 = vld [vmem:[%s1 + $0x650] sm:$0xff]
  %v221 = vld [vmem:[%s1 + $0x658] sm:$0xff]
  %v222 = vld [vmem:[%s1 + $0x660] sm:$0xff]
  %v223 = vld [vmem:[%s1 + $0x668] sm:$0xff]
  %v224 = vld [vmem:[%s1 + $0x670] sm:$0xff]
  %v225 = vld [vmem:[%s1 + $0x678] sm:$0xff]
  %v226 = vld [vmem:[%s1 + $0x680] sm:$0xff]
  %v227 = vld [vmem:[%s1 + $0x688] sm:$0xff]
  %v228 = vld [vmem:[%s1 + $0x690] sm:$0xff]
  %v229 = vld [vmem:[%s1 + $0x698] sm:$0xff]
  %v230 = vld [vmem:[%s1 + $0x6a0] sm:$0xff]
  %v231 = vld [vmem:[%s1 + $0x6a8] sm:$0xff]
  %v232 = vld [vmem:[%s1 + $0x6b0] sm:$0xff]
  %v233 = vld [vmem:[%s1 + $0x6b8] sm:$0xff]
  %v234 = vld [vmem:[%s1 + $0x6c0] sm:$0xff]
  %v235 = vld [vmem:[%s1 + $0x6c8] sm:$0xff]
  %v236 = vld [vmem:[%s1 + $0x6d0] sm:$0xff]
  %v237 = vld [vmem:[%s1 + $0x6d8] sm:$0xff]
  %v238 = vld [vmem:[%s1 + $0x6e0] sm:$0xff]
  %v239 = vld [vmem:[%s1 + $0x6e8] sm:$0xff]
  %v240 = vld [vmem:[%s1 + $0x6f0] sm:$0xff]
  %v241 = vld [vmem:[%s1 + $0x6f8] sm:$0xff]
  %v242 = vld [vmem:[%s1 + $0x700] sm:$0xff]
  %v243 = vld [vmem:[%s1 + $0x708] sm:$0xff]
  %v244 = vld [vmem:[%s1 + $0x710] sm:$0xff]
  %v245 = vld [vmem:[%s1 + $0x718] sm:$0xff]
  %v247 = vlaneseq
  %v248 = vshrl.u32 %v247, 7
  %v249 = vsub.s32 0, %v248
  %v250 = vrot.slane %v17, %v249
  %v252 = vmul.f32 %v18, %v250
  %v253 = vmul.f32 %v19, %v250
  %v254 = vmul.f32 %v20, %v250
  %v255 = vmul.f32 %v21, %v250
  %v256 = vmul.f32 %v22, %v250
  %v257 = vmul.f32 %v23, %v250
  %v258 = vmul.f32 %v24, %v250
  %v259 = vmul.f32 %v25, %v250
  %v260 = vmul.f32 %v26, %v250
  %v261 = vmul.f32 %v27, %v250
  %v262 = vmul.f32 %v28, %v250
  %v263 = vmul.f32 %v29, %v250
  %v264 = vmul.f32 %v30, %v250
  %v265 = vmul.f32 %v31, %v250
  %v266 = vmul.f32 %v32, %v250
  %v267 = vmul.f32 %v33, %v250
  %v268 = vmul.f32 %v34, %v250
  %v269 = vmul.f32 %v35, %v250
  %v270 = vmul.f32 %v36, %v250
  %v271 = vmul.f32 %v37, %v250
  %v272 = vmul.f32 %v38, %v250
  %v273 = vmul.f32 %v39, %v250
  %v274 = vmul.f32 %v40, %v250
  %v275 = vmul.f32 %v41, %v250
  %v276 = vmul.f32 %v42, %v250
  %v277 = vmul.f32 %v43, %v250
  %v278 = vmul.f32 %v44, %v250
  %v279 = vmul.f32 %v45, %v250
  %v280 = vmul.f32 %v46, %v250
  %v281 = vmul.f32 %v47, %v250
  %v282 = vmul.f32 %v48, %v250
  %v283 = vmul.f32 %v49, %v250
  %v284 = vmul.f32 %v50, %v250
  %v285 = vmul.f32 %v51, %v250
  %v286 = vmul.f32 %v52, %v250
  %v287 = vmul.f32 %v53, %v250
  %v288 = vmul.f32 %v54, %v250
  %v289 = vmul.f32 %v55, %v250
  %v290 = vmul.f32 %v56, %v250
  %v291 = vmul.f32 %v57, %v250
  %v292 = vmul.f32 %v58, %v250
  %v293 = vmul.f32 %v59, %v250
  %v294 = vmul.f32 %v60, %v250
  %v295 = vmul.f32 %v61, %v250
  %v296 = vmul.f32 %v62, %v250
  %v297 = vmul.f32 %v63, %v250
  %v298 = vmul.f32 %v64, %v250
  %v299 = vmul.f32 %v65, %v250
  %v300 = vmul.f32 %v66, %v250
  %v301 = vmul.f32 %v67, %v250
  %v302 = vmul.f32 %v68, %v250
  %v303 = vmul.f32 %v69, %v250
  %v304 = vmul.f32 %v70, %v250
  %v305 = vmul.f32 %v71, %v250
  %v306 = vmul.f32 %v72, %v250
  %v307 = vmul.f32 %v73, %v250
  %v308 = vmul.f32 %v74, %v250
  %v309 = vmul.f32 %v75, %v250
  %v310 = vmul.f32 %v76, %v250
  %v311 = vmul.f32 %v77, %v250
  %v312 = vmul.f32 %v78, %v250
  %v313 = vmul.f32 %v79, %v250
  %v314 = vmul.f32 %v80, %v250
  %v315 = vmul.f32 %v81, %v250
  %v316 = vmul.f32 %v82, %v250
  %v317 = vmul.f32 %v83, %v250
  %v318 = vmul.f32 %v84, %v250
  %v319 = vmul.f32 %v85, %v250
  %v320 = vmul.f32 %v86, %v250
  %v321 = vmul.f32 %v87, %v250
  %v322 = vmul.f32 %v88, %v250
  %v323 = vmul.f32 %v89, %v250
  %v324 = vmul.f32 %v90, %v250
  %v325 = vmul.f32 %v91, %v250
  %v326 = vmul.f32 %v92, %v250
  %v327 = vmul.f32 %v93, %v250
  %v328 = vmul.f32 %v94, %v250
  %v329 = vmul.f32 %v95, %v250
  %v330 = vmul.f32 %v96, %v250
  %v331 = vmul.f32 %v97, %v250
  %v332 = vmul.f32 %v98, %v250
  %v333 = vmul.f32 %v99, %v250
  %v334 = vmul.f32 %v100, %v250
  %v335 = vmul.f32 %v101, %v250
  %v336 = vmul.f32 %v102, %v250
  %v337 = vmul.f32 %v103, %v250
  %v338 = vmul.f32 %v104, %v250
  %v339 = vmul.f32 %v105, %v250
  %v340 = vmul.f32 %v106, %v250
  %v341 = vmul.f32 %v107, %v250
  %v342 = vmul.f32 %v108, %v250
  %v343 = vmul.f32 %v109, %v250
  %v344 = vmul.f32 %v110, %v250
  %v345 = vmul.f32 %v111, %v250
  %v346 = vmul.f32 %v112, %v250
  %v347 = vmul.f32 %v113, %v250
  %v348 = vmul.f32 %v114, %v250
  %v349 = vmul.f32 %v115, %v250
  %v350 = vmul.f32 %v116, %v250
  %v351 = vmul.f32 %v117, %v250
  %v352 = vmul.f32 %v118, %v250
  %v353 = vmul.f32 %v119, %v250
  %v354 = vmul.f32 %v120, %v250
  %v355 = vmul.f32 %v121, %v250
  %v356 = vmul.f32 %v122, %v250
  %v357 = vmul.f32 %v123, %v250
  %v358 = vmul.f32 %v124, %v250
  %v359 = vmul.f32 %v125, %v250
  %v360 = vmul.f32 %v126, %v250
  %v361 = vmul.f32 %v127, %v250
  %v362 = vmul.f32 %v128, %v250
  %v363 = vmul.f32 %v129, %v250
  %v364 = vmul.f32 %v130, %v250
  %v365 = vmul.f32 %v131, %v250
  %v366 = vmul.f32 %v132, %v250
  %v367 = vmul.f32 %v133, %v250
  %v368 = vmul.f32 %v134, %v250
  %v369 = vmul.f32 %v135, %v250
  %v370 = vmul.f32 %v136, %v250
  %v371 = vmul.f32 %v137, %v250
  %v372 = vmul.f32 %v138, %v250
  %v373 = vmul.f32 %v139, %v250
  %v374 = vmul.f32 %v140, %v250
  %v375 = vmul.f32 %v141, %v250
  %v376 = vmul.f32 %v142, %v250
  %v377 = vmul.f32 %v143, %v250
  %v378 = vmul.f32 %v144, %v250
  %v379 = vmul.f32 %v145, %v250
  %v380 = vmul.f32 %v146, %v250
  %v381 = vmul.f32 %v147, %v250
  %v382 = vmul.f32 %v148, %v250
  %v383 = vmul.f32 %v149, %v250
  %v384 = vmul.f32 %v150, %v250
  %v385 = vmul.f32 %v151, %v250
  %v386 = vmul.f32 %v152, %v250
  %v387 = vmul.f32 %v153, %v250
  %v388 = vmul.f32 %v154, %v250
  %v389 = vmul.f32 %v155, %v250
  %v390 = vmul.f32 %v156, %v250
  %v391 = vmul.f32 %v157, %v250
  %v392 = vmul.f32 %v158, %v250
  %v393 = vmul.f32 %v159, %v250
  %v394 = vmul.f32 %v160, %v250
  %v395 = vmul.f32 %v161, %v250
  %v396 = vmul.f32 %v162, %v250
  %v397 = vmul.f32 %v163, %v250
  %v398 = vmul.f32 %v164, %v250
  %v399 = vmul.f32 %v165, %v250
  %v400 = vmul.f32 %v166, %v250
  %v401 = vmul.f32 %v167, %v250
  %v402 = vmul.f32 %v168, %v250
  %v403 = vmul.f32 %v169, %v250
  %v404 = vmul.f32 %v170, %v250
  %v405 = vmul.f32 %v171, %v250
  %v406 = vmul.f32 %v172, %v250
  %v407 = vmul.f32 %v173, %v250
  %v408 = vmul.f32 %v174, %v250
  %v409 = vmul.f32 %v175, %v250
  %v410 = vmul.f32 %v176, %v250
  %v411 = vmul.f32 %v177, %v250
  %v412 = vmul.f32 %v178, %v250
  %v413 = vmul.f32 %v179, %v250
  %v414 = vmul.f32 %v180, %v250
  %v415 = vmul.f32 %v181, %v250
  %v416 = vmul.f32 %v182, %v250
  %v417 = vmul.f32 %v183, %v250
  %v418 = vmul.f32 %v184, %v250
  %v419 = vmul.f32 %v185, %v250
  %v420 = vmul.f32 %v186, %v250
  %v421 = vmul.f32 %v187, %v250
  %v422 = vmul.f32 %v188, %v250
  %v423 = vmul.f32 %v189, %v250
  %v424 = vmul.f32 %v190, %v250
  %v425 = vmul.f32 %v191, %v250
  %v426 = vmul.f32 %v192, %v250
  %v427 = vmul.f32 %v193, %v250
  %v428 = vmul.f32 %v194, %v250
  %v429 = vmul.f32 %v195, %v250
  %v430 = vmul.f32 %v196, %v250
  %v431 = vmul.f32 %v197, %v250
  %v432 = vmul.f32 %v198, %v250
  %v433 = vmul.f32 %v199, %v250
  %v434 = vmul.f32 %v200, %v250
  %v435 = vmul.f32 %v201, %v250
  %v436 = vmul.f32 %v202, %v250
  %v437 = vmul.f32 %v203, %v250
  %v438 = vmul.f32 %v204, %v250
  %v439 = vmul.f32 %v205, %v250
  %v440 = vmul.f32 %v206, %v250
  %v441 = vmul.f32 %v207, %v250
  %v442 = vmul.f32 %v208, %v250
  %v443 = vmul.f32 %v209, %v250
  %v444 = vmul.f32 %v210, %v250
  %v445 = vmul.f32 %v211, %v250
  %v446 = vmul.f32 %v212, %v250
  %v447 = vmul.f32 %v213, %v250
  %v448 = vmul.f32 %v214, %v250
  %v449 = vmul.f32 %v215, %v250
  %v450 = vmul.f32 %v216, %v250
  %v451 = vmul.f32 %v217, %v250
  %v452 = vmul.f32 %v218, %v250
  %v453 = vmul.f32 %v219, %v250
  %v454 = vmul.f32 %v220, %v250
  %v455 = vmul.f32 %v221, %v250
  %v456 = vmul.f32 %v222, %v250
  %v457 = vmul.f32 %v223, %v250
  %v458 = vmul.f32 %v224, %v250
  %v459 = vmul.f32 %v225, %v250
  %v460 = vmul.f32 %v226, %v250
  %v461 = vmul.f32 %v227, %v250
  %v462 = vmul.f32 %v228, %v250
  %v463 = vmul.f32 %v229, %v250
  %v464 = vmul.f32 %v230, %v250
  %v465 = vmul.f32 %v231, %v250
  %v466 = vmul.f32 %v232, %v250
  %v467 = vmul.f32 %v233, %v250
  %v468 = vmul.f32 %v234, %v250
  %v469 = vmul.f32 %v235, %v250
  %v470 = vmul.f32 %v236, %v250
  %v471 = vmul.f32 %v237, %v250
  %v472 = vmul.f32 %v238, %v250
  %v473 = vmul.f32 %v239, %v250
  %v474 = vmul.f32 %v240, %v250
  %v475 = vmul.f32 %v241, %v250
  %v476 = vmul.f32 %v242, %v250
  %v477 = vmul.f32 %v243, %v250
  %v478 = vmul.f32 %v244, %v250
  %v479 = vmul.f32 %v245, %v250
  %vm480 = vcmask 621568
  %v481 = vsel %vm480, %v252, 0.0
  %482 = vadd.xlane.f32.xlu0 %v481
  %v483 = vpop.xlane.xlu0 %482
  %v484 = vsel %vm480, %v253, 0.0
  %485 = vadd.xlane.f32.xlu0 %v484
  %v486 = vpop.xlane.xlu0 %485
  %v487 = vsel %vm480, %v254, 0.0
  %488 = vadd.xlane.f32.xlu0 %v487
  %v489 = vpop.xlane.xlu0 %488
  %v490 = vsel %vm480, %v255, 0.0
  %491 = vadd.xlane.f32.xlu0 %v490
  %v492 = vpop.xlane.xlu0 %491
  %v493 = vsel %vm480, %v256, 0.0
  %494 = vadd.xlane.f32.xlu0 %v493
  %v495 = vpop.xlane.xlu0 %494
  %v496 = vsel %vm480, %v257, 0.0
  %497 = vadd.xlane.f32.xlu0 %v496
  %v498 = vpop.xlane.xlu0 %497
  %v499 = vsel %vm480, %v258, 0.0
  %500 = vadd.xlane.f32.xlu0 %v499
  %v501 = vpop.xlane.xlu0 %500
  %v502 = vsel %vm480, %v259, 0.0
  %503 = vadd.xlane.f32.xlu0 %v502
  %v504 = vpop.xlane.xlu0 %503
  %v505 = vsel %vm480, %v260, 0.0
  %506 = vadd.xlane.f32.xlu0 %v505
  %v507 = vpop.xlane.xlu0 %506
  %v508 = vsel %vm480, %v261, 0.0
  %509 = vadd.xlane.f32.xlu0 %v508
  %v510 = vpop.xlane.xlu0 %509
  %v511 = vsel %vm480, %v262, 0.0
  %512 = vadd.xlane.f32.xlu0 %v511
  %v513 = vpop.xlane.xlu0 %512
  %v514 = vsel %vm480, %v263, 0.0
  %515 = vadd.xlane.f32.xlu0 %v514
  %v516 = vpop.xlane.xlu0 %515
  %v517 = vsel %vm480, %v264, 0.0
  %518 = vadd.xlane.f32.xlu0 %v517
  %v519 = vpop.xlane.xlu0 %518
  %v520 = vsel %vm480, %v265, 0.0
  %521 = vadd.xlane.f32.xlu0 %v520
  %v522 = vpop.xlane.xlu0 %521
  %v523 = vsel %vm480, %v266, 0.0
  %524 = vadd.xlane.f32.xlu0 %v523
  %v525 = vpop.xlane.xlu0 %524
  %v526 = vsel %vm480, %v267, 0.0
  %527 = vadd.xlane.f32.xlu0 %v526
  %v528 = vpop.xlane.xlu0 %527
  %v529 = vsel %vm480, %v268, 0.0
  %530 = vadd.xlane.f32.xlu0 %v529
  %v531 = vpop.xlane.xlu0 %530
  %v532 = vsel %vm480, %v269, 0.0
  %533 = vadd.xlane.f32.xlu0 %v532
  %v534 = vpop.xlane.xlu0 %533
  %v535 = vsel %vm480, %v270, 0.0
  %536 = vadd.xlane.f32.xlu0 %v535
  %v537 = vpop.xlane.xlu0 %536
  %v538 = vsel %vm480, %v271, 0.0
  %539 = vadd.xlane.f32.xlu0 %v538
  %v540 = vpop.xlane.xlu0 %539
  %v541 = vsel %vm480, %v272, 0.0
  %542 = vadd.xlane.f32.xlu0 %v541
  %v543 = vpop.xlane.xlu0 %542
  %v544 = vsel %vm480, %v273, 0.0
  %545 = vadd.xlane.f32.xlu0 %v544
  %v546 = vpop.xlane.xlu0 %545
  %v547 = vsel %vm480, %v274, 0.0
  %548 = vadd.xlane.f32.xlu0 %v547
  %v549 = vpop.xlane.xlu0 %548
  %v550 = vsel %vm480, %v275, 0.0
  %551 = vadd.xlane.f32.xlu0 %v550
  %v552 = vpop.xlane.xlu0 %551
  %v553 = vsel %vm480, %v276, 0.0
  %554 = vadd.xlane.f32.xlu0 %v553
  %v555 = vpop.xlane.xlu0 %554
  %v556 = vsel %vm480, %v277, 0.0
  %557 = vadd.xlane.f32.xlu0 %v556
  %v558 = vpop.xlane.xlu0 %557
  %v559 = vsel %vm480, %v278, 0.0
  %560 = vadd.xlane.f32.xlu0 %v559
  %v561 = vpop.xlane.xlu0 %560
  %v562 = vsel %vm480, %v279, 0.0
  %563 = vadd.xlane.f32.xlu0 %v562
  %v564 = vpop.xlane.xlu0 %563
  %v565 = vsel %vm480, %v280, 0.0
  %566 = vadd.xlane.f32.xlu0 %v565
  %v567 = vpop.xlane.xlu0 %566
  %v568 = vsel %vm480, %v281, 0.0
  %569 = vadd.xlane.f32.xlu0 %v568
  %v570 = vpop.xlane.xlu0 %569
  %v571 = vsel %vm480, %v282, 0.0
  %572 = vadd.xlane.f32.xlu0 %v571
  %v573 = vpop.xlane.xlu0 %572
  %v574 = vsel %vm480, %v283, 0.0
  %575 = vadd.xlane.f32.xlu0 %v574
  %v576 = vpop.xlane.xlu0 %575
  %v577 = vsel %vm480, %v284, 0.0
  %578 = vadd.xlane.f32.xlu0 %v577
  %v579 = vpop.xlane.xlu0 %578
  %v580 = vsel %vm480, %v285, 0.0
  %581 = vadd.xlane.f32.xlu0 %v580
  %v582 = vpop.xlane.xlu0 %581
  %v583 = vsel %vm480, %v286, 0.0
  %584 = vadd.xlane.f32.xlu0 %v583
  %v585 = vpop.xlane.xlu0 %584
  %v586 = vsel %vm480, %v287, 0.0
  %587 = vadd.xlane.f32.xlu0 %v586
  %v588 = vpop.xlane.xlu0 %587
  %v589 = vsel %vm480, %v288, 0.0
  %590 = vadd.xlane.f32.xlu0 %v589
  %v591 = vpop.xlane.xlu0 %590
  %v592 = vsel %vm480, %v289, 0.0
  %593 = vadd.xlane.f32.xlu0 %v592
  %v594 = vpop.xlane.xlu0 %593
  %v595 = vsel %vm480, %v290, 0.0
  %596 = vadd.xlane.f32.xlu0 %v595
  %v597 = vpop.xlane.xlu0 %596
  %v598 = vsel %vm480, %v291, 0.0
  %599 = vadd.xlane.f32.xlu0 %v598
  %v600 = vpop.xlane.xlu0 %599
  %v601 = vsel %vm480, %v292, 0.0
  %602 = vadd.xlane.f32.xlu0 %v601
  %v603 = vpop.xlane.xlu0 %602
  %v604 = vsel %vm480, %v293, 0.0
  %605 = vadd.xlane.f32.xlu0 %v604
  %v606 = vpop.xlane.xlu0 %605
  %v607 = vsel %vm480, %v294, 0.0
  %608 = vadd.xlane.f32.xlu0 %v607
  %v609 = vpop.xlane.xlu0 %608
  %v610 = vsel %vm480, %v295, 0.0
  %611 = vadd.xlane.f32.xlu0 %v610
  %v612 = vpop.xlane.xlu0 %611
  %v613 = vsel %vm480, %v296, 0.0
  %614 = vadd.xlane.f32.xlu0 %v613
  %v615 = vpop.xlane.xlu0 %614
  %v616 = vsel %vm480, %v297, 0.0
  %617 = vadd.xlane.f32.xlu0 %v616
  %v618 = vpop.xlane.xlu0 %617
  %v619 = vsel %vm480, %v298, 0.0
  %620 = vadd.xlane.f32.xlu0 %v619
  %v621 = vpop.xlane.xlu0 %620
  %v622 = vsel %vm480, %v299, 0.0
  %623 = vadd.xlane.f32.xlu0 %v622
  %v624 = vpop.xlane.xlu0 %623
  %v625 = vsel %vm480, %v300, 0.0
  %626 = vadd.xlane.f32.xlu0 %v625
  %v627 = vpop.xlane.xlu0 %626
  %v628 = vsel %vm480, %v301, 0.0
  %629 = vadd.xlane.f32.xlu0 %v628
  %v630 = vpop.xlane.xlu0 %629
  %v631 = vsel %vm480, %v302, 0.0
  %632 = vadd.xlane.f32.xlu0 %v631
  %v633 = vpop.xlane.xlu0 %632
  %v634 = vsel %vm480, %v303, 0.0
  %635 = vadd.xlane.f32.xlu0 %v634
  %v636 = vpop.xlane.xlu0 %635
  %v637 = vsel %vm480, %v304, 0.0
  %638 = vadd.xlane.f32.xlu0 %v637
  %v639 = vpop.xlane.xlu0 %638
  %v640 = vsel %vm480, %v305, 0.0
  %641 = vadd.xlane.f32.xlu0 %v640
  %v642 = vpop.xlane.xlu0 %641
  %v643 = vsel %vm480, %v306, 0.0
  %644 = vadd.xlane.f32.xlu0 %v643
  %v645 = vpop.xlane.xlu0 %644
  %v646 = vsel %vm480, %v307, 0.0
  %647 = vadd.xlane.f32.xlu0 %v646
  %v648 = vpop.xlane.xlu0 %647
  %v649 = vsel %vm480, %v308, 0.0
  %650 = vadd.xlane.f32.xlu0 %v649
  %v651 = vpop.xlane.xlu0 %650
  %v652 = vsel %vm480, %v309, 0.0
  %653 = vadd.xlane.f32.xlu0 %v652
  %v654 = vpop.xlane.xlu0 %653
  %v655 = vsel %vm480, %v310, 0.0
  %656 = vadd.xlane.f32.xlu0 %v655
  %v657 = vpop.xlane.xlu0 %656
  %v658 = vsel %vm480, %v311, 0.0
  %659 = vadd.xlane.f32.xlu0 %v658
  %v660 = vpop.xlane.xlu0 %659
  %v661 = vsel %vm480, %v312, 0.0
  %662 = vadd.xlane.f32.xlu0 %v661
  %v663 = vpop.xlane.xlu0 %662
  %v664 = vsel %vm480, %v313, 0.0
  %665 = vadd.xlane.f32.xlu0 %v664
  %v666 = vpop.xlane.xlu0 %665
  %v667 = vsel %vm480, %v314, 0.0
  %668 = vadd.xlane.f32.xlu0 %v667
  %v669 = vpop.xlane.xlu0 %668
  %v670 = vsel %vm480, %v315, 0.0
  %671 = vadd.xlane.f32.xlu0 %v670
  %v672 = vpop.xlane.xlu0 %671
  %v673 = vsel %vm480, %v316, 0.0
  %674 = vadd.xlane.f32.xlu0 %v673
  %v675 = vpop.xlane.xlu0 %674
  %v676 = vsel %vm480, %v317, 0.0
  %677 = vadd.xlane.f32.xlu0 %v676
  %v678 = vpop.xlane.xlu0 %677
  %v679 = vsel %vm480, %v318, 0.0
  %680 = vadd.xlane.f32.xlu0 %v679
  %v681 = vpop.xlane.xlu0 %680
  %v682 = vsel %vm480, %v319, 0.0
  %683 = vadd.xlane.f32.xlu0 %v682
  %v684 = vpop.xlane.xlu0 %683
  %v685 = vsel %vm480, %v320, 0.0
  %686 = vadd.xlane.f32.xlu0 %v685
  %v687 = vpop.xlane.xlu0 %686
  %v688 = vsel %vm480, %v321, 0.0
  %689 = vadd.xlane.f32.xlu0 %v688
  %v690 = vpop.xlane.xlu0 %689
  %v691 = vsel %vm480, %v322, 0.0
  %692 = vadd.xlane.f32.xlu0 %v691
  %v693 = vpop.xlane.xlu0 %692
  %v694 = vsel %vm480, %v323, 0.0
  %695 = vadd.xlane.f32.xlu0 %v694
  %v696 = vpop.xlane.xlu0 %695
  %v697 = vsel %vm480, %v324, 0.0
  %698 = vadd.xlane.f32.xlu0 %v697
  %v699 = vpop.xlane.xlu0 %698
  %v700 = vsel %vm480, %v325, 0.0
  %701 = vadd.xlane.f32.xlu0 %v700
  %v702 = vpop.xlane.xlu0 %701
  %v703 = vsel %vm480, %v326, 0.0
  %704 = vadd.xlane.f32.xlu0 %v703
  %v705 = vpop.xlane.xlu0 %704
  %v706 = vsel %vm480, %v327, 0.0
  %707 = vadd.xlane.f32.xlu0 %v706
  %v708 = vpop.xlane.xlu0 %707
  %v709 = vsel %vm480, %v328, 0.0
  %710 = vadd.xlane.f32.xlu0 %v709
  %v711 = vpop.xlane.xlu0 %710
  %v712 = vsel %vm480, %v329, 0.0
  %713 = vadd.xlane.f32.xlu0 %v712
  %v714 = vpop.xlane.xlu0 %713
  %v715 = vsel %vm480, %v330, 0.0
  %716 = vadd.xlane.f32.xlu0 %v715
  %v717 = vpop.xlane.xlu0 %716
  %v718 = vsel %vm480, %v331, 0.0
  %719 = vadd.xlane.f32.xlu0 %v718
  %v720 = vpop.xlane.xlu0 %719
  %v721 = vsel %vm480, %v332, 0.0
  %722 = vadd.xlane.f32.xlu0 %v721
  %v723 = vpop.xlane.xlu0 %722
  %v724 = vsel %vm480, %v333, 0.0
  %725 = vadd.xlane.f32.xlu0 %v724
  %v726 = vpop.xlane.xlu0 %725
  %v727 = vsel %vm480, %v334, 0.0
  %728 = vadd.xlane.f32.xlu0 %v727
  %v729 = vpop.xlane.xlu0 %728
  %v730 = vsel %vm480, %v335, 0.0
  %731 = vadd.xlane.f32.xlu0 %v730
  %v732 = vpop.xlane.xlu0 %731
  %v733 = vsel %vm480, %v336, 0.0
  %734 = vadd.xlane.f32.xlu0 %v733
  %v735 = vpop.xlane.xlu0 %734
  %v736 = vsel %vm480, %v337, 0.0
  %737 = vadd.xlane.f32.xlu0 %v736
  %v738 = vpop.xlane.xlu0 %737
  %v739 = vsel %vm480, %v338, 0.0
  %740 = vadd.xlane.f32.xlu0 %v739
  %v741 = vpop.xlane.xlu0 %740
  %v742 = vsel %vm480, %v339, 0.0
  %743 = vadd.xlane.f32.xlu0 %v742
  %v744 = vpop.xlane.xlu0 %743
  %v745 = vsel %vm480, %v340, 0.0
  %746 = vadd.xlane.f32.xlu0 %v745
  %v747 = vpop.xlane.xlu0 %746
  %v748 = vsel %vm480, %v341, 0.0
  %749 = vadd.xlane.f32.xlu0 %v748
  %v750 = vpop.xlane.xlu0 %749
  %v751 = vsel %vm480, %v342, 0.0
  %752 = vadd.xlane.f32.xlu0 %v751
  %v753 = vpop.xlane.xlu0 %752
  %v754 = vsel %vm480, %v343, 0.0
  %755 = vadd.xlane.f32.xlu0 %v754
  %v756 = vpop.xlane.xlu0 %755
  %v757 = vsel %vm480, %v344, 0.0
  %758 = vadd.xlane.f32.xlu0 %v757
  %v759 = vpop.xlane.xlu0 %758
  %v760 = vsel %vm480, %v345, 0.0
  %761 = vadd.xlane.f32.xlu0 %v760
  %v762 = vpop.xlane.xlu0 %761
  %v763 = vsel %vm480, %v346, 0.0
  %764 = vadd.xlane.f32.xlu0 %v763
  %v765 = vpop.xlane.xlu0 %764
  %v766 = vsel %vm480, %v347, 0.0
  %767 = vadd.xlane.f32.xlu0 %v766
  %v768 = vpop.xlane.xlu0 %767
  %v769 = vsel %vm480, %v348, 0.0
  %770 = vadd.xlane.f32.xlu0 %v769
  %v771 = vpop.xlane.xlu0 %770
  %v772 = vsel %vm480, %v349, 0.0
  %773 = vadd.xlane.f32.xlu0 %v772
  %v774 = vpop.xlane.xlu0 %773
  %v775 = vsel %vm480, %v350, 0.0
  %776 = vadd.xlane.f32.xlu0 %v775
  %v777 = vpop.xlane.xlu0 %776
  %v778 = vsel %vm480, %v351, 0.0
  %779 = vadd.xlane.f32.xlu0 %v778
  %v780 = vpop.xlane.xlu0 %779
  %v781 = vsel %vm480, %v352, 0.0
  %782 = vadd.xlane.f32.xlu0 %v781
  %v783 = vpop.xlane.xlu0 %782
  %v784 = vsel %vm480, %v353, 0.0
  %785 = vadd.xlane.f32.xlu0 %v784
  %v786 = vpop.xlane.xlu0 %785
  %v787 = vsel %vm480, %v354, 0.0
  %788 = vadd.xlane.f32.xlu0 %v787
  %v789 = vpop.xlane.xlu0 %788
  %v790 = vsel %vm480, %v355, 0.0
  %791 = vadd.xlane.f32.xlu0 %v790
  %v792 = vpop.xlane.xlu0 %791
  %v793 = vsel %vm480, %v356, 0.0
  %794 = vadd.xlane.f32.xlu0 %v793
  %v795 = vpop.xlane.xlu0 %794
  %v796 = vsel %vm480, %v357, 0.0
  %797 = vadd.xlane.f32.xlu0 %v796
  %v798 = vpop.xlane.xlu0 %797
  %v799 = vsel %vm480, %v358, 0.0
  %800 = vadd.xlane.f32.xlu0 %v799
  %v801 = vpop.xlane.xlu0 %800
  %v802 = vsel %vm480, %v359, 0.0
  %803 = vadd.xlane.f32.xlu0 %v802
  %v804 = vpop.xlane.xlu0 %803
  %v805 = vsel %vm480, %v360, 0.0
  %806 = vadd.xlane.f32.xlu0 %v805
  %v807 = vpop.xlane.xlu0 %806
  %v808 = vsel %vm480, %v361, 0.0
  %809 = vadd.xlane.f32.xlu0 %v808
  %v810 = vpop.xlane.xlu0 %809
  %v811 = vsel %vm480, %v362, 0.0
  %812 = vadd.xlane.f32.xlu0 %v811
  %v813 = vpop.xlane.xlu0 %812
  %v814 = vsel %vm480, %v363, 0.0
  %815 = vadd.xlane.f32.xlu0 %v814
  %v816 = vpop.xlane.xlu0 %815
  %v817 = vsel %vm480, %v364, 0.0
  %818 = vadd.xlane.f32.xlu0 %v817
  %v819 = vpop.xlane.xlu0 %818
  %v820 = vsel %vm480, %v365, 0.0
  %821 = vadd.xlane.f32.xlu0 %v820
  %v822 = vpop.xlane.xlu0 %821
  %v823 = vsel %vm480, %v366, 0.0
  %824 = vadd.xlane.f32.xlu0 %v823
  %v825 = vpop.xlane.xlu0 %824
  %v826 = vsel %vm480, %v367, 0.0
  %827 = vadd.xlane.f32.xlu0 %v826
  %v828 = vpop.xlane.xlu0 %827
  %v829 = vsel %vm480, %v368, 0.0
  %830 = vadd.xlane.f32.xlu0 %v829
  %v831 = vpop.xlane.xlu0 %830
  %v832 = vsel %vm480, %v369, 0.0
  %833 = vadd.xlane.f32.xlu0 %v832
  %v834 = vpop.xlane.xlu0 %833
  %v835 = vsel %vm480, %v370, 0.0
  %836 = vadd.xlane.f32.xlu0 %v835
  %v837 = vpop.xlane.xlu0 %836
  %v838 = vsel %vm480, %v371, 0.0
  %839 = vadd.xlane.f32.xlu0 %v838
  %v840 = vpop.xlane.xlu0 %839
  %v841 = vsel %vm480, %v372, 0.0
  %842 = vadd.xlane.f32.xlu0 %v841
  %v843 = vpop.xlane.xlu0 %842
  %v844 = vsel %vm480, %v373, 0.0
  %845 = vadd.xlane.f32.xlu0 %v844
  %v846 = vpop.xlane.xlu0 %845
  %v847 = vsel %vm480, %v374, 0.0
  %848 = vadd.xlane.f32.xlu0 %v847
  %v849 = vpop.xlane.xlu0 %848
  %v850 = vsel %vm480, %v375, 0.0
  %851 = vadd.xlane.f32.xlu0 %v850
  %v852 = vpop.xlane.xlu0 %851
  %v853 = vsel %vm480, %v376, 0.0
  %854 = vadd.xlane.f32.xlu0 %v853
  %v855 = vpop.xlane.xlu0 %854
  %v856 = vsel %vm480, %v377, 0.0
  %857 = vadd.xlane.f32.xlu0 %v856
  %v858 = vpop.xlane.xlu0 %857
  %v859 = vsel %vm480, %v378, 0.0
  %860 = vadd.xlane.f32.xlu0 %v859
  %v861 = vpop.xlane.xlu0 %860
  %v862 = vsel %vm480, %v379, 0.0
  %863 = vadd.xlane.f32.xlu0 %v862
  %v864 = vpop.xlane.xlu0 %863
  %v865 = vsel %vm480, %v380, 0.0
  %866 = vadd.xlane.f32.xlu0 %v865
  %v867 = vpop.xlane.xlu0 %866
  %v868 = vsel %vm480, %v381, 0.0
  %869 = vadd.xlane.f32.xlu0 %v868
  %v870 = vpop.xlane.xlu0 %869
  %v871 = vsel %vm480, %v382, 0.0
  %872 = vadd.xlane.f32.xlu0 %v871
  %v873 = vpop.xlane.xlu0 %872
  %v874 = vsel %vm480, %v383, 0.0
  %875 = vadd.xlane.f32.xlu0 %v874
  %v876 = vpop.xlane.xlu0 %875
  %v877 = vsel %vm480, %v384, 0.0
  %878 = vadd.xlane.f32.xlu0 %v877
  %v879 = vpop.xlane.xlu0 %878
  %v880 = vsel %vm480, %v385, 0.0
  %881 = vadd.xlane.f32.xlu0 %v880
  %v882 = vpop.xlane.xlu0 %881
  %v883 = vsel %vm480, %v386, 0.0
  %884 = vadd.xlane.f32.xlu0 %v883
  %v885 = vpop.xlane.xlu0 %884
  %v886 = vsel %vm480, %v387, 0.0
  %887 = vadd.xlane.f32.xlu0 %v886
  %v888 = vpop.xlane.xlu0 %887
  %v889 = vsel %vm480, %v388, 0.0
  %890 = vadd.xlane.f32.xlu0 %v889
  %v891 = vpop.xlane.xlu0 %890
  %v892 = vsel %vm480, %v389, 0.0
  %893 = vadd.xlane.f32.xlu0 %v892
  %v894 = vpop.xlane.xlu0 %893
  %v895 = vsel %vm480, %v390, 0.0
  %896 = vadd.xlane.f32.xlu0 %v895
  %v897 = vpop.xlane.xlu0 %896
  %v898 = vsel %vm480, %v391, 0.0
  %899 = vadd.xlane.f32.xlu0 %v898
  %v900 = vpop.xlane.xlu0 %899
  %v901 = vsel %vm480, %v392, 0.0
  %902 = vadd.xlane.f32.xlu0 %v901
  %v903 = vpop.xlane.xlu0 %902
  %v904 = vsel %vm480, %v393, 0.0
  %905 = vadd.xlane.f32.xlu0 %v904
  %v906 = vpop.xlane.xlu0 %905
  %v907 = vsel %vm480, %v394, 0.0
  %908 = vadd.xlane.f32.xlu0 %v907
  %v909 = vpop.xlane.xlu0 %908
  %v910 = vsel %vm480, %v395, 0.0
  %911 = vadd.xlane.f32.xlu0 %v910
  %v912 = vpop.xlane.xlu0 %911
  %v913 = vsel %vm480, %v396, 0.0
  %914 = vadd.xlane.f32.xlu0 %v913
  %v915 = vpop.xlane.xlu0 %914
  %v916 = vsel %vm480, %v397, 0.0
  %917 = vadd.xlane.f32.xlu0 %v916
  %v918 = vpop.xlane.xlu0 %917
  %v919 = vsel %vm480, %v398, 0.0
  %920 = vadd.xlane.f32.xlu0 %v919
  %v921 = vpop.xlane.xlu0 %920
  %v922 = vsel %vm480, %v399, 0.0
  %923 = vadd.xlane.f32.xlu0 %v922
  %v924 = vpop.xlane.xlu0 %923
  %v925 = vsel %vm480, %v400, 0.0
  %926 = vadd.xlane.f32.xlu0 %v925
  %v927 = vpop.xlane.xlu0 %926
  %v928 = vsel %vm480, %v401, 0.0
  %929 = vadd.xlane.f32.xlu0 %v928
  %v930 = vpop.xlane.xlu0 %929
  %v931 = vsel %vm480, %v402, 0.0
  %932 = vadd.xlane.f32.xlu0 %v931
  %v933 = vpop.xlane.xlu0 %932
  %v934 = vsel %vm480, %v403, 0.0
  %935 = vadd.xlane.f32.xlu0 %v934
  %v936 = vpop.xlane.xlu0 %935
  %v937 = vsel %vm480, %v404, 0.0
  %938 = vadd.xlane.f32.xlu0 %v937
  %v939 = vpop.xlane.xlu0 %938
  %v940 = vsel %vm480, %v405, 0.0
  %941 = vadd.xlane.f32.xlu0 %v940
  %v942 = vpop.xlane.xlu0 %941
  %v943 = vsel %vm480, %v406, 0.0
  %944 = vadd.xlane.f32.xlu0 %v943
  %v945 = vpop.xlane.xlu0 %944
  %v946 = vsel %vm480, %v407, 0.0
  %947 = vadd.xlane.f32.xlu0 %v946
  %v948 = vpop.xlane.xlu0 %947
  %v949 = vsel %vm480, %v408, 0.0
  %950 = vadd.xlane.f32.xlu0 %v949
  %v951 = vpop.xlane.xlu0 %950
  %v952 = vsel %vm480, %v409, 0.0
  %953 = vadd.xlane.f32.xlu0 %v952
  %v954 = vpop.xlane.xlu0 %953
  %v955 = vsel %vm480, %v410, 0.0
  %956 = vadd.xlane.f32.xlu0 %v955
  %v957 = vpop.xlane.xlu0 %956
  %v958 = vsel %vm480, %v411, 0.0
  %959 = vadd.xlane.f32.xlu0 %v958
  %v960 = vpop.xlane.xlu0 %959
  %v961 = vsel %vm480, %v412, 0.0
  %962 = vadd.xlane.f32.xlu0 %v961
  %v963 = vpop.xlane.xlu0 %962
  %v964 = vsel %vm480, %v413, 0.0
  %965 = vadd.xlane.f32.xlu0 %v964
  %v966 = vpop.xlane.xlu0 %965
  %v967 = vsel %vm480, %v414, 0.0
  %968 = vadd.xlane.f32.xlu0 %v967
  %v969 = vpop.xlane.xlu0 %968
  %v970 = vsel %vm480, %v415, 0.0
  %971 = vadd.xlane.f32.xlu0 %v970
  %v972 = vpop.xlane.xlu0 %971
  %v973 = vsel %vm480, %v416, 0.0
  %974 = vadd.xlane.f32.xlu0 %v973
  %v975 = vpop.xlane.xlu0 %974
  %v976 = vsel %vm480, %v417, 0.0
  %977 = vadd.xlane.f32.xlu0 %v976
  %v978 = vpop.xlane.xlu0 %977
  %v979 = vsel %vm480, %v418, 0.0
  %980 = vadd.xlane.f32.xlu0 %v979
  %v981 = vpop.xlane.xlu0 %980
  %v982 = vsel %vm480, %v419, 0.0
  %983 = vadd.xlane.f32.xlu0 %v982
  %v984 = vpop.xlane.xlu0 %983
  %v985 = vsel %vm480, %v420, 0.0
  %986 = vadd.xlane.f32.xlu0 %v985
  %v987 = vpop.xlane.xlu0 %986
  %v988 = vsel %vm480, %v421, 0.0
  %989 = vadd.xlane.f32.xlu0 %v988
  %v990 = vpop.xlane.xlu0 %989
  %v991 = vsel %vm480, %v422, 0.0
  %992 = vadd.xlane.f32.xlu0 %v991
  %v993 = vpop.xlane.xlu0 %992
  %v994 = vsel %vm480, %v423, 0.0
  %995 = vadd.xlane.f32.xlu0 %v994
  %v996 = vpop.xlane.xlu0 %995
  %v997 = vsel %vm480, %v424, 0.0
  %998 = vadd.xlane.f32.xlu0 %v997
  %v999 = vpop.xlane.xlu0 %998
  %v1000 = vsel %vm480, %v425, 0.0
  %1001 = vadd.xlane.f32.xlu0 %v1000
  %v1002 = vpop.xlane.xlu0 %1001
  %v1003 = vsel %vm480, %v426, 0.0
  %1004 = vadd.xlane.f32.xlu0 %v1003
  %v1005 = vpop.xlane.xlu0 %1004
  %v1006 = vsel %vm480, %v427, 0.0
  %1007 = vadd.xlane.f32.xlu0 %v1006
  %v1008 = vpop.xlane.xlu0 %1007
  %v1009 = vsel %vm480, %v428, 0.0
  %1010 = vadd.xlane.f32.xlu0 %v1009
  %v1011 = vpop.xlane.xlu0 %1010
  %v1012 = vsel %vm480, %v429, 0.0
  %1013 = vadd.xlane.f32.xlu0 %v1012
  %v1014 = vpop.xlane.xlu0 %1013
  %v1015 = vsel %vm480, %v430, 0.0
  %1016 = vadd.xlane.f32.xlu0 %v1015
  %v1017 = vpop.xlane.xlu0 %1016
  %v1018 = vsel %vm480, %v431, 0.0
  %1019 = vadd.xlane.f32.xlu0 %v1018
  %v1020 = vpop.xlane.xlu0 %1019
  %v1021 = vsel %vm480, %v432, 0.0
  %1022 = vadd.xlane.f32.xlu0 %v1021
  %v1023 = vpop.xlane.xlu0 %1022
  %v1024 = vsel %vm480, %v433, 0.0
  %1025 = vadd.xlane.f32.xlu0 %v1024
  %v1026 = vpop.xlane.xlu0 %1025
  %v1027 = vsel %vm480, %v434, 0.0
  %1028 = vadd.xlane.f32.xlu0 %v1027
  %v1029 = vpop.xlane.xlu0 %1028
  %v1030 = vsel %vm480, %v435, 0.0
  %1031 = vadd.xlane.f32.xlu0 %v1030
  %v1032 = vpop.xlane.xlu0 %1031
  %v1033 = vsel %vm480, %v436, 0.0
  %1034 = vadd.xlane.f32.xlu0 %v1033
  %v1035 = vpop.xlane.xlu0 %1034
  %v1036 = vsel %vm480, %v437, 0.0
  %1037 = vadd.xlane.f32.xlu0 %v1036
  %v1038 = vpop.xlane.xlu0 %1037
  %v1039 = vsel %vm480, %v438, 0.0
  %1040 = vadd.xlane.f32.xlu0 %v1039
  %v1041 = vpop.xlane.xlu0 %1040
  %v1042 = vsel %vm480, %v439, 0.0
  %1043 = vadd.xlane.f32.xlu0 %v1042
  %v1044 = vpop.xlane.xlu0 %1043
  %v1045 = vsel %vm480, %v440, 0.0
  %1046 = vadd.xlane.f32.xlu0 %v1045
  %v1047 = vpop.xlane.xlu0 %1046
  %v1048 = vsel %vm480, %v441, 0.0
  %1049 = vadd.xlane.f32.xlu0 %v1048
  %v1050 = vpop.xlane.xlu0 %1049
  %v1051 = vsel %vm480, %v442, 0.0
  %1052 = vadd.xlane.f32.xlu0 %v1051
  %v1053 = vpop.xlane.xlu0 %1052
  %v1054 = vsel %vm480, %v443, 0.0
  %1055 = vadd.xlane.f32.xlu0 %v1054
  %v1056 = vpop.xlane.xlu0 %1055
  %v1057 = vsel %vm480, %v444, 0.0
  %1058 = vadd.xlane.f32.xlu0 %v1057
  %v1059 = vpop.xlane.xlu0 %1058
  %v1060 = vsel %vm480, %v445, 0.0
  %1061 = vadd.xlane.f32.xlu0 %v1060
  %v1062 = vpop.xlane.xlu0 %1061
  %v1063 = vsel %vm480, %v446, 0.0
  %1064 = vadd.xlane.f32.xlu0 %v1063
  %v1065 = vpop.xlane.xlu0 %1064
  %v1066 = vsel %vm480, %v447, 0.0
  %1067 = vadd.xlane.f32.xlu0 %v1066
  %v1068 = vpop.xlane.xlu0 %1067
  %v1069 = vsel %vm480, %v448, 0.0
  %1070 = vadd.xlane.f32.xlu0 %v1069
  %v1071 = vpop.xlane.xlu0 %1070
  %v1072 = vsel %vm480, %v449, 0.0
  %1073 = vadd.xlane.f32.xlu0 %v1072
  %v1074 = vpop.xlane.xlu0 %1073
  %v1075 = vsel %vm480, %v450, 0.0
  %1076 = vadd.xlane.f32.xlu0 %v1075
  %v1077 = vpop.xlane.xlu0 %1076
  %v1078 = vsel %vm480, %v451, 0.0
  %1079 = vadd.xlane.f32.xlu0 %v1078
  %v1080 = vpop.xlane.xlu0 %1079
  %v1081 = vsel %vm480, %v452, 0.0
  %1082 = vadd.xlane.f32.xlu0 %v1081
  %v1083 = vpop.xlane.xlu0 %1082
  %v1084 = vsel %vm480, %v453, 0.0
  %1085 = vadd.xlane.f32.xlu0 %v1084
  %v1086 = vpop.xlane.xlu0 %1085
  %v1087 = vsel %vm480, %v454, 0.0
  %1088 = vadd.xlane.f32.xlu0 %v1087
  %v1089 = vpop.xlane.xlu0 %1088
  %v1090 = vsel %vm480, %v455, 0.0
  %1091 = vadd.xlane.f32.xlu0 %v1090
  %v1092 = vpop.xlane.xlu0 %1091
  %v1093 = vsel %vm480, %v456, 0.0
  %1094 = vadd.xlane.f32.xlu0 %v1093
  %v1095 = vpop.xlane.xlu0 %1094
  %v1096 = vsel %vm480, %v457, 0.0
  %1097 = vadd.xlane.f32.xlu0 %v1096
  %v1098 = vpop.xlane.xlu0 %1097
  %v1099 = vsel %vm480, %v458, 0.0
  %1100 = vadd.xlane.f32.xlu0 %v1099
  %v1101 = vpop.xlane.xlu0 %1100
  %v1102 = vsel %vm480, %v459, 0.0
  %1103 = vadd.xlane.f32.xlu0 %v1102
  %v1104 = vpop.xlane.xlu0 %1103
  %v1105 = vsel %vm480, %v460, 0.0
  %1106 = vadd.xlane.f32.xlu0 %v1105
  %v1107 = vpop.xlane.xlu0 %1106
  %v1108 = vsel %vm480, %v461, 0.0
  %1109 = vadd.xlane.f32.xlu0 %v1108
  %v1110 = vpop.xlane.xlu0 %1109
  %v1111 = vsel %vm480, %v462, 0.0
  %1112 = vadd.xlane.f32.xlu0 %v1111
  %v1113 = vpop.xlane.xlu0 %1112
  %v1114 = vsel %vm480, %v463, 0.0
  %1115 = vadd.xlane.f32.xlu0 %v1114
  %v1116 = vpop.xlane.xlu0 %1115
  %v1117 = vsel %vm480, %v464, 0.0
  %1118 = vadd.xlane.f32.xlu0 %v1117
  %v1119 = vpop.xlane.xlu0 %1118
  %v1120 = vsel %vm480, %v465, 0.0
  %1121 = vadd.xlane.f32.xlu0 %v1120
  %v1122 = vpop.xlane.xlu0 %1121
  %v1123 = vsel %vm480, %v466, 0.0
  %1124 = vadd.xlane.f32.xlu0 %v1123
  %v1125 = vpop.xlane.xlu0 %1124
  %v1126 = vsel %vm480, %v467, 0.0
  %1127 = vadd.xlane.f32.xlu0 %v1126
  %v1128 = vpop.xlane.xlu0 %1127
  %v1129 = vsel %vm480, %v468, 0.0
  %1130 = vadd.xlane.f32.xlu0 %v1129
  %v1131 = vpop.xlane.xlu0 %1130
  %v1132 = vsel %vm480, %v469, 0.0
  %1133 = vadd.xlane.f32.xlu0 %v1132
  %v1134 = vpop.xlane.xlu0 %1133
  %v1135 = vsel %vm480, %v470, 0.0
  %1136 = vadd.xlane.f32.xlu0 %v1135
  %v1137 = vpop.xlane.xlu0 %1136
  %v1138 = vsel %vm480, %v471, 0.0
  %1139 = vadd.xlane.f32.xlu0 %v1138
  %v1140 = vpop.xlane.xlu0 %1139
  %v1141 = vsel %vm480, %v472, 0.0
  %1142 = vadd.xlane.f32.xlu0 %v1141
  %v1143 = vpop.xlane.xlu0 %1142
  %v1144 = vsel %vm480, %v473, 0.0
  %1145 = vadd.xlane.f32.xlu0 %v1144
  %v1146 = vpop.xlane.xlu0 %1145
  %v1147 = vsel %vm480, %v474, 0.0
  %1148 = vadd.xlane.f32.xlu0 %v1147
  %v1149 = vpop.xlane.xlu0 %1148
  %v1150 = vsel %vm480, %v475, 0.0
  %1151 = vadd.xlane.f32.xlu0 %v1150
  %v1152 = vpop.xlane.xlu0 %1151
  %v1153 = vsel %vm480, %v476, 0.0
  %1154 = vadd.xlane.f32.xlu0 %v1153
  %v1155 = vpop.xlane.xlu0 %1154
  %v1156 = vsel %vm480, %v477, 0.0
  %1157 = vadd.xlane.f32.xlu0 %v1156
  %v1158 = vpop.xlane.xlu0 %1157
  %v1159 = vsel %vm480, %v478, 0.0
  %1160 = vadd.xlane.f32.xlu0 %v1159
  %v1161 = vpop.xlane.xlu0 %1160
  %v1162 = vsel %vm480, %v479, 0.0
  %1163 = vadd.xlane.f32.xlu0 %v1162
  %v1164 = vpop.xlane.xlu0 %1163
  %v1165 = vld [vmem:[%s2] sm:$0xff]
  %v1166 = vld [vmem:[%s2 + $0x8] sm:$0xff]
  %v1167 = vld [vmem:[%s2 + $0x10] sm:$0xff]
  %v1168 = vld [vmem:[%s2 + $0x18] sm:$0xff]
  %v1169 = vld [vmem:[%s2 + $0x20] sm:$0xff]
  %v1170 = vld [vmem:[%s2 + $0x28] sm:$0xff]
  %v1171 = vld [vmem:[%s2 + $0x30] sm:$0xff]
  %v1172 = vld [vmem:[%s2 + $0x38] sm:$0xff]
  %v1173 = vld [vmem:[%s2 + $0x40] sm:$0xff]
  %v1174 = vld [vmem:[%s2 + $0x48] sm:$0xff]
  %v1175 = vld [vmem:[%s2 + $0x50] sm:$0xff]
  %v1176 = vld [vmem:[%s2 + $0x58] sm:$0xff]
  %v1177 = vld [vmem:[%s2 + $0x60] sm:$0xff]
  %v1178 = vld [vmem:[%s2 + $0x68] sm:$0xff]
  %v1179 = vld [vmem:[%s2 + $0x70] sm:$0xff]
  %v1180 = vld [vmem:[%s2 + $0x78] sm:$0xff]
  %v1181 = vld [vmem:[%s2 + $0x80] sm:$0xff]
  %v1182 = vld [vmem:[%s2 + $0x88] sm:$0xff]
  %v1183 = vld [vmem:[%s2 + $0x90] sm:$0xff]
  %v1184 = vld [vmem:[%s2 + $0x98] sm:$0xff]
  %v1185 = vld [vmem:[%s2 + $0xa0] sm:$0xff]
  %v1186 = vld [vmem:[%s2 + $0xa8] sm:$0xff]
  %v1187 = vld [vmem:[%s2 + $0xb0] sm:$0xff]
  %v1188 = vld [vmem:[%s2 + $0xb8] sm:$0xff]
  %v1189 = vld [vmem:[%s2 + $0xc0] sm:$0xff]
  %v1190 = vld [vmem:[%s2 + $0xc8] sm:$0xff]
  %v1191 = vld [vmem:[%s2 + $0xd0] sm:$0xff]
  %v1192 = vld [vmem:[%s2 + $0xd8] sm:$0xff]
  %v1193 = vld [vmem:[%s2 + $0xe0] sm:$0xff]
  %v1194 = vld [vmem:[%s2 + $0xe8] sm:$0xff]
  %v1195 = vld [vmem:[%s2 + $0xf0] sm:$0xff]
  %v1196 = vld [vmem:[%s2 + $0xf8] sm:$0xff]
  %v1197 = vld [vmem:[%s2 + $0x100] sm:$0xff]
  %v1198 = vld [vmem:[%s2 + $0x108] sm:$0xff]
  %v1199 = vld [vmem:[%s2 + $0x110] sm:$0xff]
  %v1200 = vld [vmem:[%s2 + $0x118] sm:$0xff]
  %v1201 = vld [vmem:[%s2 + $0x120] sm:$0xff]
  %v1202 = vld [vmem:[%s2 + $0x128] sm:$0xff]
  %v1203 = vld [vmem:[%s2 + $0x130] sm:$0xff]
  %v1204 = vld [vmem:[%s2 + $0x138] sm:$0xff]
  %v1205 = vld [vmem:[%s2 + $0x140] sm:$0xff]
  %v1206 = vld [vmem:[%s2 + $0x148] sm:$0xff]
  %v1207 = vld [vmem:[%s2 + $0x150] sm:$0xff]
  %v1208 = vld [vmem:[%s2 + $0x158] sm:$0xff]
  %v1209 = vld [vmem:[%s2 + $0x160] sm:$0xff]
  %v1210 = vld [vmem:[%s2 + $0x168] sm:$0xff]
  %v1211 = vld [vmem:[%s2 + $0x170] sm:$0xff]
  %v1212 = vld [vmem:[%s2 + $0x178] sm:$0xff]
  %v1213 = vld [vmem:[%s2 + $0x180] sm:$0xff]
  %v1214 = vld [vmem:[%s2 + $0x188] sm:$0xff]
  %v1215 = vld [vmem:[%s2 + $0x190] sm:$0xff]
  %v1216 = vld [vmem:[%s2 + $0x198] sm:$0xff]
  %v1217 = vld [vmem:[%s2 + $0x1a0] sm:$0xff]
  %v1218 = vld [vmem:[%s2 + $0x1a8] sm:$0xff]
  %v1219 = vld [vmem:[%s2 + $0x1b0] sm:$0xff]
  %v1220 = vld [vmem:[%s2 + $0x1b8] sm:$0xff]
  %v1221 = vld [vmem:[%s2 + $0x1c0] sm:$0xff]
  %v1222 = vld [vmem:[%s2 + $0x1c8] sm:$0xff]
  %v1223 = vld [vmem:[%s2 + $0x1d0] sm:$0xff]
  %v1224 = vld [vmem:[%s2 + $0x1d8] sm:$0xff]
  %v1225 = vld [vmem:[%s2 + $0x1e0] sm:$0xff]
  %v1226 = vld [vmem:[%s2 + $0x1e8] sm:$0xff]
  %v1227 = vld [vmem:[%s2 + $0x1f0] sm:$0xff]
  %v1228 = vld [vmem:[%s2 + $0x1f8] sm:$0xff]
  %v1229 = vld [vmem:[%s2 + $0x200] sm:$0xff]
  %v1230 = vld [vmem:[%s2 + $0x208] sm:$0xff]
  %v1231 = vld [vmem:[%s2 + $0x210] sm:$0xff]
  %v1232 = vld [vmem:[%s2 + $0x218] sm:$0xff]
  %v1233 = vld [vmem:[%s2 + $0x220] sm:$0xff]
  %v1234 = vld [vmem:[%s2 + $0x228] sm:$0xff]
  %v1235 = vld [vmem:[%s2 + $0x230] sm:$0xff]
  %v1236 = vld [vmem:[%s2 + $0x238] sm:$0xff]
  %v1237 = vld [vmem:[%s2 + $0x240] sm:$0xff]
  %v1238 = vld [vmem:[%s2 + $0x248] sm:$0xff]
  %v1239 = vld [vmem:[%s2 + $0x250] sm:$0xff]
  %v1240 = vld [vmem:[%s2 + $0x258] sm:$0xff]
  %v1241 = vld [vmem:[%s2 + $0x260] sm:$0xff]
  %v1242 = vld [vmem:[%s2 + $0x268] sm:$0xff]
  %v1243 = vld [vmem:[%s2 + $0x270] sm:$0xff]
  %v1244 = vld [vmem:[%s2 + $0x278] sm:$0xff]
  %v1245 = vld [vmem:[%s2 + $0x280] sm:$0xff]
  %v1246 = vld [vmem:[%s2 + $0x288] sm:$0xff]
  %v1247 = vld [vmem:[%s2 + $0x290] sm:$0xff]
  %v1248 = vld [vmem:[%s2 + $0x298] sm:$0xff]
  %v1249 = vld [vmem:[%s2 + $0x2a0] sm:$0xff]
  %v1250 = vld [vmem:[%s2 + $0x2a8] sm:$0xff]
  %v1251 = vld [vmem:[%s2 + $0x2b0] sm:$0xff]
  %v1252 = vld [vmem:[%s2 + $0x2b8] sm:$0xff]
  %v1253 = vld [vmem:[%s2 + $0x2c0] sm:$0xff]
  %v1254 = vld [vmem:[%s2 + $0x2c8] sm:$0xff]
  %v1255 = vld [vmem:[%s2 + $0x2d0] sm:$0xff]
  %v1256 = vld [vmem:[%s2 + $0x2d8] sm:$0xff]
  %v1257 = vld [vmem:[%s2 + $0x2e0] sm:$0xff]
  %v1258 = vld [vmem:[%s2 + $0x2e8] sm:$0xff]
  %v1259 = vld [vmem:[%s2 + $0x2f0] sm:$0xff]
  %v1260 = vld [vmem:[%s2 + $0x2f8] sm:$0xff]
  %v1261 = vld [vmem:[%s2 + $0x300] sm:$0xff]
  %v1262 = vld [vmem:[%s2 + $0x308] sm:$0xff]
  %v1263 = vld [vmem:[%s2 + $0x310] sm:$0xff]
  %v1264 = vld [vmem:[%s2 + $0x318] sm:$0xff]
  %v1265 = vld [vmem:[%s2 + $0x320] sm:$0xff]
  %v1266 = vld [vmem:[%s2 + $0x328] sm:$0xff]
  %v1267 = vld [vmem:[%s2 + $0x330] sm:$0xff]
  %v1268 = vld [vmem:[%s2 + $0x338] sm:$0xff]
  %v1269 = vld [vmem:[%s2 + $0x340] sm:$0xff]
  %v1270 = vld [vmem:[%s2 + $0x348] sm:$0xff]
  %v1271 = vld [vmem:[%s2 + $0x350] sm:$0xff]
  %v1272 = vld [vmem:[%s2 + $0x358] sm:$0xff]
  %v1273 = vld [vmem:[%s2 + $0x360] sm:$0xff]
  %v1274 = vld [vmem:[%s2 + $0x368] sm:$0xff]
  %v1275 = vld [vmem:[%s2 + $0x370] sm:$0xff]
  %v1276 = vld [vmem:[%s2 + $0x378] sm:$0xff]
  %v1277 = vld [vmem:[%s2 + $0x380] sm:$0xff]
  %v1278 = vld [vmem:[%s2 + $0x388] sm:$0xff]
  %v1279 = vld [vmem:[%s2 + $0x390] sm:$0xff]
  %v1280 = vld [vmem:[%s2 + $0x398] sm:$0xff]
  %v1281 = vld [vmem:[%s2 + $0x3a0] sm:$0xff]
  %v1282 = vld [vmem:[%s2 + $0x3a8] sm:$0xff]
  %v1283 = vld [vmem:[%s2 + $0x3b0] sm:$0xff]
  %v1284 = vld [vmem:[%s2 + $0x3b8] sm:$0xff]
  %v1285 = vld [vmem:[%s2 + $0x3c0] sm:$0xff]
  %v1286 = vld [vmem:[%s2 + $0x3c8] sm:$0xff]
  %v1287 = vld [vmem:[%s2 + $0x3d0] sm:$0xff]
  %v1288 = vld [vmem:[%s2 + $0x3d8] sm:$0xff]
  %v1289 = vld [vmem:[%s2 + $0x3e0] sm:$0xff]
  %v1290 = vld [vmem:[%s2 + $0x3e8] sm:$0xff]
  %v1291 = vld [vmem:[%s2 + $0x3f0] sm:$0xff]
  %v1292 = vld [vmem:[%s2 + $0x3f8] sm:$0xff]
  %v1293 = vld [vmem:[%s2 + $0x400] sm:$0xff]
  %v1294 = vld [vmem:[%s2 + $0x408] sm:$0xff]
  %v1295 = vld [vmem:[%s2 + $0x410] sm:$0xff]
  %v1296 = vld [vmem:[%s2 + $0x418] sm:$0xff]
  %v1297 = vld [vmem:[%s2 + $0x420] sm:$0xff]
  %v1298 = vld [vmem:[%s2 + $0x428] sm:$0xff]
  %v1299 = vld [vmem:[%s2 + $0x430] sm:$0xff]
  %v1300 = vld [vmem:[%s2 + $0x438] sm:$0xff]
  %v1301 = vld [vmem:[%s2 + $0x440] sm:$0xff]
  %v1302 = vld [vmem:[%s2 + $0x448] sm:$0xff]
  %v1303 = vld [vmem:[%s2 + $0x450] sm:$0xff]
  %v1304 = vld [vmem:[%s2 + $0x458] sm:$0xff]
  %v1305 = vld [vmem:[%s2 + $0x460] sm:$0xff]
  %v1306 = vld [vmem:[%s2 + $0x468] sm:$0xff]
  %v1307 = vld [vmem:[%s2 + $0x470] sm:$0xff]
  %v1308 = vld [vmem:[%s2 + $0x478] sm:$0xff]
  %v1309 = vld [vmem:[%s2 + $0x480] sm:$0xff]
  %v1310 = vld [vmem:[%s2 + $0x488] sm:$0xff]
  %v1311 = vld [vmem:[%s2 + $0x490] sm:$0xff]
  %v1312 = vld [vmem:[%s2 + $0x498] sm:$0xff]
  %v1313 = vld [vmem:[%s2 + $0x4a0] sm:$0xff]
  %v1314 = vld [vmem:[%s2 + $0x4a8] sm:$0xff]
  %v1315 = vld [vmem:[%s2 + $0x4b0] sm:$0xff]
  %v1316 = vld [vmem:[%s2 + $0x4b8] sm:$0xff]
  %v1317 = vld [vmem:[%s2 + $0x4c0] sm:$0xff]
  %v1318 = vld [vmem:[%s2 + $0x4c8] sm:$0xff]
  %v1319 = vld [vmem:[%s2 + $0x4d0] sm:$0xff]
  %v1320 = vld [vmem:[%s2 + $0x4d8] sm:$0xff]
  %v1321 = vld [vmem:[%s2 + $0x4e0] sm:$0xff]
  %v1322 = vld [vmem:[%s2 + $0x4e8] sm:$0xff]
  %v1323 = vld [vmem:[%s2 + $0x4f0] sm:$0xff]
  %v1324 = vld [vmem:[%s2 + $0x4f8] sm:$0xff]
  %v1325 = vld [vmem:[%s2 + $0x500] sm:$0xff]
  %v1326 = vld [vmem:[%s2 + $0x508] sm:$0xff]
  %v1327 = vld [vmem:[%s2 + $0x510] sm:$0xff]
  %v1328 = vld [vmem:[%s2 + $0x518] sm:$0xff]
  %v1329 = vld [vmem:[%s2 + $0x520] sm:$0xff]
  %v1330 = vld [vmem:[%s2 + $0x528] sm:$0xff]
  %v1331 = vld [vmem:[%s2 + $0x530] sm:$0xff]
  %v1332 = vld [vmem:[%s2 + $0x538] sm:$0xff]
  %v1333 = vld [vmem:[%s2 + $0x540] sm:$0xff]
  %v1334 = vld [vmem:[%s2 + $0x548] sm:$0xff]
  %v1335 = vld [vmem:[%s2 + $0x550] sm:$0xff]
  %v1336 = vld [vmem:[%s2 + $0x558] sm:$0xff]
  %v1337 = vld [vmem:[%s2 + $0x560] sm:$0xff]
  %v1338 = vld [vmem:[%s2 + $0x568] sm:$0xff]
  %v1339 = vld [vmem:[%s2 + $0x570] sm:$0xff]
  %v1340 = vld [vmem:[%s2 + $0x578] sm:$0xff]
  %v1341 = vld [vmem:[%s2 + $0x580] sm:$0xff]
  %v1342 = vld [vmem:[%s2 + $0x588] sm:$0xff]
  %v1343 = vld [vmem:[%s2 + $0x590] sm:$0xff]
  %v1344 = vld [vmem:[%s2 + $0x598] sm:$0xff]
  %v1345 = vld [vmem:[%s2 + $0x5a0] sm:$0xff]
  %v1346 = vld [vmem:[%s2 + $0x5a8] sm:$0xff]
  %v1347 = vld [vmem:[%s2 + $0x5b0] sm:$0xff]
  %v1348 = vld [vmem:[%s2 + $0x5b8] sm:$0xff]
  %v1349 = vld [vmem:[%s2 + $0x5c0] sm:$0xff]
  %v1350 = vld [vmem:[%s2 + $0x5c8] sm:$0xff]
  %v1351 = vld [vmem:[%s2 + $0x5d0] sm:$0xff]
  %v1352 = vld [vmem:[%s2 + $0x5d8] sm:$0xff]
  %v1353 = vld [vmem:[%s2 + $0x5e0] sm:$0xff]
  %v1354 = vld [vmem:[%s2 + $0x5e8] sm:$0xff]
  %v1355 = vld [vmem:[%s2 + $0x5f0] sm:$0xff]
  %v1356 = vld [vmem:[%s2 + $0x5f8] sm:$0xff]
  %v1357 = vld [vmem:[%s2 + $0x600] sm:$0xff]
  %v1358 = vld [vmem:[%s2 + $0x608] sm:$0xff]
  %v1359 = vld [vmem:[%s2 + $0x610] sm:$0xff]
  %v1360 = vld [vmem:[%s2 + $0x618] sm:$0xff]
  %v1361 = vld [vmem:[%s2 + $0x620] sm:$0xff]
  %v1362 = vld [vmem:[%s2 + $0x628] sm:$0xff]
  %v1363 = vld [vmem:[%s2 + $0x630] sm:$0xff]
  %v1364 = vld [vmem:[%s2 + $0x638] sm:$0xff]
  %v1365 = vld [vmem:[%s2 + $0x640] sm:$0xff]
  %v1366 = vld [vmem:[%s2 + $0x648] sm:$0xff]
  %v1367 = vld [vmem:[%s2 + $0x650] sm:$0xff]
  %v1368 = vld [vmem:[%s2 + $0x658] sm:$0xff]
  %v1369 = vld [vmem:[%s2 + $0x660] sm:$0xff]
  %v1370 = vld [vmem:[%s2 + $0x668] sm:$0xff]
  %v1371 = vld [vmem:[%s2 + $0x670] sm:$0xff]
  %v1372 = vld [vmem:[%s2 + $0x678] sm:$0xff]
  %v1373 = vld [vmem:[%s2 + $0x680] sm:$0xff]
  %v1374 = vld [vmem:[%s2 + $0x688] sm:$0xff]
  %v1375 = vld [vmem:[%s2 + $0x690] sm:$0xff]
  %v1376 = vld [vmem:[%s2 + $0x698] sm:$0xff]
  %v1377 = vld [vmem:[%s2 + $0x6a0] sm:$0xff]
  %v1378 = vld [vmem:[%s2 + $0x6a8] sm:$0xff]
  %v1379 = vld [vmem:[%s2 + $0x6b0] sm:$0xff]
  %v1380 = vld [vmem:[%s2 + $0x6b8] sm:$0xff]
  %v1381 = vld [vmem:[%s2 + $0x6c0] sm:$0xff]
  %v1382 = vld [vmem:[%s2 + $0x6c8] sm:$0xff]
  %v1383 = vld [vmem:[%s2 + $0x6d0] sm:$0xff]
  %v1384 = vld [vmem:[%s2 + $0x6d8] sm:$0xff]
  %v1385 = vld [vmem:[%s2 + $0x6e0] sm:$0xff]
  %v1386 = vld [vmem:[%s2 + $0x6e8] sm:$0xff]
  %v1387 = vld [vmem:[%s2 + $0x6f0] sm:$0xff]
  %v1388 = vld [vmem:[%s2 + $0x6f8] sm:$0xff]
  %v1389 = vld [vmem:[%s2 + $0x700] sm:$0xff]
  %v1390 = vld [vmem:[%s2 + $0x708] sm:$0xff]
  %v1391 = vld [vmem:[%s2 + $0x710] sm:$0xff]
  %v1392 = vld [vmem:[%s2 + $0x718] sm:$0xff]
  %v1393 = vadd.f32 %v483, %v1165
  %v1394 = vadd.f32 %v486, %v1166
  %v1395 = vadd.f32 %v489, %v1167
  %v1396 = vadd.f32 %v492, %v1168
  %v1397 = vadd.f32 %v495, %v1169
  %v1398 = vadd.f32 %v498, %v1170
  %v1399 = vadd.f32 %v501, %v1171
  %v1400 = vadd.f32 %v504, %v1172
  %v1401 = vadd.f32 %v507, %v1173
  %v1402 = vadd.f32 %v510, %v1174
  %v1403 = vadd.f32 %v513, %v1175
  %v1404 = vadd.f32 %v516, %v1176
  %v1405 = vadd.f32 %v519, %v1177
  %v1406 = vadd.f32 %v522, %v1178
  %v1407 = vadd.f32 %v525, %v1179
  %v1408 = vadd.f32 %v528, %v1180
  %v1409 = vadd.f32 %v531, %v1181
  %v1410 = vadd.f32 %v534, %v1182
  %v1411 = vadd.f32 %v537, %v1183
  %v1412 = vadd.f32 %v540, %v1184
  %v1413 = vadd.f32 %v543, %v1185
  %v1414 = vadd.f32 %v546, %v1186
  %v1415 = vadd.f32 %v549, %v1187
  %v1416 = vadd.f32 %v552, %v1188
  %v1417 = vadd.f32 %v555, %v1189
  %v1418 = vadd.f32 %v558, %v1190
  %v1419 = vadd.f32 %v561, %v1191
  %v1420 = vadd.f32 %v564, %v1192
  %v1421 = vadd.f32 %v567, %v1193
  %v1422 = vadd.f32 %v570, %v1194
  %v1423 = vadd.f32 %v573, %v1195
  %v1424 = vadd.f32 %v576, %v1196
  %v1425 = vadd.f32 %v579, %v1197
  %v1426 = vadd.f32 %v582, %v1198
  %v1427 = vadd.f32 %v585, %v1199
  %v1428 = vadd.f32 %v588, %v1200
  %v1429 = vadd.f32 %v591, %v1201
  %v1430 = vadd.f32 %v594, %v1202
  %v1431 = vadd.f32 %v597, %v1203
  %v1432 = vadd.f32 %v600, %v1204
  %v1433 = vadd.f32 %v603, %v1205
  %v1434 = vadd.f32 %v606, %v1206
  %v1435 = vadd.f32 %v609, %v1207
  %v1436 = vadd.f32 %v612, %v1208
  %v1437 = vadd.f32 %v615, %v1209
  %v1438 = vadd.f32 %v618, %v1210
  %v1439 = vadd.f32 %v621, %v1211
  %v1440 = vadd.f32 %v624, %v1212
  %v1441 = vadd.f32 %v627, %v1213
  %v1442 = vadd.f32 %v630, %v1214
  %v1443 = vadd.f32 %v633, %v1215
  %v1444 = vadd.f32 %v636, %v1216
  %v1445 = vadd.f32 %v639, %v1217
  %v1446 = vadd.f32 %v642, %v1218
  %v1447 = vadd.f32 %v645, %v1219
  %v1448 = vadd.f32 %v648, %v1220
  %v1449 = vadd.f32 %v651, %v1221
  %v1450 = vadd.f32 %v654, %v1222
  %v1451 = vadd.f32 %v657, %v1223
  %v1452 = vadd.f32 %v660, %v1224
  %v1453 = vadd.f32 %v663, %v1225
  %v1454 = vadd.f32 %v666, %v1226
  %v1455 = vadd.f32 %v669, %v1227
  %v1456 = vadd.f32 %v672, %v1228
  %v1457 = vadd.f32 %v675, %v1229
  %v1458 = vadd.f32 %v678, %v1230
  %v1459 = vadd.f32 %v681, %v1231
  %v1460 = vadd.f32 %v684, %v1232
  %v1461 = vadd.f32 %v687, %v1233
  %v1462 = vadd.f32 %v690, %v1234
  %v1463 = vadd.f32 %v693, %v1235
  %v1464 = vadd.f32 %v696, %v1236
  %v1465 = vadd.f32 %v699, %v1237
  %v1466 = vadd.f32 %v702, %v1238
  %v1467 = vadd.f32 %v705, %v1239
  %v1468 = vadd.f32 %v708, %v1240
  %v1469 = vadd.f32 %v711, %v1241
  %v1470 = vadd.f32 %v714, %v1242
  %v1471 = vadd.f32 %v717, %v1243
  %v1472 = vadd.f32 %v720, %v1244
  %v1473 = vadd.f32 %v723, %v1245
  %v1474 = vadd.f32 %v726, %v1246
  %v1475 = vadd.f32 %v729, %v1247
  %v1476 = vadd.f32 %v732, %v1248
  %v1477 = vadd.f32 %v735, %v1249
  %v1478 = vadd.f32 %v738, %v1250
  %v1479 = vadd.f32 %v741, %v1251
  %v1480 = vadd.f32 %v744, %v1252
  %v1481 = vadd.f32 %v747, %v1253
  %v1482 = vadd.f32 %v750, %v1254
  %v1483 = vadd.f32 %v753, %v1255
  %v1484 = vadd.f32 %v756, %v1256
  %v1485 = vadd.f32 %v759, %v1257
  %v1486 = vadd.f32 %v762, %v1258
  %v1487 = vadd.f32 %v765, %v1259
  %v1488 = vadd.f32 %v768, %v1260
  %v1489 = vadd.f32 %v771, %v1261
  %v1490 = vadd.f32 %v774, %v1262
  %v1491 = vadd.f32 %v777, %v1263
  %v1492 = vadd.f32 %v780, %v1264
  %v1493 = vadd.f32 %v783, %v1265
  %v1494 = vadd.f32 %v786, %v1266
  %v1495 = vadd.f32 %v789, %v1267
  %v1496 = vadd.f32 %v792, %v1268
  %v1497 = vadd.f32 %v795, %v1269
  %v1498 = vadd.f32 %v798, %v1270
  %v1499 = vadd.f32 %v801, %v1271
  %v1500 = vadd.f32 %v804, %v1272
  %v1501 = vadd.f32 %v807, %v1273
  %v1502 = vadd.f32 %v810, %v1274
  %v1503 = vadd.f32 %v813, %v1275
  %v1504 = vadd.f32 %v816, %v1276
  %v1505 = vadd.f32 %v819, %v1277
  %v1506 = vadd.f32 %v822, %v1278
  %v1507 = vadd.f32 %v825, %v1279
  %v1508 = vadd.f32 %v828, %v1280
  %v1509 = vadd.f32 %v831, %v1281
  %v1510 = vadd.f32 %v834, %v1282
  %v1511 = vadd.f32 %v837, %v1283
  %v1512 = vadd.f32 %v840, %v1284
  %v1513 = vadd.f32 %v843, %v1285
  %v1514 = vadd.f32 %v846, %v1286
  %v1515 = vadd.f32 %v849, %v1287
  %v1516 = vadd.f32 %v852, %v1288
  %v1517 = vadd.f32 %v855, %v1289
  %v1518 = vadd.f32 %v858, %v1290
  %v1519 = vadd.f32 %v861, %v1291
  %v1520 = vadd.f32 %v864, %v1292
  %v1521 = vadd.f32 %v867, %v1293
  %v1522 = vadd.f32 %v870, %v1294
  %v1523 = vadd.f32 %v873, %v1295
  %v1524 = vadd.f32 %v876, %v1296
  %v1525 = vadd.f32 %v879, %v1297
  %v1526 = vadd.f32 %v882, %v1298
  %v1527 = vadd.f32 %v885, %v1299
  %v1528 = vadd.f32 %v888, %v1300
  %v1529 = vadd.f32 %v891, %v1301
  %v1530 = vadd.f32 %v894, %v1302
  %v1531 = vadd.f32 %v897, %v1303
  %v1532 = vadd.f32 %v900, %v1304
  %v1533 = vadd.f32 %v903, %v1305
  %v1534 = vadd.f32 %v906, %v1306
  %v1535 = vadd.f32 %v909, %v1307
  %v1536 = vadd.f32 %v912, %v1308
  %v1537 = vadd.f32 %v915, %v1309
  %v1538 = vadd.f32 %v918, %v1310
  %v1539 = vadd.f32 %v921, %v1311
  %v1540 = vadd.f32 %v924, %v1312
  %v1541 = vadd.f32 %v927, %v1313
  %v1542 = vadd.f32 %v930, %v1314
  %v1543 = vadd.f32 %v933, %v1315
  %v1544 = vadd.f32 %v936, %v1316
  %v1545 = vadd.f32 %v939, %v1317
  %v1546 = vadd.f32 %v942, %v1318
  %v1547 = vadd.f32 %v945, %v1319
  %v1548 = vadd.f32 %v948, %v1320
  %v1549 = vadd.f32 %v951, %v1321
  %v1550 = vadd.f32 %v954, %v1322
  %v1551 = vadd.f32 %v957, %v1323
  %v1552 = vadd.f32 %v960, %v1324
  %v1553 = vadd.f32 %v963, %v1325
  %v1554 = vadd.f32 %v966, %v1326
  %v1555 = vadd.f32 %v969, %v1327
  %v1556 = vadd.f32 %v972, %v1328
  %v1557 = vadd.f32 %v975, %v1329
  %v1558 = vadd.f32 %v978, %v1330
  %v1559 = vadd.f32 %v981, %v1331
  %v1560 = vadd.f32 %v984, %v1332
  %v1561 = vadd.f32 %v987, %v1333
  %v1562 = vadd.f32 %v990, %v1334
  %v1563 = vadd.f32 %v993, %v1335
  %v1564 = vadd.f32 %v996, %v1336
  %v1565 = vadd.f32 %v999, %v1337
  %v1566 = vadd.f32 %v1002, %v1338
  %v1567 = vadd.f32 %v1005, %v1339
  %v1568 = vadd.f32 %v1008, %v1340
  %v1569 = vadd.f32 %v1011, %v1341
  %v1570 = vadd.f32 %v1014, %v1342
  %v1571 = vadd.f32 %v1017, %v1343
  %v1572 = vadd.f32 %v1020, %v1344
  %v1573 = vadd.f32 %v1023, %v1345
  %v1574 = vadd.f32 %v1026, %v1346
  %v1575 = vadd.f32 %v1029, %v1347
  %v1576 = vadd.f32 %v1032, %v1348
  %v1577 = vadd.f32 %v1035, %v1349
  %v1578 = vadd.f32 %v1038, %v1350
  %v1579 = vadd.f32 %v1041, %v1351
  %v1580 = vadd.f32 %v1044, %v1352
  %v1581 = vadd.f32 %v1047, %v1353
  %v1582 = vadd.f32 %v1050, %v1354
  %v1583 = vadd.f32 %v1053, %v1355
  %v1584 = vadd.f32 %v1056, %v1356
  %v1585 = vadd.f32 %v1059, %v1357
  %v1586 = vadd.f32 %v1062, %v1358
  %v1587 = vadd.f32 %v1065, %v1359
  %v1588 = vadd.f32 %v1068, %v1360
  %v1589 = vadd.f32 %v1071, %v1361
  %v1590 = vadd.f32 %v1074, %v1362
  %v1591 = vadd.f32 %v1077, %v1363
  %v1592 = vadd.f32 %v1080, %v1364
  %v1593 = vadd.f32 %v1083, %v1365
  %v1594 = vadd.f32 %v1086, %v1366
  %v1595 = vadd.f32 %v1089, %v1367
  %v1596 = vadd.f32 %v1092, %v1368
  %v1597 = vadd.f32 %v1095, %v1369
  %v1598 = vadd.f32 %v1098, %v1370
  %v1599 = vadd.f32 %v1101, %v1371
  %v1600 = vadd.f32 %v1104, %v1372
  %v1601 = vadd.f32 %v1107, %v1373
  %v1602 = vadd.f32 %v1110, %v1374
  %v1603 = vadd.f32 %v1113, %v1375
  %v1604 = vadd.f32 %v1116, %v1376
  %v1605 = vadd.f32 %v1119, %v1377
  %v1606 = vadd.f32 %v1122, %v1378
  %v1607 = vadd.f32 %v1125, %v1379
  %v1608 = vadd.f32 %v1128, %v1380
  %v1609 = vadd.f32 %v1131, %v1381
  %v1610 = vadd.f32 %v1134, %v1382
  %v1611 = vadd.f32 %v1137, %v1383
  %v1612 = vadd.f32 %v1140, %v1384
  %v1613 = vadd.f32 %v1143, %v1385
  %v1614 = vadd.f32 %v1146, %v1386
  %v1615 = vadd.f32 %v1149, %v1387
  %v1616 = vadd.f32 %v1152, %v1388
  %v1617 = vadd.f32 %v1155, %v1389
  %v1618 = vadd.f32 %v1158, %v1390
  %v1619 = vadd.f32 %v1161, %v1391
  %v1620 = vadd.f32 %v1164, %v1392
  %v1621 = vxor.u32 %v1393, 2147483648
  %v1622 = vxor.u32 %v1394, 2147483648
  %v1623 = vxor.u32 %v1395, 2147483648
  %v1624 = vxor.u32 %v1396, 2147483648
  %v1625 = vxor.u32 %v1397, 2147483648
  %v1626 = vxor.u32 %v1398, 2147483648
  %v1627 = vxor.u32 %v1399, 2147483648
  %v1628 = vxor.u32 %v1400, 2147483648
  %v1629 = vxor.u32 %v1401, 2147483648
  %v1630 = vxor.u32 %v1402, 2147483648
  %v1631 = vxor.u32 %v1403, 2147483648
  %v1632 = vxor.u32 %v1404, 2147483648
  %v1633 = vxor.u32 %v1405, 2147483648
  %v1634 = vxor.u32 %v1406, 2147483648
  %v1635 = vxor.u32 %v1407, 2147483648
  %v1636 = vxor.u32 %v1408, 2147483648
  %v1637 = vxor.u32 %v1409, 2147483648
  %v1638 = vxor.u32 %v1410, 2147483648
  %v1639 = vxor.u32 %v1411, 2147483648
  %v1640 = vxor.u32 %v1412, 2147483648
  %v1641 = vxor.u32 %v1413, 2147483648
  %v1642 = vxor.u32 %v1414, 2147483648
  %v1643 = vxor.u32 %v1415, 2147483648
  %v1644 = vxor.u32 %v1416, 2147483648
  %v1645 = vxor.u32 %v1417, 2147483648
  %v1646 = vxor.u32 %v1418, 2147483648
  %v1647 = vxor.u32 %v1419, 2147483648
  %v1648 = vxor.u32 %v1420, 2147483648
  %v1649 = vxor.u32 %v1421, 2147483648
  %v1650 = vxor.u32 %v1422, 2147483648
  %v1651 = vxor.u32 %v1423, 2147483648
  %v1652 = vxor.u32 %v1424, 2147483648
  %v1653 = vxor.u32 %v1425, 2147483648
  %v1654 = vxor.u32 %v1426, 2147483648
  %v1655 = vxor.u32 %v1427, 2147483648
  %v1656 = vxor.u32 %v1428, 2147483648
  %v1657 = vxor.u32 %v1429, 2147483648
  %v1658 = vxor.u32 %v1430, 2147483648
  %v1659 = vxor.u32 %v1431, 2147483648
  %v1660 = vxor.u32 %v1432, 2147483648
  %v1661 = vxor.u32 %v1433, 2147483648
  %v1662 = vxor.u32 %v1434, 2147483648
  %v1663 = vxor.u32 %v1435, 2147483648
  %v1664 = vxor.u32 %v1436, 2147483648
  %v1665 = vxor.u32 %v1437, 2147483648
  %v1666 = vxor.u32 %v1438, 2147483648
  %v1667 = vxor.u32 %v1439, 2147483648
  %v1668 = vxor.u32 %v1440, 2147483648
  %v1669 = vxor.u32 %v1441, 2147483648
  %v1670 = vxor.u32 %v1442, 2147483648
  %v1671 = vxor.u32 %v1443, 2147483648
  %v1672 = vxor.u32 %v1444, 2147483648
  %v1673 = vxor.u32 %v1445, 2147483648
  %v1674 = vxor.u32 %v1446, 2147483648
  %v1675 = vxor.u32 %v1447, 2147483648
  %v1676 = vxor.u32 %v1448, 2147483648
  %v1677 = vxor.u32 %v1449, 2147483648
  %v1678 = vxor.u32 %v1450, 2147483648
  %v1679 = vxor.u32 %v1451, 2147483648
  %v1680 = vxor.u32 %v1452, 2147483648
  %v1681 = vxor.u32 %v1453, 2147483648
  %v1682 = vxor.u32 %v1454, 2147483648
  %v1683 = vxor.u32 %v1455, 2147483648
  %v1684 = vxor.u32 %v1456, 2147483648
  %v1685 = vxor.u32 %v1457, 2147483648
  %v1686 = vxor.u32 %v1458, 2147483648
  %v1687 = vxor.u32 %v1459, 2147483648
  %v1688 = vxor.u32 %v1460, 2147483648
  %v1689 = vxor.u32 %v1461, 2147483648
  %v1690 = vxor.u32 %v1462, 2147483648
  %v1691 = vxor.u32 %v1463, 2147483648
  %v1692 = vxor.u32 %v1464, 2147483648
  %v1693 = vxor.u32 %v1465, 2147483648
  %v1694 = vxor.u32 %v1466, 2147483648
  %v1695 = vxor.u32 %v1467, 2147483648
  %v1696 = vxor.u32 %v1468, 2147483648
  %v1697 = vxor.u32 %v1469, 2147483648
  %v1698 = vxor.u32 %v1470, 2147483648
  %v1699 = vxor.u32 %v1471, 2147483648
  %v1700 = vxor.u32 %v1472, 2147483648
  %v1701 = vxor.u32 %v1473, 2147483648
  %v1702 = vxor.u32 %v1474, 2147483648
  %v1703 = vxor.u32 %v1475, 2147483648
  %v1704 = vxor.u32 %v1476, 2147483648
  %v1705 = vxor.u32 %v1477, 2147483648
  %v1706 = vxor.u32 %v1478, 2147483648
  %v1707 = vxor.u32 %v1479, 2147483648
  %v1708 = vxor.u32 %v1480, 2147483648
  %v1709 = vxor.u32 %v1481, 2147483648
  %v1710 = vxor.u32 %v1482, 2147483648
  %v1711 = vxor.u32 %v1483, 2147483648
  %v1712 = vxor.u32 %v1484, 2147483648
  %v1713 = vxor.u32 %v1485, 2147483648
  %v1714 = vxor.u32 %v1486, 2147483648
  %v1715 = vxor.u32 %v1487, 2147483648
  %v1716 = vxor.u32 %v1488, 2147483648
  %v1717 = vxor.u32 %v1489, 2147483648
  %v1718 = vxor.u32 %v1490, 2147483648
  %v1719 = vxor.u32 %v1491, 2147483648
  %v1720 = vxor.u32 %v1492, 2147483648
  %v1721 = vxor.u32 %v1493, 2147483648
  %v1722 = vxor.u32 %v1494, 2147483648
  %v1723 = vxor.u32 %v1495, 2147483648
  %v1724 = vxor.u32 %v1496, 2147483648
  %v1725 = vxor.u32 %v1497, 2147483648
  %v1726 = vxor.u32 %v1498, 2147483648
  %v1727 = vxor.u32 %v1499, 2147483648
  %v1728 = vxor.u32 %v1500, 2147483648
  %v1729 = vxor.u32 %v1501, 2147483648
  %v1730 = vxor.u32 %v1502, 2147483648
  %v1731 = vxor.u32 %v1503, 2147483648
  %v1732 = vxor.u32 %v1504, 2147483648
  %v1733 = vxor.u32 %v1505, 2147483648
  %v1734 = vxor.u32 %v1506, 2147483648
  %v1735 = vxor.u32 %v1507, 2147483648
  %v1736 = vxor.u32 %v1508, 2147483648
  %v1737 = vxor.u32 %v1509, 2147483648
  %v1738 = vxor.u32 %v1510, 2147483648
  %v1739 = vxor.u32 %v1511, 2147483648
  %v1740 = vxor.u32 %v1512, 2147483648
  %v1741 = vxor.u32 %v1513, 2147483648
  %v1742 = vxor.u32 %v1514, 2147483648
  %v1743 = vxor.u32 %v1515, 2147483648
  %v1744 = vxor.u32 %v1516, 2147483648
  %v1745 = vxor.u32 %v1517, 2147483648
  %v1746 = vxor.u32 %v1518, 2147483648
  %v1747 = vxor.u32 %v1519, 2147483648
  %v1748 = vxor.u32 %v1520, 2147483648
  %v1749 = vxor.u32 %v1521, 2147483648
  %v1750 = vxor.u32 %v1522, 2147483648
  %v1751 = vxor.u32 %v1523, 2147483648
  %v1752 = vxor.u32 %v1524, 2147483648
  %v1753 = vxor.u32 %v1525, 2147483648
  %v1754 = vxor.u32 %v1526, 2147483648
  %v1755 = vxor.u32 %v1527, 2147483648
  %v1756 = vxor.u32 %v1528, 2147483648
  %v1757 = vxor.u32 %v1529, 2147483648
  %v1758 = vxor.u32 %v1530, 2147483648
  %v1759 = vxor.u32 %v1531, 2147483648
  %v1760 = vxor.u32 %v1532, 2147483648
  %v1761 = vxor.u32 %v1533, 2147483648
  %v1762 = vxor.u32 %v1534, 2147483648
  %v1763 = vxor.u32 %v1535, 2147483648
  %v1764 = vxor.u32 %v1536, 2147483648
  %v1765 = vxor.u32 %v1537, 2147483648
  %v1766 = vxor.u32 %v1538, 2147483648
  %v1767 = vxor.u32 %v1539, 2147483648
  %v1768 = vxor.u32 %v1540, 2147483648
  %v1769 = vxor.u32 %v1541, 2147483648
  %v1770 = vxor.u32 %v1542, 2147483648
  %v1771 = vxor.u32 %v1543, 2147483648
  %v1772 = vxor.u32 %v1544, 2147483648
  %v1773 = vxor.u32 %v1545, 2147483648
  %v1774 = vxor.u32 %v1546, 2147483648
  %v1775 = vxor.u32 %v1547, 2147483648
  %v1776 = vxor.u32 %v1548, 2147483648
  %v1777 = vxor.u32 %v1549, 2147483648
  %v1778 = vxor.u32 %v1550, 2147483648
  %v1779 = vxor.u32 %v1551, 2147483648
  %v1780 = vxor.u32 %v1552, 2147483648
  %v1781 = vxor.u32 %v1553, 2147483648
  %v1782 = vxor.u32 %v1554, 2147483648
  %v1783 = vxor.u32 %v1555, 2147483648
  %v1784 = vxor.u32 %v1556, 2147483648
  %v1785 = vxor.u32 %v1557, 2147483648
  %v1786 = vxor.u32 %v1558, 2147483648
  %v1787 = vxor.u32 %v1559, 2147483648
  %v1788 = vxor.u32 %v1560, 2147483648
  %v1789 = vxor.u32 %v1561, 2147483648
  %v1790 = vxor.u32 %v1562, 2147483648
  %v1791 = vxor.u32 %v1563, 2147483648
  %v1792 = vxor.u32 %v1564, 2147483648
  %v1793 = vxor.u32 %v1565, 2147483648
  %v1794 = vxor.u32 %v1566, 2147483648
  %v1795 = vxor.u32 %v1567, 2147483648
  %v1796 = vxor.u32 %v1568, 2147483648
  %v1797 = vxor.u32 %v1569, 2147483648
  %v1798 = vxor.u32 %v1570, 2147483648
  %v1799 = vxor.u32 %v1571, 2147483648
  %v1800 = vxor.u32 %v1572, 2147483648
  %v1801 = vxor.u32 %v1573, 2147483648
  %v1802 = vxor.u32 %v1574, 2147483648
  %v1803 = vxor.u32 %v1575, 2147483648
  %v1804 = vxor.u32 %v1576, 2147483648
  %v1805 = vxor.u32 %v1577, 2147483648
  %v1806 = vxor.u32 %v1578, 2147483648
  %v1807 = vxor.u32 %v1579, 2147483648
  %v1808 = vxor.u32 %v1580, 2147483648
  %v1809 = vxor.u32 %v1581, 2147483648
  %v1810 = vxor.u32 %v1582, 2147483648
  %v1811 = vxor.u32 %v1583, 2147483648
  %v1812 = vxor.u32 %v1584, 2147483648
  %v1813 = vxor.u32 %v1585, 2147483648
  %v1814 = vxor.u32 %v1586, 2147483648
  %v1815 = vxor.u32 %v1587, 2147483648
  %v1816 = vxor.u32 %v1588, 2147483648
  %v1817 = vxor.u32 %v1589, 2147483648
  %v1818 = vxor.u32 %v1590, 2147483648
  %v1819 = vxor.u32 %v1591, 2147483648
  %v1820 = vxor.u32 %v1592, 2147483648
  %v1821 = vxor.u32 %v1593, 2147483648
  %v1822 = vxor.u32 %v1594, 2147483648
  %v1823 = vxor.u32 %v1595, 2147483648
  %v1824 = vxor.u32 %v1596, 2147483648
  %v1825 = vxor.u32 %v1597, 2147483648
  %v1826 = vxor.u32 %v1598, 2147483648
  %v1827 = vxor.u32 %v1599, 2147483648
  %v1828 = vxor.u32 %v1600, 2147483648
  %v1829 = vxor.u32 %v1601, 2147483648
  %v1830 = vxor.u32 %v1602, 2147483648
  %v1831 = vxor.u32 %v1603, 2147483648
  %v1832 = vxor.u32 %v1604, 2147483648
  %v1833 = vxor.u32 %v1605, 2147483648
  %v1834 = vxor.u32 %v1606, 2147483648
  %v1835 = vxor.u32 %v1607, 2147483648
  %v1836 = vxor.u32 %v1608, 2147483648
  %v1837 = vxor.u32 %v1609, 2147483648
  %v1838 = vxor.u32 %v1610, 2147483648
  %v1839 = vxor.u32 %v1611, 2147483648
  %v1840 = vxor.u32 %v1612, 2147483648
  %v1841 = vxor.u32 %v1613, 2147483648
  %v1842 = vxor.u32 %v1614, 2147483648
  %v1843 = vxor.u32 %v1615, 2147483648
  %v1844 = vxor.u32 %v1616, 2147483648
  %v1845 = vxor.u32 %v1617, 2147483648
  %v1846 = vxor.u32 %v1618, 2147483648
  %v1847 = vxor.u32 %v1619, 2147483648
  %v1848 = vxor.u32 %v1620, 2147483648
  %v1849 = vmul.f32 %v1621, 1.442695
  %v1850 = vpow.pop %v1849
  %v1851 = vmul.f32 %v1622, 1.442695
  %v1852 = vpow.pop %v1851
  %v1853 = vmul.f32 %v1623, 1.442695
  %v1854 = vpow.pop %v1853
  %v1855 = vmul.f32 %v1624, 1.442695
  %v1856 = vpow.pop %v1855
  %v1857 = vmul.f32 %v1625, 1.442695
  %v1858 = vpow.pop %v1857
  %v1859 = vmul.f32 %v1626, 1.442695
  %v1860 = vpow.pop %v1859
  %v1861 = vmul.f32 %v1627, 1.442695
  %v1862 = vpow.pop %v1861
  %v1863 = vmul.f32 %v1628, 1.442695
  %v1864 = vpow.pop %v1863
  %v1865 = vmul.f32 %v1629, 1.442695
  %v1866 = vpow.pop %v1865
  %v1867 = vmul.f32 %v1630, 1.442695
  %v1868 = vpow.pop %v1867
  %v1869 = vmul.f32 %v1631, 1.442695
  %v1870 = vpow.pop %v1869
  %v1871 = vmul.f32 %v1632, 1.442695
  %v1872 = vpow.pop %v1871
  %v1873 = vmul.f32 %v1633, 1.442695
  %v1874 = vpow.pop %v1873
  %v1875 = vmul.f32 %v1634, 1.442695
  %v1876 = vpow.pop %v1875
  %v1877 = vmul.f32 %v1635, 1.442695
  %v1878 = vpow.pop %v1877
  %v1879 = vmul.f32 %v1636, 1.442695
  %v1880 = vpow.pop %v1879
  %v1881 = vmul.f32 %v1637, 1.442695
  %v1882 = vpow.pop %v1881
  %v1883 = vmul.f32 %v1638, 1.442695
  %v1884 = vpow.pop %v1883
  %v1885 = vmul.f32 %v1639, 1.442695
  %v1886 = vpow.pop %v1885
  %v1887 = vmul.f32 %v1640, 1.442695
  %v1888 = vpow.pop %v1887
  %v1889 = vmul.f32 %v1641, 1.442695
  %v1890 = vpow.pop %v1889
  %v1891 = vmul.f32 %v1642, 1.442695
  %v1892 = vpow.pop %v1891
  %v1893 = vmul.f32 %v1643, 1.442695
  %v1894 = vpow.pop %v1893
  %v1895 = vmul.f32 %v1644, 1.442695
  %v1896 = vpow.pop %v1895
  %v1897 = vmul.f32 %v1645, 1.442695
  %v1898 = vpow.pop %v1897
  %v1899 = vmul.f32 %v1646, 1.442695
  %v1900 = vpow.pop %v1899
  %v1901 = vmul.f32 %v1647, 1.442695
  %v1902 = vpow.pop %v1901
  %v1903 = vmul.f32 %v1648, 1.442695
  %v1904 = vpow.pop %v1903
  %v1905 = vmul.f32 %v1649, 1.442695
  %v1906 = vpow.pop %v1905
  %v1907 = vmul.f32 %v1650, 1.442695
  %v1908 = vpow.pop %v1907
  %v1909 = vmul.f32 %v1651, 1.442695
  %v1910 = vpow.pop %v1909
  %v1911 = vmul.f32 %v1652, 1.442695
  %v1912 = vpow.pop %v1911
  %v1913 = vmul.f32 %v1653, 1.442695
  %v1914 = vpow.pop %v1913
  %v1915 = vmul.f32 %v1654, 1.442695
  %v1916 = vpow.pop %v1915
  %v1917 = vmul.f32 %v1655, 1.442695
  %v1918 = vpow.pop %v1917
  %v1919 = vmul.f32 %v1656, 1.442695
  %v1920 = vpow.pop %v1919
  %v1921 = vmul.f32 %v1657, 1.442695
  %v1922 = vpow.pop %v1921
  %v1923 = vmul.f32 %v1658, 1.442695
  %v1924 = vpow.pop %v1923
  %v1925 = vmul.f32 %v1659, 1.442695
  %v1926 = vpow.pop %v1925
  %v1927 = vmul.f32 %v1660, 1.442695
  %v1928 = vpow.pop %v1927
  %v1929 = vmul.f32 %v1661, 1.442695
  %v1930 = vpow.pop %v1929
  %v1931 = vmul.f32 %v1662, 1.442695
  %v1932 = vpow.pop %v1931
  %v1933 = vmul.f32 %v1663, 1.442695
  %v1934 = vpow.pop %v1933
  %v1935 = vmul.f32 %v1664, 1.442695
  %v1936 = vpow.pop %v1935
  %v1937 = vmul.f32 %v1665, 1.442695
  %v1938 = vpow.pop %v1937
  %v1939 = vmul.f32 %v1666, 1.442695
  %v1940 = vpow.pop %v1939
  %v1941 = vmul.f32 %v1667, 1.442695
  %v1942 = vpow.pop %v1941
  %v1943 = vmul.f32 %v1668, 1.442695
  %v1944 = vpow.pop %v1943
  %v1945 = vmul.f32 %v1669, 1.442695
  %v1946 = vpow.pop %v1945
  %v1947 = vmul.f32 %v1670, 1.442695
  %v1948 = vpow.pop %v1947
  %v1949 = vmul.f32 %v1671, 1.442695
  %v1950 = vpow.pop %v1949
  %v1951 = vmul.f32 %v1672, 1.442695
  %v1952 = vpow.pop %v1951
  %v1953 = vmul.f32 %v1673, 1.442695
  %v1954 = vpow.pop %v1953
  %v1955 = vmul.f32 %v1674, 1.442695
  %v1956 = vpow.pop %v1955
  %v1957 = vmul.f32 %v1675, 1.442695
  %v1958 = vpow.pop %v1957
  %v1959 = vmul.f32 %v1676, 1.442695
  %v1960 = vpow.pop %v1959
  %v1961 = vmul.f32 %v1677, 1.442695
  %v1962 = vpow.pop %v1961
  %v1963 = vmul.f32 %v1678, 1.442695
  %v1964 = vpow.pop %v1963
  %v1965 = vmul.f32 %v1679, 1.442695
  %v1966 = vpow.pop %v1965
  %v1967 = vmul.f32 %v1680, 1.442695
  %v1968 = vpow.pop %v1967
  %v1969 = vmul.f32 %v1681, 1.442695
  %v1970 = vpow.pop %v1969
  %v1971 = vmul.f32 %v1682, 1.442695
  %v1972 = vpow.pop %v1971
  %v1973 = vmul.f32 %v1683, 1.442695
  %v1974 = vpow.pop %v1973
  %v1975 = vmul.f32 %v1684, 1.442695
  %v1976 = vpow.pop %v1975
  %v1977 = vmul.f32 %v1685, 1.442695
  %v1978 = vpow.pop %v1977
  %v1979 = vmul.f32 %v1686, 1.442695
  %v1980 = vpow.pop %v1979
  %v1981 = vmul.f32 %v1687, 1.442695
  %v1982 = vpow.pop %v1981
  %v1983 = vmul.f32 %v1688, 1.442695
  %v1984 = vpow.pop %v1983
  %v1985 = vmul.f32 %v1689, 1.442695
  %v1986 = vpow.pop %v1985
  %v1987 = vmul.f32 %v1690, 1.442695
  %v1988 = vpow.pop %v1987
  %v1989 = vmul.f32 %v1691, 1.442695
  %v1990 = vpow.pop %v1989
  %v1991 = vmul.f32 %v1692, 1.442695
  %v1992 = vpow.pop %v1991
  %v1993 = vmul.f32 %v1693, 1.442695
  %v1994 = vpow.pop %v1993
  %v1995 = vmul.f32 %v1694, 1.442695
  %v1996 = vpow.pop %v1995
  %v1997 = vmul.f32 %v1695, 1.442695
  %v1998 = vpow.pop %v1997
  %v1999 = vmul.f32 %v1696, 1.442695
  %v2000 = vpow.pop %v1999
  %v2001 = vmul.f32 %v1697, 1.442695
  %v2002 = vpow.pop %v2001
  %v2003 = vmul.f32 %v1698, 1.442695
  %v2004 = vpow.pop %v2003
  %v2005 = vmul.f32 %v1699, 1.442695
  %v2006 = vpow.pop %v2005
  %v2007 = vmul.f32 %v1700, 1.442695
  %v2008 = vpow.pop %v2007
  %v2009 = vmul.f32 %v1701, 1.442695
  %v2010 = vpow.pop %v2009
  %v2011 = vmul.f32 %v1702, 1.442695
  %v2012 = vpow.pop %v2011
  %v2013 = vmul.f32 %v1703, 1.442695
  %v2014 = vpow.pop %v2013
  %v2015 = vmul.f32 %v1704, 1.442695
  %v2016 = vpow.pop %v2015
  %v2017 = vmul.f32 %v1705, 1.442695
  %v2018 = vpow.pop %v2017
  %v2019 = vmul.f32 %v1706, 1.442695
  %v2020 = vpow.pop %v2019
  %v2021 = vmul.f32 %v1707, 1.442695
  %v2022 = vpow.pop %v2021
  %v2023 = vmul.f32 %v1708, 1.442695
  %v2024 = vpow.pop %v2023
  %v2025 = vmul.f32 %v1709, 1.442695
  %v2026 = vpow.pop %v2025
  %v2027 = vmul.f32 %v1710, 1.442695
  %v2028 = vpow.pop %v2027
  %v2029 = vmul.f32 %v1711, 1.442695
  %v2030 = vpow.pop %v2029
  %v2031 = vmul.f32 %v1712, 1.442695
  %v2032 = vpow.pop %v2031
  %v2033 = vmul.f32 %v1713, 1.442695
  %v2034 = vpow.pop %v2033
  %v2035 = vmul.f32 %v1714, 1.442695
  %v2036 = vpow.pop %v2035
  %v2037 = vmul.f32 %v1715, 1.442695
  %v2038 = vpow.pop %v2037
  %v2039 = vmul.f32 %v1716, 1.442695
  %v2040 = vpow.pop %v2039
  %v2041 = vmul.f32 %v1717, 1.442695
  %v2042 = vpow.pop %v2041
  %v2043 = vmul.f32 %v1718, 1.442695
  %v2044 = vpow.pop %v2043
  %v2045 = vmul.f32 %v1719, 1.442695
  %v2046 = vpow.pop %v2045
  %v2047 = vmul.f32 %v1720, 1.442695
  %v2048 = vpow.pop %v2047
  %v2049 = vmul.f32 %v1721, 1.442695
  %v2050 = vpow.pop %v2049
  %v2051 = vmul.f32 %v1722, 1.442695
  %v2052 = vpow.pop %v2051
  %v2053 = vmul.f32 %v1723, 1.442695
  %v2054 = vpow.pop %v2053
  %v2055 = vmul.f32 %v1724, 1.442695
  %v2056 = vpow.pop %v2055
  %v2057 = vmul.f32 %v1725, 1.442695
  %v2058 = vpow.pop %v2057
  %v2059 = vmul.f32 %v1726, 1.442695
  %v2060 = vpow.pop %v2059
  %v2061 = vmul.f32 %v1727, 1.442695
  %v2062 = vpow.pop %v2061
  %v2063 = vmul.f32 %v1728, 1.442695
  %v2064 = vpow.pop %v2063
  %v2065 = vmul.f32 %v1729, 1.442695
  %v2066 = vpow.pop %v2065
  %v2067 = vmul.f32 %v1730, 1.442695
  %v2068 = vpow.pop %v2067
  %v2069 = vmul.f32 %v1731, 1.442695
  %v2070 = vpow.pop %v2069
  %v2071 = vmul.f32 %v1732, 1.442695
  %v2072 = vpow.pop %v2071
  %v2073 = vmul.f32 %v1733, 1.442695
  %v2074 = vpow.pop %v2073
  %v2075 = vmul.f32 %v1734, 1.442695
  %v2076 = vpow.pop %v2075
  %v2077 = vmul.f32 %v1735, 1.442695
  %v2078 = vpow.pop %v2077
  %v2079 = vmul.f32 %v1736, 1.442695
  %v2080 = vpow.pop %v2079
  %v2081 = vmul.f32 %v1737, 1.442695
  %v2082 = vpow.pop %v2081
  %v2083 = vmul.f32 %v1738, 1.442695
  %v2084 = vpow.pop %v2083
  %v2085 = vmul.f32 %v1739, 1.442695
  %v2086 = vpow.pop %v2085
  %v2087 = vmul.f32 %v1740, 1.442695
  %v2088 = vpow.pop %v2087
  %v2089 = vmul.f32 %v1741, 1.442695
  %v2090 = vpow.pop %v2089
  %v2091 = vmul.f32 %v1742, 1.442695
  %v2092 = vpow.pop %v2091
  %v2093 = vmul.f32 %v1743, 1.442695
  %v2094 = vpow.pop %v2093
  %v2095 = vmul.f32 %v1744, 1.442695
  %v2096 = vpow.pop %v2095
  %v2097 = vmul.f32 %v1745, 1.442695
  %v2098 = vpow.pop %v2097
  %v2099 = vmul.f32 %v1746, 1.442695
  %v2100 = vpow.pop %v2099
  %v2101 = vmul.f32 %v1747, 1.442695
  %v2102 = vpow.pop %v2101
  %v2103 = vmul.f32 %v1748, 1.442695
  %v2104 = vpow.pop %v2103
  %v2105 = vmul.f32 %v1749, 1.442695
  %v2106 = vpow.pop %v2105
  %v2107 = vmul.f32 %v1750, 1.442695
  %v2108 = vpow.pop %v2107
  %v2109 = vmul.f32 %v1751, 1.442695
  %v2110 = vpow.pop %v2109
  %v2111 = vmul.f32 %v1752, 1.442695
  %v2112 = vpow.pop %v2111
  %v2113 = vmul.f32 %v1753, 1.442695
  %v2114 = vpow.pop %v2113
  %v2115 = vmul.f32 %v1754, 1.442695
  %v2116 = vpow.pop %v2115
  %v2117 = vmul.f32 %v1755, 1.442695
  %v2118 = vpow.pop %v2117
  %v2119 = vmul.f32 %v1756, 1.442695
  %v2120 = vpow.pop %v2119
  %v2121 = vmul.f32 %v1757, 1.442695
  %v2122 = vpow.pop %v2121
  %v2123 = vmul.f32 %v1758, 1.442695
  %v2124 = vpow.pop %v2123
  %v2125 = vmul.f32 %v1759, 1.442695
  %v2126 = vpow.pop %v2125
  %v2127 = vmul.f32 %v1760, 1.442695
  %v2128 = vpow.pop %v2127
  %v2129 = vmul.f32 %v1761, 1.442695
  %v2130 = vpow.pop %v2129
  %v2131 = vmul.f32 %v1762, 1.442695
  %v2132 = vpow.pop %v2131
  %v2133 = vmul.f32 %v1763, 1.442695
  %v2134 = vpow.pop %v2133
  %v2135 = vmul.f32 %v1764, 1.442695
  %v2136 = vpow.pop %v2135
  %v2137 = vmul.f32 %v1765, 1.442695
  %v2138 = vpow.pop %v2137
  %v2139 = vmul.f32 %v1766, 1.442695
  %v2140 = vpow.pop %v2139
  %v2141 = vmul.f32 %v1767, 1.442695
  %v2142 = vpow.pop %v2141
  %v2143 = vmul.f32 %v1768, 1.442695
  %v2144 = vpow.pop %v2143
  %v2145 = vmul.f32 %v1769, 1.442695
  %v2146 = vpow.pop %v2145
  %v2147 = vmul.f32 %v1770, 1.442695
  %v2148 = vpow.pop %v2147
  %v2149 = vmul.f32 %v1771, 1.442695
  %v2150 = vpow.pop %v2149
  %v2151 = vmul.f32 %v1772, 1.442695
  %v2152 = vpow.pop %v2151
  %v2153 = vmul.f32 %v1773, 1.442695
  %v2154 = vpow.pop %v2153
  %v2155 = vmul.f32 %v1774, 1.442695
  %v2156 = vpow.pop %v2155
  %v2157 = vmul.f32 %v1775, 1.442695
  %v2158 = vpow.pop %v2157
  %v2159 = vmul.f32 %v1776, 1.442695
  %v2160 = vpow.pop %v2159
  %v2161 = vmul.f32 %v1777, 1.442695
  %v2162 = vpow.pop %v2161
  %v2163 = vmul.f32 %v1778, 1.442695
  %v2164 = vpow.pop %v2163
  %v2165 = vmul.f32 %v1779, 1.442695
  %v2166 = vpow.pop %v2165
  %v2167 = vmul.f32 %v1780, 1.442695
  %v2168 = vpow.pop %v2167
  %v2169 = vmul.f32 %v1781, 1.442695
  %v2170 = vpow.pop %v2169
  %v2171 = vmul.f32 %v1782, 1.442695
  %v2172 = vpow.pop %v2171
  %v2173 = vmul.f32 %v1783, 1.442695
  %v2174 = vpow.pop %v2173
  %v2175 = vmul.f32 %v1784, 1.442695
  %v2176 = vpow.pop %v2175
  %v2177 = vmul.f32 %v1785, 1.442695
  %v2178 = vpow.pop %v2177
  %v2179 = vmul.f32 %v1786, 1.442695
  %v2180 = vpow.pop %v2179
  %v2181 = vmul.f32 %v1787, 1.442695
  %v2182 = vpow.pop %v2181
  %v2183 = vmul.f32 %v1788, 1.442695
  %v2184 = vpow.pop %v2183
  %v2185 = vmul.f32 %v1789, 1.442695
  %v2186 = vpow.pop %v2185
  %v2187 = vmul.f32 %v1790, 1.442695
  %v2188 = vpow.pop %v2187
  %v2189 = vmul.f32 %v1791, 1.442695
  %v2190 = vpow.pop %v2189
  %v2191 = vmul.f32 %v1792, 1.442695
  %v2192 = vpow.pop %v2191
  %v2193 = vmul.f32 %v1793, 1.442695
  %v2194 = vpow.pop %v2193
  %v2195 = vmul.f32 %v1794, 1.442695
  %v2196 = vpow.pop %v2195
  %v2197 = vmul.f32 %v1795, 1.442695
  %v2198 = vpow.pop %v2197
  %v2199 = vmul.f32 %v1796, 1.442695
  %v2200 = vpow.pop %v2199
  %v2201 = vmul.f32 %v1797, 1.442695
  %v2202 = vpow.pop %v2201
  %v2203 = vmul.f32 %v1798, 1.442695
  %v2204 = vpow.pop %v2203
  %v2205 = vmul.f32 %v1799, 1.442695
  %v2206 = vpow.pop %v2205
  %v2207 = vmul.f32 %v1800, 1.442695
  %v2208 = vpow.pop %v2207
  %v2209 = vmul.f32 %v1801, 1.442695
  %v2210 = vpow.pop %v2209
  %v2211 = vmul.f32 %v1802, 1.442695
  %v2212 = vpow.pop %v2211
  %v2213 = vmul.f32 %v1803, 1.442695
  %v2214 = vpow.pop %v2213
  %v2215 = vmul.f32 %v1804, 1.442695
  %v2216 = vpow.pop %v2215
  %v2217 = vmul.f32 %v1805, 1.442695
  %v2218 = vpow.pop %v2217
  %v2219 = vmul.f32 %v1806, 1.442695
  %v2220 = vpow.pop %v2219
  %v2221 = vmul.f32 %v1807, 1.442695
  %v2222 = vpow.pop %v2221
  %v2223 = vmul.f32 %v1808, 1.442695
  %v2224 = vpow.pop %v2223
  %v2225 = vmul.f32 %v1809, 1.442695
  %v2226 = vpow.pop %v2225
  %v2227 = vmul.f32 %v1810, 1.442695
  %v2228 = vpow.pop %v2227
  %v2229 = vmul.f32 %v1811, 1.442695
  %v2230 = vpow.pop %v2229
  %v2231 = vmul.f32 %v1812, 1.442695
  %v2232 = vpow.pop %v2231
  %v2233 = vmul.f32 %v1813, 1.442695
  %v2234 = vpow.pop %v2233
  %v2235 = vmul.f32 %v1814, 1.442695
  %v2236 = vpow.pop %v2235
  %v2237 = vmul.f32 %v1815, 1.442695
  %v2238 = vpow.pop %v2237
  %v2239 = vmul.f32 %v1816, 1.442695
  %v2240 = vpow.pop %v2239
  %v2241 = vmul.f32 %v1817, 1.442695
  %v2242 = vpow.pop %v2241
  %v2243 = vmul.f32 %v1818, 1.442695
  %v2244 = vpow.pop %v2243
  %v2245 = vmul.f32 %v1819, 1.442695
  %v2246 = vpow.pop %v2245
  %v2247 = vmul.f32 %v1820, 1.442695
  %v2248 = vpow.pop %v2247
  %v2249 = vmul.f32 %v1821, 1.442695
  %v2250 = vpow.pop %v2249
  %v2251 = vmul.f32 %v1822, 1.442695
  %v2252 = vpow.pop %v2251
  %v2253 = vmul.f32 %v1823, 1.442695
  %v2254 = vpow.pop %v2253
  %v2255 = vmul.f32 %v1824, 1.442695
  %v2256 = vpow.pop %v2255
  %v2257 = vmul.f32 %v1825, 1.442695
  %v2258 = vpow.pop %v2257
  %v2259 = vmul.f32 %v1826, 1.442695
  %v2260 = vpow.pop %v2259
  %v2261 = vmul.f32 %v1827, 1.442695
  %v2262 = vpow.pop %v2261
  %v2263 = vmul.f32 %v1828, 1.442695
  %v2264 = vpow.pop %v2263
  %v2265 = vmul.f32 %v1829, 1.442695
  %v2266 = vpow.pop %v2265
  %v2267 = vmul.f32 %v1830, 1.442695
  %v2268 = vpow.pop %v2267
  %v2269 = vmul.f32 %v1831, 1.442695
  %v2270 = vpow.pop %v2269
  %v2271 = vmul.f32 %v1832, 1.442695
  %v2272 = vpow.pop %v2271
  %v2273 = vmul.f32 %v1833, 1.442695
  %v2274 = vpow.pop %v2273
  %v2275 = vmul.f32 %v1834, 1.442695
  %v2276 = vpow.pop %v2275
  %v2277 = vmul.f32 %v1835, 1.442695
  %v2278 = vpow.pop %v2277
  %v2279 = vmul.f32 %v1836, 1.442695
  %v2280 = vpow.pop %v2279
  %v2281 = vmul.f32 %v1837, 1.442695
  %v2282 = vpow.pop %v2281
  %v2283 = vmul.f32 %v1838, 1.442695
  %v2284 = vpow.pop %v2283
  %v2285 = vmul.f32 %v1839, 1.442695
  %v2286 = vpow.pop %v2285
  %v2287 = vmul.f32 %v1840, 1.442695
  %v2288 = vpow.pop %v2287
  %v2289 = vmul.f32 %v1841, 1.442695
  %v2290 = vpow.pop %v2289
  %v2291 = vmul.f32 %v1842, 1.442695
  %v2292 = vpow.pop %v2291
  %v2293 = vmul.f32 %v1843, 1.442695
  %v2294 = vpow.pop %v2293
  %v2295 = vmul.f32 %v1844, 1.442695
  %v2296 = vpow.pop %v2295
  %v2297 = vmul.f32 %v1845, 1.442695
  %v2298 = vpow.pop %v2297
  %v2299 = vmul.f32 %v1846, 1.442695
  %v2300 = vpow.pop %v2299
  %v2301 = vmul.f32 %v1847, 1.442695
  %v2302 = vpow.pop %v2301
  %v2303 = vmul.f32 %v1848, 1.442695
  %v2304 = vpow.pop %v2303
  %v2305 = vadd.f32 %v1850, 1.0
  %v2306 = vadd.f32 %v1852, 1.0
  %v2307 = vadd.f32 %v1854, 1.0
  %v2308 = vadd.f32 %v1856, 1.0
  %v2309 = vadd.f32 %v1858, 1.0
  %v2310 = vadd.f32 %v1860, 1.0
  %v2311 = vadd.f32 %v1862, 1.0
  %v2312 = vadd.f32 %v1864, 1.0
  %v2313 = vadd.f32 %v1866, 1.0
  %v2314 = vadd.f32 %v1868, 1.0
  %v2315 = vadd.f32 %v1870, 1.0
  %v2316 = vadd.f32 %v1872, 1.0
  %v2317 = vadd.f32 %v1874, 1.0
  %v2318 = vadd.f32 %v1876, 1.0
  %v2319 = vadd.f32 %v1878, 1.0
  %v2320 = vadd.f32 %v1880, 1.0
  %v2321 = vadd.f32 %v1882, 1.0
  %v2322 = vadd.f32 %v1884, 1.0
  %v2323 = vadd.f32 %v1886, 1.0
  %v2324 = vadd.f32 %v1888, 1.0
  %v2325 = vadd.f32 %v1890, 1.0
  %v2326 = vadd.f32 %v1892, 1.0
  %v2327 = vadd.f32 %v1894, 1.0
  %v2328 = vadd.f32 %v1896, 1.0
  %v2329 = vadd.f32 %v1898, 1.0
  %v2330 = vadd.f32 %v1900, 1.0
  %v2331 = vadd.f32 %v1902, 1.0
  %v2332 = vadd.f32 %v1904, 1.0
  %v2333 = vadd.f32 %v1906, 1.0
  %v2334 = vadd.f32 %v1908, 1.0
  %v2335 = vadd.f32 %v1910, 1.0
  %v2336 = vadd.f32 %v1912, 1.0
  %v2337 = vadd.f32 %v1914, 1.0
  %v2338 = vadd.f32 %v1916, 1.0
  %v2339 = vadd.f32 %v1918, 1.0
  %v2340 = vadd.f32 %v1920, 1.0
  %v2341 = vadd.f32 %v1922, 1.0
  %v2342 = vadd.f32 %v1924, 1.0
  %v2343 = vadd.f32 %v1926, 1.0
  %v2344 = vadd.f32 %v1928, 1.0
  %v2345 = vadd.f32 %v1930, 1.0
  %v2346 = vadd.f32 %v1932, 1.0
  %v2347 = vadd.f32 %v1934, 1.0
  %v2348 = vadd.f32 %v1936, 1.0
  %v2349 = vadd.f32 %v1938, 1.0
  %v2350 = vadd.f32 %v1940, 1.0
  %v2351 = vadd.f32 %v1942, 1.0
  %v2352 = vadd.f32 %v1944, 1.0
  %v2353 = vadd.f32 %v1946, 1.0
  %v2354 = vadd.f32 %v1948, 1.0
  %v2355 = vadd.f32 %v1950, 1.0
  %v2356 = vadd.f32 %v1952, 1.0
  %v2357 = vadd.f32 %v1954, 1.0
  %v2358 = vadd.f32 %v1956, 1.0
  %v2359 = vadd.f32 %v1958, 1.0
  %v2360 = vadd.f32 %v1960, 1.0
  %v2361 = vadd.f32 %v1962, 1.0
  %v2362 = vadd.f32 %v1964, 1.0
  %v2363 = vadd.f32 %v1966, 1.0
  %v2364 = vadd.f32 %v1968, 1.0
  %v2365 = vadd.f32 %v1970, 1.0
  %v2366 = vadd.f32 %v1972, 1.0
  %v2367 = vadd.f32 %v1974, 1.0
  %v2368 = vadd.f32 %v1976, 1.0
  %v2369 = vadd.f32 %v1978, 1.0
  %v2370 = vadd.f32 %v1980, 1.0
  %v2371 = vadd.f32 %v1982, 1.0
  %v2372 = vadd.f32 %v1984, 1.0
  %v2373 = vadd.f32 %v1986, 1.0
  %v2374 = vadd.f32 %v1988, 1.0
  %v2375 = vadd.f32 %v1990, 1.0
  %v2376 = vadd.f32 %v1992, 1.0
  %v2377 = vadd.f32 %v1994, 1.0
  %v2378 = vadd.f32 %v1996, 1.0
  %v2379 = vadd.f32 %v1998, 1.0
  %v2380 = vadd.f32 %v2000, 1.0
  %v2381 = vadd.f32 %v2002, 1.0
  %v2382 = vadd.f32 %v2004, 1.0
  %v2383 = vadd.f32 %v2006, 1.0
  %v2384 = vadd.f32 %v2008, 1.0
  %v2385 = vadd.f32 %v2010, 1.0
  %v2386 = vadd.f32 %v2012, 1.0
  %v2387 = vadd.f32 %v2014, 1.0
  %v2388 = vadd.f32 %v2016, 1.0
  %v2389 = vadd.f32 %v2018, 1.0
  %v2390 = vadd.f32 %v2020, 1.0
  %v2391 = vadd.f32 %v2022, 1.0
  %v2392 = vadd.f32 %v2024, 1.0
  %v2393 = vadd.f32 %v2026, 1.0
  %v2394 = vadd.f32 %v2028, 1.0
  %v2395 = vadd.f32 %v2030, 1.0
  %v2396 = vadd.f32 %v2032, 1.0
  %v2397 = vadd.f32 %v2034, 1.0
  %v2398 = vadd.f32 %v2036, 1.0
  %v2399 = vadd.f32 %v2038, 1.0
  %v2400 = vadd.f32 %v2040, 1.0
  %v2401 = vadd.f32 %v2042, 1.0
  %v2402 = vadd.f32 %v2044, 1.0
  %v2403 = vadd.f32 %v2046, 1.0
  %v2404 = vadd.f32 %v2048, 1.0
  %v2405 = vadd.f32 %v2050, 1.0
  %v2406 = vadd.f32 %v2052, 1.0
  %v2407 = vadd.f32 %v2054, 1.0
  %v2408 = vadd.f32 %v2056, 1.0
  %v2409 = vadd.f32 %v2058, 1.0
  %v2410 = vadd.f32 %v2060, 1.0
  %v2411 = vadd.f32 %v2062, 1.0
  %v2412 = vadd.f32 %v2064, 1.0
  %v2413 = vadd.f32 %v2066, 1.0
  %v2414 = vadd.f32 %v2068, 1.0
  %v2415 = vadd.f32 %v2070, 1.0
  %v2416 = vadd.f32 %v2072, 1.0
  %v2417 = vadd.f32 %v2074, 1.0
  %v2418 = vadd.f32 %v2076, 1.0
  %v2419 = vadd.f32 %v2078, 1.0
  %v2420 = vadd.f32 %v2080, 1.0
  %v2421 = vadd.f32 %v2082, 1.0
  %v2422 = vadd.f32 %v2084, 1.0
  %v2423 = vadd.f32 %v2086, 1.0
  %v2424 = vadd.f32 %v2088, 1.0
  %v2425 = vadd.f32 %v2090, 1.0
  %v2426 = vadd.f32 %v2092, 1.0
  %v2427 = vadd.f32 %v2094, 1.0
  %v2428 = vadd.f32 %v2096, 1.0
  %v2429 = vadd.f32 %v2098, 1.0
  %v2430 = vadd.f32 %v2100, 1.0
  %v2431 = vadd.f32 %v2102, 1.0
  %v2432 = vadd.f32 %v2104, 1.0
  %v2433 = vadd.f32 %v2106, 1.0
  %v2434 = vadd.f32 %v2108, 1.0
  %v2435 = vadd.f32 %v2110, 1.0
  %v2436 = vadd.f32 %v2112, 1.0
  %v2437 = vadd.f32 %v2114, 1.0
  %v2438 = vadd.f32 %v2116, 1.0
  %v2439 = vadd.f32 %v2118, 1.0
  %v2440 = vadd.f32 %v2120, 1.0
  %v2441 = vadd.f32 %v2122, 1.0
  %v2442 = vadd.f32 %v2124, 1.0
  %v2443 = vadd.f32 %v2126, 1.0
  %v2444 = vadd.f32 %v2128, 1.0
  %v2445 = vadd.f32 %v2130, 1.0
  %v2446 = vadd.f32 %v2132, 1.0
  %v2447 = vadd.f32 %v2134, 1.0
  %v2448 = vadd.f32 %v2136, 1.0
  %v2449 = vadd.f32 %v2138, 1.0
  %v2450 = vadd.f32 %v2140, 1.0
  %v2451 = vadd.f32 %v2142, 1.0
  %v2452 = vadd.f32 %v2144, 1.0
  %v2453 = vadd.f32 %v2146, 1.0
  %v2454 = vadd.f32 %v2148, 1.0
  %v2455 = vadd.f32 %v2150, 1.0
  %v2456 = vadd.f32 %v2152, 1.0
  %v2457 = vadd.f32 %v2154, 1.0
  %v2458 = vadd.f32 %v2156, 1.0
  %v2459 = vadd.f32 %v2158, 1.0
  %v2460 = vadd.f32 %v2160, 1.0
  %v2461 = vadd.f32 %v2162, 1.0
  %v2462 = vadd.f32 %v2164, 1.0
  %v2463 = vadd.f32 %v2166, 1.0
  %v2464 = vadd.f32 %v2168, 1.0
  %v2465 = vadd.f32 %v2170, 1.0
  %v2466 = vadd.f32 %v2172, 1.0
  %v2467 = vadd.f32 %v2174, 1.0
  %v2468 = vadd.f32 %v2176, 1.0
  %v2469 = vadd.f32 %v2178, 1.0
  %v2470 = vadd.f32 %v2180, 1.0
  %v2471 = vadd.f32 %v2182, 1.0
  %v2472 = vadd.f32 %v2184, 1.0
  %v2473 = vadd.f32 %v2186, 1.0
  %v2474 = vadd.f32 %v2188, 1.0
  %v2475 = vadd.f32 %v2190, 1.0
  %v2476 = vadd.f32 %v2192, 1.0
  %v2477 = vadd.f32 %v2194, 1.0
  %v2478 = vadd.f32 %v2196, 1.0
  %v2479 = vadd.f32 %v2198, 1.0
  %v2480 = vadd.f32 %v2200, 1.0
  %v2481 = vadd.f32 %v2202, 1.0
  %v2482 = vadd.f32 %v2204, 1.0
  %v2483 = vadd.f32 %v2206, 1.0
  %v2484 = vadd.f32 %v2208, 1.0
  %v2485 = vadd.f32 %v2210, 1.0
  %v2486 = vadd.f32 %v2212, 1.0
  %v2487 = vadd.f32 %v2214, 1.0
  %v2488 = vadd.f32 %v2216, 1.0
  %v2489 = vadd.f32 %v2218, 1.0
  %v2490 = vadd.f32 %v2220, 1.0
  %v2491 = vadd.f32 %v2222, 1.0
  %v2492 = vadd.f32 %v2224, 1.0
  %v2493 = vadd.f32 %v2226, 1.0
  %v2494 = vadd.f32 %v2228, 1.0
  %v2495 = vadd.f32 %v2230, 1.0
  %v2496 = vadd.f32 %v2232, 1.0
  %v2497 = vadd.f32 %v2234, 1.0
  %v2498 = vadd.f32 %v2236, 1.0
  %v2499 = vadd.f32 %v2238, 1.0
  %v2500 = vadd.f32 %v2240, 1.0
  %v2501 = vadd.f32 %v2242, 1.0
  %v2502 = vadd.f32 %v2244, 1.0
  %v2503 = vadd.f32 %v2246, 1.0
  %v2504 = vadd.f32 %v2248, 1.0
  %v2505 = vadd.f32 %v2250, 1.0
  %v2506 = vadd.f32 %v2252, 1.0
  %v2507 = vadd.f32 %v2254, 1.0
  %v2508 = vadd.f32 %v2256, 1.0
  %v2509 = vadd.f32 %v2258, 1.0
  %v2510 = vadd.f32 %v2260, 1.0
  %v2511 = vadd.f32 %v2262, 1.0
  %v2512 = vadd.f32 %v2264, 1.0
  %v2513 = vadd.f32 %v2266, 1.0
  %v2514 = vadd.f32 %v2268, 1.0
  %v2515 = vadd.f32 %v2270, 1.0
  %v2516 = vadd.f32 %v2272, 1.0
  %v2517 = vadd.f32 %v2274, 1.0
  %v2518 = vadd.f32 %v2276, 1.0
  %v2519 = vadd.f32 %v2278, 1.0
  %v2520 = vadd.f32 %v2280, 1.0
  %v2521 = vadd.f32 %v2282, 1.0
  %v2522 = vadd.f32 %v2284, 1.0
  %v2523 = vadd.f32 %v2286, 1.0
  %v2524 = vadd.f32 %v2288, 1.0
  %v2525 = vadd.f32 %v2290, 1.0
  %v2526 = vadd.f32 %v2292, 1.0
  %v2527 = vadd.f32 %v2294, 1.0
  %v2528 = vadd.f32 %v2296, 1.0
  %v2529 = vadd.f32 %v2298, 1.0
  %v2530 = vadd.f32 %v2300, 1.0
  %v2531 = vadd.f32 %v2302, 1.0
  %v2532 = vadd.f32 %v2304, 1.0
  %v2533 = vrcp.pop %v2305
  %v2534 = vmul.f32 1.0, %v2533
  %v2535 = vrcp.pop %v2306
  %v2536 = vmul.f32 1.0, %v2535
  %v2537 = vrcp.pop %v2307
  %v2538 = vmul.f32 1.0, %v2537
  %v2539 = vrcp.pop %v2308
  %v2540 = vmul.f32 1.0, %v2539
  %v2541 = vrcp.pop %v2309
  %v2542 = vmul.f32 1.0, %v2541
  %v2543 = vrcp.pop %v2310
  %v2544 = vmul.f32 1.0, %v2543
  %v2545 = vrcp.pop %v2311
  %v2546 = vmul.f32 1.0, %v2545
  %v2547 = vrcp.pop %v2312
  %v2548 = vmul.f32 1.0, %v2547
  %v2549 = vrcp.pop %v2313
  %v2550 = vmul.f32 1.0, %v2549
  %v2551 = vrcp.pop %v2314
  %v2552 = vmul.f32 1.0, %v2551
  %v2553 = vrcp.pop %v2315
  %v2554 = vmul.f32 1.0, %v2553
  %v2555 = vrcp.pop %v2316
  %v2556 = vmul.f32 1.0, %v2555
  %v2557 = vrcp.pop %v2317
  %v2558 = vmul.f32 1.0, %v2557
  %v2559 = vrcp.pop %v2318
  %v2560 = vmul.f32 1.0, %v2559
  %v2561 = vrcp.pop %v2319
  %v2562 = vmul.f32 1.0, %v2561
  %v2563 = vrcp.pop %v2320
  %v2564 = vmul.f32 1.0, %v2563
  %v2565 = vrcp.pop %v2321
  %v2566 = vmul.f32 1.0, %v2565
  %v2567 = vrcp.pop %v2322
  %v2568 = vmul.f32 1.0, %v2567
  %v2569 = vrcp.pop %v2323
  %v2570 = vmul.f32 1.0, %v2569
  %v2571 = vrcp.pop %v2324
  %v2572 = vmul.f32 1.0, %v2571
  %v2573 = vrcp.pop %v2325
  %v2574 = vmul.f32 1.0, %v2573
  %v2575 = vrcp.pop %v2326
  %v2576 = vmul.f32 1.0, %v2575
  %v2577 = vrcp.pop %v2327
  %v2578 = vmul.f32 1.0, %v2577
  %v2579 = vrcp.pop %v2328
  %v2580 = vmul.f32 1.0, %v2579
  %v2581 = vrcp.pop %v2329
  %v2582 = vmul.f32 1.0, %v2581
  %v2583 = vrcp.pop %v2330
  %v2584 = vmul.f32 1.0, %v2583
  %v2585 = vrcp.pop %v2331
  %v2586 = vmul.f32 1.0, %v2585
  %v2587 = vrcp.pop %v2332
  %v2588 = vmul.f32 1.0, %v2587
  %v2589 = vrcp.pop %v2333
  %v2590 = vmul.f32 1.0, %v2589
  %v2591 = vrcp.pop %v2334
  %v2592 = vmul.f32 1.0, %v2591
  %v2593 = vrcp.pop %v2335
  %v2594 = vmul.f32 1.0, %v2593
  %v2595 = vrcp.pop %v2336
  %v2596 = vmul.f32 1.0, %v2595
  %v2597 = vrcp.pop %v2337
  %v2598 = vmul.f32 1.0, %v2597
  %v2599 = vrcp.pop %v2338
  %v2600 = vmul.f32 1.0, %v2599
  %v2601 = vrcp.pop %v2339
  %v2602 = vmul.f32 1.0, %v2601
  %v2603 = vrcp.pop %v2340
  %v2604 = vmul.f32 1.0, %v2603
  %v2605 = vrcp.pop %v2341
  %v2606 = vmul.f32 1.0, %v2605
  %v2607 = vrcp.pop %v2342
  %v2608 = vmul.f32 1.0, %v2607
  %v2609 = vrcp.pop %v2343
  %v2610 = vmul.f32 1.0, %v2609
  %v2611 = vrcp.pop %v2344
  %v2612 = vmul.f32 1.0, %v2611
  %v2613 = vrcp.pop %v2345
  %v2614 = vmul.f32 1.0, %v2613
  %v2615 = vrcp.pop %v2346
  %v2616 = vmul.f32 1.0, %v2615
  %v2617 = vrcp.pop %v2347
  %v2618 = vmul.f32 1.0, %v2617
  %v2619 = vrcp.pop %v2348
  %v2620 = vmul.f32 1.0, %v2619
  %v2621 = vrcp.pop %v2349
  %v2622 = vmul.f32 1.0, %v2621
  %v2623 = vrcp.pop %v2350
  %v2624 = vmul.f32 1.0, %v2623
  %v2625 = vrcp.pop %v2351
  %v2626 = vmul.f32 1.0, %v2625
  %v2627 = vrcp.pop %v2352
  %v2628 = vmul.f32 1.0, %v2627
  %v2629 = vrcp.pop %v2353
  %v2630 = vmul.f32 1.0, %v2629
  %v2631 = vrcp.pop %v2354
  %v2632 = vmul.f32 1.0, %v2631
  %v2633 = vrcp.pop %v2355
  %v2634 = vmul.f32 1.0, %v2633
  %v2635 = vrcp.pop %v2356
  %v2636 = vmul.f32 1.0, %v2635
  %v2637 = vrcp.pop %v2357
  %v2638 = vmul.f32 1.0, %v2637
  %v2639 = vrcp.pop %v2358
  %v2640 = vmul.f32 1.0, %v2639
  %v2641 = vrcp.pop %v2359
  %v2642 = vmul.f32 1.0, %v2641
  %v2643 = vrcp.pop %v2360
  %v2644 = vmul.f32 1.0, %v2643
  %v2645 = vrcp.pop %v2361
  %v2646 = vmul.f32 1.0, %v2645
  %v2647 = vrcp.pop %v2362
  %v2648 = vmul.f32 1.0, %v2647
  %v2649 = vrcp.pop %v2363
  %v2650 = vmul.f32 1.0, %v2649
  %v2651 = vrcp.pop %v2364
  %v2652 = vmul.f32 1.0, %v2651
  %v2653 = vrcp.pop %v2365
  %v2654 = vmul.f32 1.0, %v2653
  %v2655 = vrcp.pop %v2366
  %v2656 = vmul.f32 1.0, %v2655
  %v2657 = vrcp.pop %v2367
  %v2658 = vmul.f32 1.0, %v2657
  %v2659 = vrcp.pop %v2368
  %v2660 = vmul.f32 1.0, %v2659
  %v2661 = vrcp.pop %v2369
  %v2662 = vmul.f32 1.0, %v2661
  %v2663 = vrcp.pop %v2370
  %v2664 = vmul.f32 1.0, %v2663
  %v2665 = vrcp.pop %v2371
  %v2666 = vmul.f32 1.0, %v2665
  %v2667 = vrcp.pop %v2372
  %v2668 = vmul.f32 1.0, %v2667
  %v2669 = vrcp.pop %v2373
  %v2670 = vmul.f32 1.0, %v2669
  %v2671 = vrcp.pop %v2374
  %v2672 = vmul.f32 1.0, %v2671
  %v2673 = vrcp.pop %v2375
  %v2674 = vmul.f32 1.0, %v2673
  %v2675 = vrcp.pop %v2376
  %v2676 = vmul.f32 1.0, %v2675
  %v2677 = vrcp.pop %v2377
  %v2678 = vmul.f32 1.0, %v2677
  %v2679 = vrcp.pop %v2378
  %v2680 = vmul.f32 1.0, %v2679
  %v2681 = vrcp.pop %v2379
  %v2682 = vmul.f32 1.0, %v2681
  %v2683 = vrcp.pop %v2380
  %v2684 = vmul.f32 1.0, %v2683
  %v2685 = vrcp.pop %v2381
  %v2686 = vmul.f32 1.0, %v2685
  %v2687 = vrcp.pop %v2382
  %v2688 = vmul.f32 1.0, %v2687
  %v2689 = vrcp.pop %v2383
  %v2690 = vmul.f32 1.0, %v2689
  %v2691 = vrcp.pop %v2384
  %v2692 = vmul.f32 1.0, %v2691
  %v2693 = vrcp.pop %v2385
  %v2694 = vmul.f32 1.0, %v2693
  %v2695 = vrcp.pop %v2386
  %v2696 = vmul.f32 1.0, %v2695
  %v2697 = vrcp.pop %v2387
  %v2698 = vmul.f32 1.0, %v2697
  %v2699 = vrcp.pop %v2388
  %v2700 = vmul.f32 1.0, %v2699
  %v2701 = vrcp.pop %v2389
  %v2702 = vmul.f32 1.0, %v2701
  %v2703 = vrcp.pop %v2390
  %v2704 = vmul.f32 1.0, %v2703
  %v2705 = vrcp.pop %v2391
  %v2706 = vmul.f32 1.0, %v2705
  %v2707 = vrcp.pop %v2392
  %v2708 = vmul.f32 1.0, %v2707
  %v2709 = vrcp.pop %v2393
  %v2710 = vmul.f32 1.0, %v2709
  %v2711 = vrcp.pop %v2394
  %v2712 = vmul.f32 1.0, %v2711
  %v2713 = vrcp.pop %v2395
  %v2714 = vmul.f32 1.0, %v2713
  %v2715 = vrcp.pop %v2396
  %v2716 = vmul.f32 1.0, %v2715
  %v2717 = vrcp.pop %v2397
  %v2718 = vmul.f32 1.0, %v2717
  %v2719 = vrcp.pop %v2398
  %v2720 = vmul.f32 1.0, %v2719
  %v2721 = vrcp.pop %v2399
  %v2722 = vmul.f32 1.0, %v2721
  %v2723 = vrcp.pop %v2400
  %v2724 = vmul.f32 1.0, %v2723
  %v2725 = vrcp.pop %v2401
  %v2726 = vmul.f32 1.0, %v2725
  %v2727 = vrcp.pop %v2402
  %v2728 = vmul.f32 1.0, %v2727
  %v2729 = vrcp.pop %v2403
  %v2730 = vmul.f32 1.0, %v2729
  %v2731 = vrcp.pop %v2404
  %v2732 = vmul.f32 1.0, %v2731
  %v2733 = vrcp.pop %v2405
  %v2734 = vmul.f32 1.0, %v2733
  %v2735 = vrcp.pop %v2406
  %v2736 = vmul.f32 1.0, %v2735
  %v2737 = vrcp.pop %v2407
  %v2738 = vmul.f32 1.0, %v2737
  %v2739 = vrcp.pop %v2408
  %v2740 = vmul.f32 1.0, %v2739
  %v2741 = vrcp.pop %v2409
  %v2742 = vmul.f32 1.0, %v2741
  %v2743 = vrcp.pop %v2410
  %v2744 = vmul.f32 1.0, %v2743
  %v2745 = vrcp.pop %v2411
  %v2746 = vmul.f32 1.0, %v2745
  %v2747 = vrcp.pop %v2412
  %v2748 = vmul.f32 1.0, %v2747
  %v2749 = vrcp.pop %v2413
  %v2750 = vmul.f32 1.0, %v2749
  %v2751 = vrcp.pop %v2414
  %v2752 = vmul.f32 1.0, %v2751
  %v2753 = vrcp.pop %v2415
  %v2754 = vmul.f32 1.0, %v2753
  %v2755 = vrcp.pop %v2416
  %v2756 = vmul.f32 1.0, %v2755
  %v2757 = vrcp.pop %v2417
  %v2758 = vmul.f32 1.0, %v2757
  %v2759 = vrcp.pop %v2418
  %v2760 = vmul.f32 1.0, %v2759
  %v2761 = vrcp.pop %v2419
  %v2762 = vmul.f32 1.0, %v2761
  %v2763 = vrcp.pop %v2420
  %v2764 = vmul.f32 1.0, %v2763
  %v2765 = vrcp.pop %v2421
  %v2766 = vmul.f32 1.0, %v2765
  %v2767 = vrcp.pop %v2422
  %v2768 = vmul.f32 1.0, %v2767
  %v2769 = vrcp.pop %v2423
  %v2770 = vmul.f32 1.0, %v2769
  %v2771 = vrcp.pop %v2424
  %v2772 = vmul.f32 1.0, %v2771
  %v2773 = vrcp.pop %v2425
  %v2774 = vmul.f32 1.0, %v2773
  %v2775 = vrcp.pop %v2426
  %v2776 = vmul.f32 1.0, %v2775
  %v2777 = vrcp.pop %v2427
  %v2778 = vmul.f32 1.0, %v2777
  %v2779 = vrcp.pop %v2428
  %v2780 = vmul.f32 1.0, %v2779
  %v2781 = vrcp.pop %v2429
  %v2782 = vmul.f32 1.0, %v2781
  %v2783 = vrcp.pop %v2430
  %v2784 = vmul.f32 1.0, %v2783
  %v2785 = vrcp.pop %v2431
  %v2786 = vmul.f32 1.0, %v2785
  %v2787 = vrcp.pop %v2432
  %v2788 = vmul.f32 1.0, %v2787
  %v2789 = vrcp.pop %v2433
  %v2790 = vmul.f32 1.0, %v2789
  %v2791 = vrcp.pop %v2434
  %v2792 = vmul.f32 1.0, %v2791
  %v2793 = vrcp.pop %v2435
  %v2794 = vmul.f32 1.0, %v2793
  %v2795 = vrcp.pop %v2436
  %v2796 = vmul.f32 1.0, %v2795
  %v2797 = vrcp.pop %v2437
  %v2798 = vmul.f32 1.0, %v2797
  %v2799 = vrcp.pop %v2438
  %v2800 = vmul.f32 1.0, %v2799
  %v2801 = vrcp.pop %v2439
  %v2802 = vmul.f32 1.0, %v2801
  %v2803 = vrcp.pop %v2440
  %v2804 = vmul.f32 1.0, %v2803
  %v2805 = vrcp.pop %v2441
  %v2806 = vmul.f32 1.0, %v2805
  %v2807 = vrcp.pop %v2442
  %v2808 = vmul.f32 1.0, %v2807
  %v2809 = vrcp.pop %v2443
  %v2810 = vmul.f32 1.0, %v2809
  %v2811 = vrcp.pop %v2444
  %v2812 = vmul.f32 1.0, %v2811
  %v2813 = vrcp.pop %v2445
  %v2814 = vmul.f32 1.0, %v2813
  %v2815 = vrcp.pop %v2446
  %v2816 = vmul.f32 1.0, %v2815
  %v2817 = vrcp.pop %v2447
  %v2818 = vmul.f32 1.0, %v2817
  %v2819 = vrcp.pop %v2448
  %v2820 = vmul.f32 1.0, %v2819
  %v2821 = vrcp.pop %v2449
  %v2822 = vmul.f32 1.0, %v2821
  %v2823 = vrcp.pop %v2450
  %v2824 = vmul.f32 1.0, %v2823
  %v2825 = vrcp.pop %v2451
  %v2826 = vmul.f32 1.0, %v2825
  %v2827 = vrcp.pop %v2452
  %v2828 = vmul.f32 1.0, %v2827
  %v2829 = vrcp.pop %v2453
  %v2830 = vmul.f32 1.0, %v2829
  %v2831 = vrcp.pop %v2454
  %v2832 = vmul.f32 1.0, %v2831
  %v2833 = vrcp.pop %v2455
  %v2834 = vmul.f32 1.0, %v2833
  %v2835 = vrcp.pop %v2456
  %v2836 = vmul.f32 1.0, %v2835
  %v2837 = vrcp.pop %v2457
  %v2838 = vmul.f32 1.0, %v2837
  %v2839 = vrcp.pop %v2458
  %v2840 = vmul.f32 1.0, %v2839
  %v2841 = vrcp.pop %v2459
  %v2842 = vmul.f32 1.0, %v2841
  %v2843 = vrcp.pop %v2460
  %v2844 = vmul.f32 1.0, %v2843
  %v2845 = vrcp.pop %v2461
  %v2846 = vmul.f32 1.0, %v2845
  %v2847 = vrcp.pop %v2462
  %v2848 = vmul.f32 1.0, %v2847
  %v2849 = vrcp.pop %v2463
  %v2850 = vmul.f32 1.0, %v2849
  %v2851 = vrcp.pop %v2464
  %v2852 = vmul.f32 1.0, %v2851
  %v2853 = vrcp.pop %v2465
  %v2854 = vmul.f32 1.0, %v2853
  %v2855 = vrcp.pop %v2466
  %v2856 = vmul.f32 1.0, %v2855
  %v2857 = vrcp.pop %v2467
  %v2858 = vmul.f32 1.0, %v2857
  %v2859 = vrcp.pop %v2468
  %v2860 = vmul.f32 1.0, %v2859
  %v2861 = vrcp.pop %v2469
  %v2862 = vmul.f32 1.0, %v2861
  %v2863 = vrcp.pop %v2470
  %v2864 = vmul.f32 1.0, %v2863
  %v2865 = vrcp.pop %v2471
  %v2866 = vmul.f32 1.0, %v2865
  %v2867 = vrcp.pop %v2472
  %v2868 = vmul.f32 1.0, %v2867
  %v2869 = vrcp.pop %v2473
  %v2870 = vmul.f32 1.0, %v2869
  %v2871 = vrcp.pop %v2474
  %v2872 = vmul.f32 1.0, %v2871
  %v2873 = vrcp.pop %v2475
  %v2874 = vmul.f32 1.0, %v2873
  %v2875 = vrcp.pop %v2476
  %v2876 = vmul.f32 1.0, %v2875
  %v2877 = vrcp.pop %v2477
  %v2878 = vmul.f32 1.0, %v2877
  %v2879 = vrcp.pop %v2478
  %v2880 = vmul.f32 1.0, %v2879
  %v2881 = vrcp.pop %v2479
  %v2882 = vmul.f32 1.0, %v2881
  %v2883 = vrcp.pop %v2480
  %v2884 = vmul.f32 1.0, %v2883
  %v2885 = vrcp.pop %v2481
  %v2886 = vmul.f32 1.0, %v2885
  %v2887 = vrcp.pop %v2482
  %v2888 = vmul.f32 1.0, %v2887
  %v2889 = vrcp.pop %v2483
  %v2890 = vmul.f32 1.0, %v2889
  %v2891 = vrcp.pop %v2484
  %v2892 = vmul.f32 1.0, %v2891
  %v2893 = vrcp.pop %v2485
  %v2894 = vmul.f32 1.0, %v2893
  %v2895 = vrcp.pop %v2486
  %v2896 = vmul.f32 1.0, %v2895
  %v2897 = vrcp.pop %v2487
  %v2898 = vmul.f32 1.0, %v2897
  %v2899 = vrcp.pop %v2488
  %v2900 = vmul.f32 1.0, %v2899
  %v2901 = vrcp.pop %v2489
  %v2902 = vmul.f32 1.0, %v2901
  %v2903 = vrcp.pop %v2490
  %v2904 = vmul.f32 1.0, %v2903
  %v2905 = vrcp.pop %v2491
  %v2906 = vmul.f32 1.0, %v2905
  %v2907 = vrcp.pop %v2492
  %v2908 = vmul.f32 1.0, %v2907
  %v2909 = vrcp.pop %v2493
  %v2910 = vmul.f32 1.0, %v2909
  %v2911 = vrcp.pop %v2494
  %v2912 = vmul.f32 1.0, %v2911
  %v2913 = vrcp.pop %v2495
  %v2914 = vmul.f32 1.0, %v2913
  %v2915 = vrcp.pop %v2496
  %v2916 = vmul.f32 1.0, %v2915
  %v2917 = vrcp.pop %v2497
  %v2918 = vmul.f32 1.0, %v2917
  %v2919 = vrcp.pop %v2498
  %v2920 = vmul.f32 1.0, %v2919
  %v2921 = vrcp.pop %v2499
  %v2922 = vmul.f32 1.0, %v2921
  %v2923 = vrcp.pop %v2500
  %v2924 = vmul.f32 1.0, %v2923
  %v2925 = vrcp.pop %v2501
  %v2926 = vmul.f32 1.0, %v2925
  %v2927 = vrcp.pop %v2502
  %v2928 = vmul.f32 1.0, %v2927
  %v2929 = vrcp.pop %v2503
  %v2930 = vmul.f32 1.0, %v2929
  %v2931 = vrcp.pop %v2504
  %v2932 = vmul.f32 1.0, %v2931
  %v2933 = vrcp.pop %v2505
  %v2934 = vmul.f32 1.0, %v2933
  %v2935 = vrcp.pop %v2506
  %v2936 = vmul.f32 1.0, %v2935
  %v2937 = vrcp.pop %v2507
  %v2938 = vmul.f32 1.0, %v2937
  %v2939 = vrcp.pop %v2508
  %v2940 = vmul.f32 1.0, %v2939
  %v2941 = vrcp.pop %v2509
  %v2942 = vmul.f32 1.0, %v2941
  %v2943 = vrcp.pop %v2510
  %v2944 = vmul.f32 1.0, %v2943
  %v2945 = vrcp.pop %v2511
  %v2946 = vmul.f32 1.0, %v2945
  %v2947 = vrcp.pop %v2512
  %v2948 = vmul.f32 1.0, %v2947
  %v2949 = vrcp.pop %v2513
  %v2950 = vmul.f32 1.0, %v2949
  %v2951 = vrcp.pop %v2514
  %v2952 = vmul.f32 1.0, %v2951
  %v2953 = vrcp.pop %v2515
  %v2954 = vmul.f32 1.0, %v2953
  %v2955 = vrcp.pop %v2516
  %v2956 = vmul.f32 1.0, %v2955
  %v2957 = vrcp.pop %v2517
  %v2958 = vmul.f32 1.0, %v2957
  %v2959 = vrcp.pop %v2518
  %v2960 = vmul.f32 1.0, %v2959
  %v2961 = vrcp.pop %v2519
  %v2962 = vmul.f32 1.0, %v2961
  %v2963 = vrcp.pop %v2520
  %v2964 = vmul.f32 1.0, %v2963
  %v2965 = vrcp.pop %v2521
  %v2966 = vmul.f32 1.0, %v2965
  %v2967 = vrcp.pop %v2522
  %v2968 = vmul.f32 1.0, %v2967
  %v2969 = vrcp.pop %v2523
  %v2970 = vmul.f32 1.0, %v2969
  %v2971 = vrcp.pop %v2524
  %v2972 = vmul.f32 1.0, %v2971
  %v2973 = vrcp.pop %v2525
  %v2974 = vmul.f32 1.0, %v2973
  %v2975 = vrcp.pop %v2526
  %v2976 = vmul.f32 1.0, %v2975
  %v2977 = vrcp.pop %v2527
  %v2978 = vmul.f32 1.0, %v2977
  %v2979 = vrcp.pop %v2528
  %v2980 = vmul.f32 1.0, %v2979
  %v2981 = vrcp.pop %v2529
  %v2982 = vmul.f32 1.0, %v2981
  %v2983 = vrcp.pop %v2530
  %v2984 = vmul.f32 1.0, %v2983
  %v2985 = vrcp.pop %v2531
  %v2986 = vmul.f32 1.0, %v2985
  %v2987 = vrcp.pop %v2532
  %v2988 = vmul.f32 1.0, %v2987
  %v2989 = vld [vmem:[%s3] sm:$0xff]
  %v2990 = vld [vmem:[%s3 + $0x8] sm:$0xff]
  %v2991 = vld [vmem:[%s3 + $0x10] sm:$0xff]
  %v2992 = vld [vmem:[%s3 + $0x18] sm:$0xff]
  %v2993 = vld [vmem:[%s3 + $0x20] sm:$0xff]
  %v2994 = vld [vmem:[%s3 + $0x28] sm:$0xff]
  %v2995 = vld [vmem:[%s3 + $0x30] sm:$0xff]
  %v2996 = vld [vmem:[%s3 + $0x38] sm:$0xff]
  %v2997 = vld [vmem:[%s3 + $0x40] sm:$0xff]
  %v2998 = vld [vmem:[%s3 + $0x48] sm:$0xff]
  %v2999 = vld [vmem:[%s3 + $0x50] sm:$0xff]
  %v3000 = vld [vmem:[%s3 + $0x58] sm:$0xff]
  %v3001 = vld [vmem:[%s3 + $0x60] sm:$0xff]
  %v3002 = vld [vmem:[%s3 + $0x68] sm:$0xff]
  %v3003 = vld [vmem:[%s3 + $0x70] sm:$0xff]
  %v3004 = vld [vmem:[%s3 + $0x78] sm:$0xff]
  %v3005 = vld [vmem:[%s3 + $0x80] sm:$0xff]
  %v3006 = vld [vmem:[%s3 + $0x88] sm:$0xff]
  %v3007 = vld [vmem:[%s3 + $0x90] sm:$0xff]
  %v3008 = vld [vmem:[%s3 + $0x98] sm:$0xff]
  %v3009 = vld [vmem:[%s3 + $0xa0] sm:$0xff]
  %v3010 = vld [vmem:[%s3 + $0xa8] sm:$0xff]
  %v3011 = vld [vmem:[%s3 + $0xb0] sm:$0xff]
  %v3012 = vld [vmem:[%s3 + $0xb8] sm:$0xff]
  %v3013 = vld [vmem:[%s3 + $0xc0] sm:$0xff]
  %v3014 = vld [vmem:[%s3 + $0xc8] sm:$0xff]
  %v3015 = vld [vmem:[%s3 + $0xd0] sm:$0xff]
  %v3016 = vld [vmem:[%s3 + $0xd8] sm:$0xff]
  %v3017 = vld [vmem:[%s3 + $0xe0] sm:$0xff]
  %v3018 = vld [vmem:[%s3 + $0xe8] sm:$0xff]
  %v3019 = vld [vmem:[%s3 + $0xf0] sm:$0xff]
  %v3020 = vld [vmem:[%s3 + $0xf8] sm:$0xff]
  %v3021 = vld [vmem:[%s3 + $0x100] sm:$0xff]
  %v3022 = vld [vmem:[%s3 + $0x108] sm:$0xff]
  %v3023 = vld [vmem:[%s3 + $0x110] sm:$0xff]
  %v3024 = vld [vmem:[%s3 + $0x118] sm:$0xff]
  %v3025 = vld [vmem:[%s3 + $0x120] sm:$0xff]
  %v3026 = vld [vmem:[%s3 + $0x128] sm:$0xff]
  %v3027 = vld [vmem:[%s3 + $0x130] sm:$0xff]
  %v3028 = vld [vmem:[%s3 + $0x138] sm:$0xff]
  %v3029 = vld [vmem:[%s3 + $0x140] sm:$0xff]
  %v3030 = vld [vmem:[%s3 + $0x148] sm:$0xff]
  %v3031 = vld [vmem:[%s3 + $0x150] sm:$0xff]
  %v3032 = vld [vmem:[%s3 + $0x158] sm:$0xff]
  %v3033 = vld [vmem:[%s3 + $0x160] sm:$0xff]
  %v3034 = vld [vmem:[%s3 + $0x168] sm:$0xff]
  %v3035 = vld [vmem:[%s3 + $0x170] sm:$0xff]
  %v3036 = vld [vmem:[%s3 + $0x178] sm:$0xff]
  %v3037 = vld [vmem:[%s3 + $0x180] sm:$0xff]
  %v3038 = vld [vmem:[%s3 + $0x188] sm:$0xff]
  %v3039 = vld [vmem:[%s3 + $0x190] sm:$0xff]
  %v3040 = vld [vmem:[%s3 + $0x198] sm:$0xff]
  %v3041 = vld [vmem:[%s3 + $0x1a0] sm:$0xff]
  %v3042 = vld [vmem:[%s3 + $0x1a8] sm:$0xff]
  %v3043 = vld [vmem:[%s3 + $0x1b0] sm:$0xff]
  %v3044 = vld [vmem:[%s3 + $0x1b8] sm:$0xff]
  %v3045 = vld [vmem:[%s3 + $0x1c0] sm:$0xff]
  %v3046 = vld [vmem:[%s3 + $0x1c8] sm:$0xff]
  %v3047 = vld [vmem:[%s3 + $0x1d0] sm:$0xff]
  %v3048 = vld [vmem:[%s3 + $0x1d8] sm:$0xff]
  %v3049 = vld [vmem:[%s3 + $0x1e0] sm:$0xff]
  %v3050 = vld [vmem:[%s3 + $0x1e8] sm:$0xff]
  %v3051 = vld [vmem:[%s3 + $0x1f0] sm:$0xff]
  %v3052 = vld [vmem:[%s3 + $0x1f8] sm:$0xff]
  %v3053 = vld [vmem:[%s3 + $0x200] sm:$0xff]
  %v3054 = vld [vmem:[%s3 + $0x208] sm:$0xff]
  %v3055 = vld [vmem:[%s3 + $0x210] sm:$0xff]
  %v3056 = vld [vmem:[%s3 + $0x218] sm:$0xff]
  %v3057 = vld [vmem:[%s3 + $0x220] sm:$0xff]
  %v3058 = vld [vmem:[%s3 + $0x228] sm:$0xff]
  %v3059 = vld [vmem:[%s3 + $0x230] sm:$0xff]
  %v3060 = vld [vmem:[%s3 + $0x238] sm:$0xff]
  %v3061 = vld [vmem:[%s3 + $0x240] sm:$0xff]
  %v3062 = vld [vmem:[%s3 + $0x248] sm:$0xff]
  %v3063 = vld [vmem:[%s3 + $0x250] sm:$0xff]
  %v3064 = vld [vmem:[%s3 + $0x258] sm:$0xff]
  %v3065 = vld [vmem:[%s3 + $0x260] sm:$0xff]
  %v3066 = vld [vmem:[%s3 + $0x268] sm:$0xff]
  %v3067 = vld [vmem:[%s3 + $0x270] sm:$0xff]
  %v3068 = vld [vmem:[%s3 + $0x278] sm:$0xff]
  %v3069 = vld [vmem:[%s3 + $0x280] sm:$0xff]
  %v3070 = vld [vmem:[%s3 + $0x288] sm:$0xff]
  %v3071 = vld [vmem:[%s3 + $0x290] sm:$0xff]
  %v3072 = vld [vmem:[%s3 + $0x298] sm:$0xff]
  %v3073 = vld [vmem:[%s3 + $0x2a0] sm:$0xff]
  %v3074 = vld [vmem:[%s3 + $0x2a8] sm:$0xff]
  %v3075 = vld [vmem:[%s3 + $0x2b0] sm:$0xff]
  %v3076 = vld [vmem:[%s3 + $0x2b8] sm:$0xff]
  %v3077 = vld [vmem:[%s3 + $0x2c0] sm:$0xff]
  %v3078 = vld [vmem:[%s3 + $0x2c8] sm:$0xff]
  %v3079 = vld [vmem:[%s3 + $0x2d0] sm:$0xff]
  %v3080 = vld [vmem:[%s3 + $0x2d8] sm:$0xff]
  %v3081 = vld [vmem:[%s3 + $0x2e0] sm:$0xff]
  %v3082 = vld [vmem:[%s3 + $0x2e8] sm:$0xff]
  %v3083 = vld [vmem:[%s3 + $0x2f0] sm:$0xff]
  %v3084 = vld [vmem:[%s3 + $0x2f8] sm:$0xff]
  %v3085 = vld [vmem:[%s3 + $0x300] sm:$0xff]
  %v3086 = vld [vmem:[%s3 + $0x308] sm:$0xff]
  %v3087 = vld [vmem:[%s3 + $0x310] sm:$0xff]
  %v3088 = vld [vmem:[%s3 + $0x318] sm:$0xff]
  %v3089 = vld [vmem:[%s3 + $0x320] sm:$0xff]
  %v3090 = vld [vmem:[%s3 + $0x328] sm:$0xff]
  %v3091 = vld [vmem:[%s3 + $0x330] sm:$0xff]
  %v3092 = vld [vmem:[%s3 + $0x338] sm:$0xff]
  %v3093 = vld [vmem:[%s3 + $0x340] sm:$0xff]
  %v3094 = vld [vmem:[%s3 + $0x348] sm:$0xff]
  %v3095 = vld [vmem:[%s3 + $0x350] sm:$0xff]
  %v3096 = vld [vmem:[%s3 + $0x358] sm:$0xff]
  %v3097 = vld [vmem:[%s3 + $0x360] sm:$0xff]
  %v3098 = vld [vmem:[%s3 + $0x368] sm:$0xff]
  %v3099 = vld [vmem:[%s3 + $0x370] sm:$0xff]
  %v3100 = vld [vmem:[%s3 + $0x378] sm:$0xff]
  %v3101 = vld [vmem:[%s3 + $0x380] sm:$0xff]
  %v3102 = vld [vmem:[%s3 + $0x388] sm:$0xff]
  %v3103 = vld [vmem:[%s3 + $0x390] sm:$0xff]
  %v3104 = vld [vmem:[%s3 + $0x398] sm:$0xff]
  %v3105 = vld [vmem:[%s3 + $0x3a0] sm:$0xff]
  %v3106 = vld [vmem:[%s3 + $0x3a8] sm:$0xff]
  %v3107 = vld [vmem:[%s3 + $0x3b0] sm:$0xff]
  %v3108 = vld [vmem:[%s3 + $0x3b8] sm:$0xff]
  %v3109 = vld [vmem:[%s3 + $0x3c0] sm:$0xff]
  %v3110 = vld [vmem:[%s3 + $0x3c8] sm:$0xff]
  %v3111 = vld [vmem:[%s3 + $0x3d0] sm:$0xff]
  %v3112 = vld [vmem:[%s3 + $0x3d8] sm:$0xff]
  %v3113 = vld [vmem:[%s3 + $0x3e0] sm:$0xff]
  %v3114 = vld [vmem:[%s3 + $0x3e8] sm:$0xff]
  %v3115 = vld [vmem:[%s3 + $0x3f0] sm:$0xff]
  %v3116 = vld [vmem:[%s3 + $0x3f8] sm:$0xff]
  %v3117 = vld [vmem:[%s3 + $0x400] sm:$0xff]
  %v3118 = vld [vmem:[%s3 + $0x408] sm:$0xff]
  %v3119 = vld [vmem:[%s3 + $0x410] sm:$0xff]
  %v3120 = vld [vmem:[%s3 + $0x418] sm:$0xff]
  %v3121 = vld [vmem:[%s3 + $0x420] sm:$0xff]
  %v3122 = vld [vmem:[%s3 + $0x428] sm:$0xff]
  %v3123 = vld [vmem:[%s3 + $0x430] sm:$0xff]
  %v3124 = vld [vmem:[%s3 + $0x438] sm:$0xff]
  %v3125 = vld [vmem:[%s3 + $0x440] sm:$0xff]
  %v3126 = vld [vmem:[%s3 + $0x448] sm:$0xff]
  %v3127 = vld [vmem:[%s3 + $0x450] sm:$0xff]
  %v3128 = vld [vmem:[%s3 + $0x458] sm:$0xff]
  %v3129 = vld [vmem:[%s3 + $0x460] sm:$0xff]
  %v3130 = vld [vmem:[%s3 + $0x468] sm:$0xff]
  %v3131 = vld [vmem:[%s3 + $0x470] sm:$0xff]
  %v3132 = vld [vmem:[%s3 + $0x478] sm:$0xff]
  %v3133 = vld [vmem:[%s3 + $0x480] sm:$0xff]
  %v3134 = vld [vmem:[%s3 + $0x488] sm:$0xff]
  %v3135 = vld [vmem:[%s3 + $0x490] sm:$0xff]
  %v3136 = vld [vmem:[%s3 + $0x498] sm:$0xff]
  %v3137 = vld [vmem:[%s3 + $0x4a0] sm:$0xff]
  %v3138 = vld [vmem:[%s3 + $0x4a8] sm:$0xff]
  %v3139 = vld [vmem:[%s3 + $0x4b0] sm:$0xff]
  %v3140 = vld [vmem:[%s3 + $0x4b8] sm:$0xff]
  %v3141 = vld [vmem:[%s3 + $0x4c0] sm:$0xff]
  %v3142 = vld [vmem:[%s3 + $0x4c8] sm:$0xff]
  %v3143 = vld [vmem:[%s3 + $0x4d0] sm:$0xff]
  %v3144 = vld [vmem:[%s3 + $0x4d8] sm:$0xff]
  %v3145 = vld [vmem:[%s3 + $0x4e0] sm:$0xff]
  %v3146 = vld [vmem:[%s3 + $0x4e8] sm:$0xff]
  %v3147 = vld [vmem:[%s3 + $0x4f0] sm:$0xff]
  %v3148 = vld [vmem:[%s3 + $0x4f8] sm:$0xff]
  %v3149 = vld [vmem:[%s3 + $0x500] sm:$0xff]
  %v3150 = vld [vmem:[%s3 + $0x508] sm:$0xff]
  %v3151 = vld [vmem:[%s3 + $0x510] sm:$0xff]
  %v3152 = vld [vmem:[%s3 + $0x518] sm:$0xff]
  %v3153 = vld [vmem:[%s3 + $0x520] sm:$0xff]
  %v3154 = vld [vmem:[%s3 + $0x528] sm:$0xff]
  %v3155 = vld [vmem:[%s3 + $0x530] sm:$0xff]
  %v3156 = vld [vmem:[%s3 + $0x538] sm:$0xff]
  %v3157 = vld [vmem:[%s3 + $0x540] sm:$0xff]
  %v3158 = vld [vmem:[%s3 + $0x548] sm:$0xff]
  %v3159 = vld [vmem:[%s3 + $0x550] sm:$0xff]
  %v3160 = vld [vmem:[%s3 + $0x558] sm:$0xff]
  %v3161 = vld [vmem:[%s3 + $0x560] sm:$0xff]
  %v3162 = vld [vmem:[%s3 + $0x568] sm:$0xff]
  %v3163 = vld [vmem:[%s3 + $0x570] sm:$0xff]
  %v3164 = vld [vmem:[%s3 + $0x578] sm:$0xff]
  %v3165 = vld [vmem:[%s3 + $0x580] sm:$0xff]
  %v3166 = vld [vmem:[%s3 + $0x588] sm:$0xff]
  %v3167 = vld [vmem:[%s3 + $0x590] sm:$0xff]
  %v3168 = vld [vmem:[%s3 + $0x598] sm:$0xff]
  %v3169 = vld [vmem:[%s3 + $0x5a0] sm:$0xff]
  %v3170 = vld [vmem:[%s3 + $0x5a8] sm:$0xff]
  %v3171 = vld [vmem:[%s3 + $0x5b0] sm:$0xff]
  %v3172 = vld [vmem:[%s3 + $0x5b8] sm:$0xff]
  %v3173 = vld [vmem:[%s3 + $0x5c0] sm:$0xff]
  %v3174 = vld [vmem:[%s3 + $0x5c8] sm:$0xff]
  %v3175 = vld [vmem:[%s3 + $0x5d0] sm:$0xff]
  %v3176 = vld [vmem:[%s3 + $0x5d8] sm:$0xff]
  %v3177 = vld [vmem:[%s3 + $0x5e0] sm:$0xff]
  %v3178 = vld [vmem:[%s3 + $0x5e8] sm:$0xff]
  %v3179 = vld [vmem:[%s3 + $0x5f0] sm:$0xff]
  %v3180 = vld [vmem:[%s3 + $0x5f8] sm:$0xff]
  %v3181 = vld [vmem:[%s3 + $0x600] sm:$0xff]
  %v3182 = vld [vmem:[%s3 + $0x608] sm:$0xff]
  %v3183 = vld [vmem:[%s3 + $0x610] sm:$0xff]
  %v3184 = vld [vmem:[%s3 + $0x618] sm:$0xff]
  %v3185 = vld [vmem:[%s3 + $0x620] sm:$0xff]
  %v3186 = vld [vmem:[%s3 + $0x628] sm:$0xff]
  %v3187 = vld [vmem:[%s3 + $0x630] sm:$0xff]
  %v3188 = vld [vmem:[%s3 + $0x638] sm:$0xff]
  %v3189 = vld [vmem:[%s3 + $0x640] sm:$0xff]
  %v3190 = vld [vmem:[%s3 + $0x648] sm:$0xff]
  %v3191 = vld [vmem:[%s3 + $0x650] sm:$0xff]
  %v3192 = vld [vmem:[%s3 + $0x658] sm:$0xff]
  %v3193 = vld [vmem:[%s3 + $0x660] sm:$0xff]
  %v3194 = vld [vmem:[%s3 + $0x668] sm:$0xff]
  %v3195 = vld [vmem:[%s3 + $0x670] sm:$0xff]
  %v3196 = vld [vmem:[%s3 + $0x678] sm:$0xff]
  %v3197 = vld [vmem:[%s3 + $0x680] sm:$0xff]
  %v3198 = vld [vmem:[%s3 + $0x688] sm:$0xff]
  %v3199 = vld [vmem:[%s3 + $0x690] sm:$0xff]
  %v3200 = vld [vmem:[%s3 + $0x698] sm:$0xff]
  %v3201 = vld [vmem:[%s3 + $0x6a0] sm:$0xff]
  %v3202 = vld [vmem:[%s3 + $0x6a8] sm:$0xff]
  %v3203 = vld [vmem:[%s3 + $0x6b0] sm:$0xff]
  %v3204 = vld [vmem:[%s3 + $0x6b8] sm:$0xff]
  %v3205 = vld [vmem:[%s3 + $0x6c0] sm:$0xff]
  %v3206 = vld [vmem:[%s3 + $0x6c8] sm:$0xff]
  %v3207 = vld [vmem:[%s3 + $0x6d0] sm:$0xff]
  %v3208 = vld [vmem:[%s3 + $0x6d8] sm:$0xff]
  %v3209 = vld [vmem:[%s3 + $0x6e0] sm:$0xff]
  %v3210 = vld [vmem:[%s3 + $0x6e8] sm:$0xff]
  %v3211 = vld [vmem:[%s3 + $0x6f0] sm:$0xff]
  %v3212 = vld [vmem:[%s3 + $0x6f8] sm:$0xff]
  %v3213 = vld [vmem:[%s3 + $0x700] sm:$0xff]
  %v3214 = vld [vmem:[%s3 + $0x708] sm:$0xff]
  %v3215 = vld [vmem:[%s3 + $0x710] sm:$0xff]
  %v3216 = vld [vmem:[%s3 + $0x718] sm:$0xff]
  %3218 = vset.pattern.permute.xlu0 0
  %3219 = vperm.xlu0 %3218, %v2534
  %v3220 = vpop.permute.xlu0 %3219
  %3223 = vset.pattern.permute.xlu0 0
  %3224 = vperm.xlu0 %3223, %v2536
  %v3225 = vpop.permute.xlu0 %3224
  %3228 = vset.pattern.permute.xlu0 0
  %3229 = vperm.xlu0 %3228, %v2538
  %v3230 = vpop.permute.xlu0 %3229
  %3233 = vset.pattern.permute.xlu0 0
  %3234 = vperm.xlu0 %3233, %v2540
  %v3235 = vpop.permute.xlu0 %3234
  %3238 = vset.pattern.permute.xlu0 0
  %3239 = vperm.xlu0 %3238, %v2542
  %v3240 = vpop.permute.xlu0 %3239
  %3243 = vset.pattern.permute.xlu0 0
  %3244 = vperm.xlu0 %3243, %v2544
  %v3245 = vpop.permute.xlu0 %3244
  %3248 = vset.pattern.permute.xlu0 0
  %3249 = vperm.xlu0 %3248, %v2546
  %v3250 = vpop.permute.xlu0 %3249
  %3253 = vset.pattern.permute.xlu0 0
  %3254 = vperm.xlu0 %3253, %v2548
  %v3255 = vpop.permute.xlu0 %3254
  %3258 = vset.pattern.permute.xlu0 0
  %3259 = vperm.xlu0 %3258, %v2550
  %v3260 = vpop.permute.xlu0 %3259
  %3263 = vset.pattern.permute.xlu0 0
  %3264 = vperm.xlu0 %3263, %v2552
  %v3265 = vpop.permute.xlu0 %3264
  %3268 = vset.pattern.permute.xlu0 0
  %3269 = vperm.xlu0 %3268, %v2554
  %v3270 = vpop.permute.xlu0 %3269
  %3273 = vset.pattern.permute.xlu0 0
  %3274 = vperm.xlu0 %3273, %v2556
  %v3275 = vpop.permute.xlu0 %3274
  %3278 = vset.pattern.permute.xlu0 0
  %3279 = vperm.xlu0 %3278, %v2558
  %v3280 = vpop.permute.xlu0 %3279
  %3283 = vset.pattern.permute.xlu0 0
  %3284 = vperm.xlu0 %3283, %v2560
  %v3285 = vpop.permute.xlu0 %3284
  %3288 = vset.pattern.permute.xlu0 0
  %3289 = vperm.xlu0 %3288, %v2562
  %v3290 = vpop.permute.xlu0 %3289
  %3293 = vset.pattern.permute.xlu0 0
  %3294 = vperm.xlu0 %3293, %v2564
  %v3295 = vpop.permute.xlu0 %3294
  %3298 = vset.pattern.permute.xlu0 0
  %3299 = vperm.xlu0 %3298, %v2566
  %v3300 = vpop.permute.xlu0 %3299
  %3303 = vset.pattern.permute.xlu0 0
  %3304 = vperm.xlu0 %3303, %v2568
  %v3305 = vpop.permute.xlu0 %3304
  %3308 = vset.pattern.permute.xlu0 0
  %3309 = vperm.xlu0 %3308, %v2570
  %v3310 = vpop.permute.xlu0 %3309
  %3313 = vset.pattern.permute.xlu0 0
  %3314 = vperm.xlu0 %3313, %v2572
  %v3315 = vpop.permute.xlu0 %3314
  %3318 = vset.pattern.permute.xlu0 0
  %3319 = vperm.xlu0 %3318, %v2574
  %v3320 = vpop.permute.xlu0 %3319
  %3323 = vset.pattern.permute.xlu0 0
  %3324 = vperm.xlu0 %3323, %v2576
  %v3325 = vpop.permute.xlu0 %3324
  %3328 = vset.pattern.permute.xlu0 0
  %3329 = vperm.xlu0 %3328, %v2578
  %v3330 = vpop.permute.xlu0 %3329
  %3333 = vset.pattern.permute.xlu0 0
  %3334 = vperm.xlu0 %3333, %v2580
  %v3335 = vpop.permute.xlu0 %3334
  %3338 = vset.pattern.permute.xlu0 0
  %3339 = vperm.xlu0 %3338, %v2582
  %v3340 = vpop.permute.xlu0 %3339
  %3343 = vset.pattern.permute.xlu0 0
  %3344 = vperm.xlu0 %3343, %v2584
  %v3345 = vpop.permute.xlu0 %3344
  %3348 = vset.pattern.permute.xlu0 0
  %3349 = vperm.xlu0 %3348, %v2586
  %v3350 = vpop.permute.xlu0 %3349
  %3353 = vset.pattern.permute.xlu0 0
  %3354 = vperm.xlu0 %3353, %v2588
  %v3355 = vpop.permute.xlu0 %3354
  %3358 = vset.pattern.permute.xlu0 0
  %3359 = vperm.xlu0 %3358, %v2590
  %v3360 = vpop.permute.xlu0 %3359
  %3363 = vset.pattern.permute.xlu0 0
  %3364 = vperm.xlu0 %3363, %v2592
  %v3365 = vpop.permute.xlu0 %3364
  %3368 = vset.pattern.permute.xlu0 0
  %3369 = vperm.xlu0 %3368, %v2594
  %v3370 = vpop.permute.xlu0 %3369
  %3373 = vset.pattern.permute.xlu0 0
  %3374 = vperm.xlu0 %3373, %v2596
  %v3375 = vpop.permute.xlu0 %3374
  %3378 = vset.pattern.permute.xlu0 0
  %3379 = vperm.xlu0 %3378, %v2598
  %v3380 = vpop.permute.xlu0 %3379
  %3383 = vset.pattern.permute.xlu0 0
  %3384 = vperm.xlu0 %3383, %v2600
  %v3385 = vpop.permute.xlu0 %3384
  %3388 = vset.pattern.permute.xlu0 0
  %3389 = vperm.xlu0 %3388, %v2602
  %v3390 = vpop.permute.xlu0 %3389
  %3393 = vset.pattern.permute.xlu0 0
  %3394 = vperm.xlu0 %3393, %v2604
  %v3395 = vpop.permute.xlu0 %3394
  %3398 = vset.pattern.permute.xlu0 0
  %3399 = vperm.xlu0 %3398, %v2606
  %v3400 = vpop.permute.xlu0 %3399
  %3403 = vset.pattern.permute.xlu0 0
  %3404 = vperm.xlu0 %3403, %v2608
  %v3405 = vpop.permute.xlu0 %3404
  %3408 = vset.pattern.permute.xlu0 0
  %3409 = vperm.xlu0 %3408, %v2610
  %v3410 = vpop.permute.xlu0 %3409
  %3413 = vset.pattern.permute.xlu0 0
  %3414 = vperm.xlu0 %3413, %v2612
  %v3415 = vpop.permute.xlu0 %3414
  %3418 = vset.pattern.permute.xlu0 0
  %3419 = vperm.xlu0 %3418, %v2614
  %v3420 = vpop.permute.xlu0 %3419
  %3423 = vset.pattern.permute.xlu0 0
  %3424 = vperm.xlu0 %3423, %v2616
  %v3425 = vpop.permute.xlu0 %3424
  %3428 = vset.pattern.permute.xlu0 0
  %3429 = vperm.xlu0 %3428, %v2618
  %v3430 = vpop.permute.xlu0 %3429
  %3433 = vset.pattern.permute.xlu0 0
  %3434 = vperm.xlu0 %3433, %v2620
  %v3435 = vpop.permute.xlu0 %3434
  %3438 = vset.pattern.permute.xlu0 0
  %3439 = vperm.xlu0 %3438, %v2622
  %v3440 = vpop.permute.xlu0 %3439
  %3443 = vset.pattern.permute.xlu0 0
  %3444 = vperm.xlu0 %3443, %v2624
  %v3445 = vpop.permute.xlu0 %3444
  %3448 = vset.pattern.permute.xlu0 0
  %3449 = vperm.xlu0 %3448, %v2626
  %v3450 = vpop.permute.xlu0 %3449
  %3453 = vset.pattern.permute.xlu0 0
  %3454 = vperm.xlu0 %3453, %v2628
  %v3455 = vpop.permute.xlu0 %3454
  %3458 = vset.pattern.permute.xlu0 0
  %3459 = vperm.xlu0 %3458, %v2630
  %v3460 = vpop.permute.xlu0 %3459
  %3463 = vset.pattern.permute.xlu0 0
  %3464 = vperm.xlu0 %3463, %v2632
  %v3465 = vpop.permute.xlu0 %3464
  %3468 = vset.pattern.permute.xlu0 0
  %3469 = vperm.xlu0 %3468, %v2634
  %v3470 = vpop.permute.xlu0 %3469
  %3473 = vset.pattern.permute.xlu0 0
  %3474 = vperm.xlu0 %3473, %v2636
  %v3475 = vpop.permute.xlu0 %3474
  %3478 = vset.pattern.permute.xlu0 0
  %3479 = vperm.xlu0 %3478, %v2638
  %v3480 = vpop.permute.xlu0 %3479
  %3483 = vset.pattern.permute.xlu0 0
  %3484 = vperm.xlu0 %3483, %v2640
  %v3485 = vpop.permute.xlu0 %3484
  %3488 = vset.pattern.permute.xlu0 0
  %3489 = vperm.xlu0 %3488, %v2642
  %v3490 = vpop.permute.xlu0 %3489
  %3493 = vset.pattern.permute.xlu0 0
  %3494 = vperm.xlu0 %3493, %v2644
  %v3495 = vpop.permute.xlu0 %3494
  %3498 = vset.pattern.permute.xlu0 0
  %3499 = vperm.xlu0 %3498, %v2646
  %v3500 = vpop.permute.xlu0 %3499
  %3503 = vset.pattern.permute.xlu0 0
  %3504 = vperm.xlu0 %3503, %v2648
  %v3505 = vpop.permute.xlu0 %3504
  %3508 = vset.pattern.permute.xlu0 0
  %3509 = vperm.xlu0 %3508, %v2650
  %v3510 = vpop.permute.xlu0 %3509
  %3513 = vset.pattern.permute.xlu0 0
  %3514 = vperm.xlu0 %3513, %v2652
  %v3515 = vpop.permute.xlu0 %3514
  %3518 = vset.pattern.permute.xlu0 0
  %3519 = vperm.xlu0 %3518, %v2654
  %v3520 = vpop.permute.xlu0 %3519
  %3523 = vset.pattern.permute.xlu0 0
  %3524 = vperm.xlu0 %3523, %v2656
  %v3525 = vpop.permute.xlu0 %3524
  %3528 = vset.pattern.permute.xlu0 0
  %3529 = vperm.xlu0 %3528, %v2658
  %v3530 = vpop.permute.xlu0 %3529
  %3533 = vset.pattern.permute.xlu0 0
  %3534 = vperm.xlu0 %3533, %v2660
  %v3535 = vpop.permute.xlu0 %3534
  %3538 = vset.pattern.permute.xlu0 0
  %3539 = vperm.xlu0 %3538, %v2662
  %v3540 = vpop.permute.xlu0 %3539
  %3543 = vset.pattern.permute.xlu0 0
  %3544 = vperm.xlu0 %3543, %v2664
  %v3545 = vpop.permute.xlu0 %3544
  %3548 = vset.pattern.permute.xlu0 0
  %3549 = vperm.xlu0 %3548, %v2666
  %v3550 = vpop.permute.xlu0 %3549
  %3553 = vset.pattern.permute.xlu0 0
  %3554 = vperm.xlu0 %3553, %v2668
  %v3555 = vpop.permute.xlu0 %3554
  %3558 = vset.pattern.permute.xlu0 0
  %3559 = vperm.xlu0 %3558, %v2670
  %v3560 = vpop.permute.xlu0 %3559
  %3563 = vset.pattern.permute.xlu0 0
  %3564 = vperm.xlu0 %3563, %v2672
  %v3565 = vpop.permute.xlu0 %3564
  %3568 = vset.pattern.permute.xlu0 0
  %3569 = vperm.xlu0 %3568, %v2674
  %v3570 = vpop.permute.xlu0 %3569
  %3573 = vset.pattern.permute.xlu0 0
  %3574 = vperm.xlu0 %3573, %v2676
  %v3575 = vpop.permute.xlu0 %3574
  %3578 = vset.pattern.permute.xlu0 0
  %3579 = vperm.xlu0 %3578, %v2678
  %v3580 = vpop.permute.xlu0 %3579
  %3583 = vset.pattern.permute.xlu0 0
  %3584 = vperm.xlu0 %3583, %v2680
  %v3585 = vpop.permute.xlu0 %3584
  %3588 = vset.pattern.permute.xlu0 0
  %3589 = vperm.xlu0 %3588, %v2682
  %v3590 = vpop.permute.xlu0 %3589
  %3593 = vset.pattern.permute.xlu0 0
  %3594 = vperm.xlu0 %3593, %v2684
  %v3595 = vpop.permute.xlu0 %3594
  %3598 = vset.pattern.permute.xlu0 0
  %3599 = vperm.xlu0 %3598, %v2686
  %v3600 = vpop.permute.xlu0 %3599
  %3603 = vset.pattern.permute.xlu0 0
  %3604 = vperm.xlu0 %3603, %v2688
  %v3605 = vpop.permute.xlu0 %3604
  %3608 = vset.pattern.permute.xlu0 0
  %3609 = vperm.xlu0 %3608, %v2690
  %v3610 = vpop.permute.xlu0 %3609
  %3613 = vset.pattern.permute.xlu0 0
  %3614 = vperm.xlu0 %3613, %v2692
  %v3615 = vpop.permute.xlu0 %3614
  %3618 = vset.pattern.permute.xlu0 0
  %3619 = vperm.xlu0 %3618, %v2694
  %v3620 = vpop.permute.xlu0 %3619
  %3623 = vset.pattern.permute.xlu0 0
  %3624 = vperm.xlu0 %3623, %v2696
  %v3625 = vpop.permute.xlu0 %3624
  %3628 = vset.pattern.permute.xlu0 0
  %3629 = vperm.xlu0 %3628, %v2698
  %v3630 = vpop.permute.xlu0 %3629
  %3633 = vset.pattern.permute.xlu0 0
  %3634 = vperm.xlu0 %3633, %v2700
  %v3635 = vpop.permute.xlu0 %3634
  %3638 = vset.pattern.permute.xlu0 0
  %3639 = vperm.xlu0 %3638, %v2702
  %v3640 = vpop.permute.xlu0 %3639
  %3643 = vset.pattern.permute.xlu0 0
  %3644 = vperm.xlu0 %3643, %v2704
  %v3645 = vpop.permute.xlu0 %3644
  %3648 = vset.pattern.permute.xlu0 0
  %3649 = vperm.xlu0 %3648, %v2706
  %v3650 = vpop.permute.xlu0 %3649
  %3653 = vset.pattern.permute.xlu0 0
  %3654 = vperm.xlu0 %3653, %v2708
  %v3655 = vpop.permute.xlu0 %3654
  %3658 = vset.pattern.permute.xlu0 0
  %3659 = vperm.xlu0 %3658, %v2710
  %v3660 = vpop.permute.xlu0 %3659
  %3663 = vset.pattern.permute.xlu0 0
  %3664 = vperm.xlu0 %3663, %v2712
  %v3665 = vpop.permute.xlu0 %3664
  %3668 = vset.pattern.permute.xlu0 0
  %3669 = vperm.xlu0 %3668, %v2714
  %v3670 = vpop.permute.xlu0 %3669
  %3673 = vset.pattern.permute.xlu0 0
  %3674 = vperm.xlu0 %3673, %v2716
  %v3675 = vpop.permute.xlu0 %3674
  %3678 = vset.pattern.permute.xlu0 0
  %3679 = vperm.xlu0 %3678, %v2718
  %v3680 = vpop.permute.xlu0 %3679
  %3683 = vset.pattern.permute.xlu0 0
  %3684 = vperm.xlu0 %3683, %v2720
  %v3685 = vpop.permute.xlu0 %3684
  %3688 = vset.pattern.permute.xlu0 0
  %3689 = vperm.xlu0 %3688, %v2722
  %v3690 = vpop.permute.xlu0 %3689
  %3693 = vset.pattern.permute.xlu0 0
  %3694 = vperm.xlu0 %3693, %v2724
  %v3695 = vpop.permute.xlu0 %3694
  %3698 = vset.pattern.permute.xlu0 0
  %3699 = vperm.xlu0 %3698, %v2726
  %v3700 = vpop.permute.xlu0 %3699
  %3703 = vset.pattern.permute.xlu0 0
  %3704 = vperm.xlu0 %3703, %v2728
  %v3705 = vpop.permute.xlu0 %3704
  %3708 = vset.pattern.permute.xlu0 0
  %3709 = vperm.xlu0 %3708, %v2730
  %v3710 = vpop.permute.xlu0 %3709
  %3713 = vset.pattern.permute.xlu0 0
  %3714 = vperm.xlu0 %3713, %v2732
  %v3715 = vpop.permute.xlu0 %3714
  %3718 = vset.pattern.permute.xlu0 0
  %3719 = vperm.xlu0 %3718, %v2734
  %v3720 = vpop.permute.xlu0 %3719
  %3723 = vset.pattern.permute.xlu0 0
  %3724 = vperm.xlu0 %3723, %v2736
  %v3725 = vpop.permute.xlu0 %3724
  %3728 = vset.pattern.permute.xlu0 0
  %3729 = vperm.xlu0 %3728, %v2738
  %v3730 = vpop.permute.xlu0 %3729
  %3733 = vset.pattern.permute.xlu0 0
  %3734 = vperm.xlu0 %3733, %v2740
  %v3735 = vpop.permute.xlu0 %3734
  %3738 = vset.pattern.permute.xlu0 0
  %3739 = vperm.xlu0 %3738, %v2742
  %v3740 = vpop.permute.xlu0 %3739
  %3743 = vset.pattern.permute.xlu0 0
  %3744 = vperm.xlu0 %3743, %v2744
  %v3745 = vpop.permute.xlu0 %3744
  %3748 = vset.pattern.permute.xlu0 0
  %3749 = vperm.xlu0 %3748, %v2746
  %v3750 = vpop.permute.xlu0 %3749
  %3753 = vset.pattern.permute.xlu0 0
  %3754 = vperm.xlu0 %3753, %v2748
  %v3755 = vpop.permute.xlu0 %3754
  %3758 = vset.pattern.permute.xlu0 0
  %3759 = vperm.xlu0 %3758, %v2750
  %v3760 = vpop.permute.xlu0 %3759
  %3763 = vset.pattern.permute.xlu0 0
  %3764 = vperm.xlu0 %3763, %v2752
  %v3765 = vpop.permute.xlu0 %3764
  %3768 = vset.pattern.permute.xlu0 0
  %3769 = vperm.xlu0 %3768, %v2754
  %v3770 = vpop.permute.xlu0 %3769
  %3773 = vset.pattern.permute.xlu0 0
  %3774 = vperm.xlu0 %3773, %v2756
  %v3775 = vpop.permute.xlu0 %3774
  %3778 = vset.pattern.permute.xlu0 0
  %3779 = vperm.xlu0 %3778, %v2758
  %v3780 = vpop.permute.xlu0 %3779
  %3783 = vset.pattern.permute.xlu0 0
  %3784 = vperm.xlu0 %3783, %v2760
  %v3785 = vpop.permute.xlu0 %3784
  %3788 = vset.pattern.permute.xlu0 0
  %3789 = vperm.xlu0 %3788, %v2762
  %v3790 = vpop.permute.xlu0 %3789
  %3793 = vset.pattern.permute.xlu0 0
  %3794 = vperm.xlu0 %3793, %v2764
  %v3795 = vpop.permute.xlu0 %3794
  %3798 = vset.pattern.permute.xlu0 0
  %3799 = vperm.xlu0 %3798, %v2766
  %v3800 = vpop.permute.xlu0 %3799
  %3803 = vset.pattern.permute.xlu0 0
  %3804 = vperm.xlu0 %3803, %v2768
  %v3805 = vpop.permute.xlu0 %3804
  %3808 = vset.pattern.permute.xlu0 0
  %3809 = vperm.xlu0 %3808, %v2770
  %v3810 = vpop.permute.xlu0 %3809
  %3813 = vset.pattern.permute.xlu0 0
  %3814 = vperm.xlu0 %3813, %v2772
  %v3815 = vpop.permute.xlu0 %3814
  %3818 = vset.pattern.permute.xlu0 0
  %3819 = vperm.xlu0 %3818, %v2774
  %v3820 = vpop.permute.xlu0 %3819
  %3823 = vset.pattern.permute.xlu0 0
  %3824 = vperm.xlu0 %3823, %v2776
  %v3825 = vpop.permute.xlu0 %3824
  %3828 = vset.pattern.permute.xlu0 0
  %3829 = vperm.xlu0 %3828, %v2778
  %v3830 = vpop.permute.xlu0 %3829
  %3833 = vset.pattern.permute.xlu0 0
  %3834 = vperm.xlu0 %3833, %v2780
  %v3835 = vpop.permute.xlu0 %3834
  %3838 = vset.pattern.permute.xlu0 0
  %3839 = vperm.xlu0 %3838, %v2782
  %v3840 = vpop.permute.xlu0 %3839
  %3843 = vset.pattern.permute.xlu0 0
  %3844 = vperm.xlu0 %3843, %v2784
  %v3845 = vpop.permute.xlu0 %3844
  %3848 = vset.pattern.permute.xlu0 0
  %3849 = vperm.xlu0 %3848, %v2786
  %v3850 = vpop.permute.xlu0 %3849
  %3853 = vset.pattern.permute.xlu0 0
  %3854 = vperm.xlu0 %3853, %v2788
  %v3855 = vpop.permute.xlu0 %3854
  %3858 = vset.pattern.permute.xlu0 0
  %3859 = vperm.xlu0 %3858, %v2790
  %v3860 = vpop.permute.xlu0 %3859
  %3863 = vset.pattern.permute.xlu0 0
  %3864 = vperm.xlu0 %3863, %v2792
  %v3865 = vpop.permute.xlu0 %3864
  %3868 = vset.pattern.permute.xlu0 0
  %3869 = vperm.xlu0 %3868, %v2794
  %v3870 = vpop.permute.xlu0 %3869
  %3873 = vset.pattern.permute.xlu0 0
  %3874 = vperm.xlu0 %3873, %v2796
  %v3875 = vpop.permute.xlu0 %3874
  %3878 = vset.pattern.permute.xlu0 0
  %3879 = vperm.xlu0 %3878, %v2798
  %v3880 = vpop.permute.xlu0 %3879
  %3883 = vset.pattern.permute.xlu0 0
  %3884 = vperm.xlu0 %3883, %v2800
  %v3885 = vpop.permute.xlu0 %3884
  %3888 = vset.pattern.permute.xlu0 0
  %3889 = vperm.xlu0 %3888, %v2802
  %v3890 = vpop.permute.xlu0 %3889
  %3893 = vset.pattern.permute.xlu0 0
  %3894 = vperm.xlu0 %3893, %v2804
  %v3895 = vpop.permute.xlu0 %3894
  %3898 = vset.pattern.permute.xlu0 0
  %3899 = vperm.xlu0 %3898, %v2806
  %v3900 = vpop.permute.xlu0 %3899
  %3903 = vset.pattern.permute.xlu0 0
  %3904 = vperm.xlu0 %3903, %v2808
  %v3905 = vpop.permute.xlu0 %3904
  %3908 = vset.pattern.permute.xlu0 0
  %3909 = vperm.xlu0 %3908, %v2810
  %v3910 = vpop.permute.xlu0 %3909
  %3913 = vset.pattern.permute.xlu0 0
  %3914 = vperm.xlu0 %3913, %v2812
  %v3915 = vpop.permute.xlu0 %3914
  %3918 = vset.pattern.permute.xlu0 0
  %3919 = vperm.xlu0 %3918, %v2814
  %v3920 = vpop.permute.xlu0 %3919
  %3923 = vset.pattern.permute.xlu0 0
  %3924 = vperm.xlu0 %3923, %v2816
  %v3925 = vpop.permute.xlu0 %3924
  %3928 = vset.pattern.permute.xlu0 0
  %3929 = vperm.xlu0 %3928, %v2818
  %v3930 = vpop.permute.xlu0 %3929
  %3933 = vset.pattern.permute.xlu0 0
  %3934 = vperm.xlu0 %3933, %v2820
  %v3935 = vpop.permute.xlu0 %3934
  %3938 = vset.pattern.permute.xlu0 0
  %3939 = vperm.xlu0 %3938, %v2822
  %v3940 = vpop.permute.xlu0 %3939
  %3943 = vset.pattern.permute.xlu0 0
  %3944 = vperm.xlu0 %3943, %v2824
  %v3945 = vpop.permute.xlu0 %3944
  %3948 = vset.pattern.permute.xlu0 0
  %3949 = vperm.xlu0 %3948, %v2826
  %v3950 = vpop.permute.xlu0 %3949
  %3953 = vset.pattern.permute.xlu0 0
  %3954 = vperm.xlu0 %3953, %v2828
  %v3955 = vpop.permute.xlu0 %3954
  %3958 = vset.pattern.permute.xlu0 0
  %3959 = vperm.xlu0 %3958, %v2830
  %v3960 = vpop.permute.xlu0 %3959
  %3963 = vset.pattern.permute.xlu0 0
  %3964 = vperm.xlu0 %3963, %v2832
  %v3965 = vpop.permute.xlu0 %3964
  %3968 = vset.pattern.permute.xlu0 0
  %3969 = vperm.xlu0 %3968, %v2834
  %v3970 = vpop.permute.xlu0 %3969
  %3973 = vset.pattern.permute.xlu0 0
  %3974 = vperm.xlu0 %3973, %v2836
  %v3975 = vpop.permute.xlu0 %3974
  %3978 = vset.pattern.permute.xlu0 0
  %3979 = vperm.xlu0 %3978, %v2838
  %v3980 = vpop.permute.xlu0 %3979
  %3983 = vset.pattern.permute.xlu0 0
  %3984 = vperm.xlu0 %3983, %v2840
  %v3985 = vpop.permute.xlu0 %3984
  %3988 = vset.pattern.permute.xlu0 0
  %3989 = vperm.xlu0 %3988, %v2842
  %v3990 = vpop.permute.xlu0 %3989
  %3993 = vset.pattern.permute.xlu0 0
  %3994 = vperm.xlu0 %3993, %v2844
  %v3995 = vpop.permute.xlu0 %3994
  %3998 = vset.pattern.permute.xlu0 0
  %3999 = vperm.xlu0 %3998, %v2846
  %v4000 = vpop.permute.xlu0 %3999
  %4003 = vset.pattern.permute.xlu0 0
  %4004 = vperm.xlu0 %4003, %v2848
  %v4005 = vpop.permute.xlu0 %4004
  %4008 = vset.pattern.permute.xlu0 0
  %4009 = vperm.xlu0 %4008, %v2850
  %v4010 = vpop.permute.xlu0 %4009
  %4013 = vset.pattern.permute.xlu0 0
  %4014 = vperm.xlu0 %4013, %v2852
  %v4015 = vpop.permute.xlu0 %4014
  %4018 = vset.pattern.permute.xlu0 0
  %4019 = vperm.xlu0 %4018, %v2854
  %v4020 = vpop.permute.xlu0 %4019
  %4023 = vset.pattern.permute.xlu0 0
  %4024 = vperm.xlu0 %4023, %v2856
  %v4025 = vpop.permute.xlu0 %4024
  %4028 = vset.pattern.permute.xlu0 0
  %4029 = vperm.xlu0 %4028, %v2858
  %v4030 = vpop.permute.xlu0 %4029
  %4033 = vset.pattern.permute.xlu0 0
  %4034 = vperm.xlu0 %4033, %v2860
  %v4035 = vpop.permute.xlu0 %4034
  %4038 = vset.pattern.permute.xlu0 0
  %4039 = vperm.xlu0 %4038, %v2862
  %v4040 = vpop.permute.xlu0 %4039
  %4043 = vset.pattern.permute.xlu0 0
  %4044 = vperm.xlu0 %4043, %v2864
  %v4045 = vpop.permute.xlu0 %4044
  %4048 = vset.pattern.permute.xlu0 0
  %4049 = vperm.xlu0 %4048, %v2866
  %v4050 = vpop.permute.xlu0 %4049
  %4053 = vset.pattern.permute.xlu0 0
  %4054 = vperm.xlu0 %4053, %v2868
  %v4055 = vpop.permute.xlu0 %4054
  %4058 = vset.pattern.permute.xlu0 0
  %4059 = vperm.xlu0 %4058, %v2870
  %v4060 = vpop.permute.xlu0 %4059
  %4063 = vset.pattern.permute.xlu0 0
  %4064 = vperm.xlu0 %4063, %v2872
  %v4065 = vpop.permute.xlu0 %4064
  %4068 = vset.pattern.permute.xlu0 0
  %4069 = vperm.xlu0 %4068, %v2874
  %v4070 = vpop.permute.xlu0 %4069
  %4073 = vset.pattern.permute.xlu0 0
  %4074 = vperm.xlu0 %4073, %v2876
  %v4075 = vpop.permute.xlu0 %4074
  %4078 = vset.pattern.permute.xlu0 0
  %4079 = vperm.xlu0 %4078, %v2878
  %v4080 = vpop.permute.xlu0 %4079
  %4083 = vset.pattern.permute.xlu0 0
  %4084 = vperm.xlu0 %4083, %v2880
  %v4085 = vpop.permute.xlu0 %4084
  %4088 = vset.pattern.permute.xlu0 0
  %4089 = vperm.xlu0 %4088, %v2882
  %v4090 = vpop.permute.xlu0 %4089
  %4093 = vset.pattern.permute.xlu0 0
  %4094 = vperm.xlu0 %4093, %v2884
  %v4095 = vpop.permute.xlu0 %4094
  %4098 = vset.pattern.permute.xlu0 0
  %4099 = vperm.xlu0 %4098, %v2886
  %v4100 = vpop.permute.xlu0 %4099
  %4103 = vset.pattern.permute.xlu0 0
  %4104 = vperm.xlu0 %4103, %v2888
  %v4105 = vpop.permute.xlu0 %4104
  %4108 = vset.pattern.permute.xlu0 0
  %4109 = vperm.xlu0 %4108, %v2890
  %v4110 = vpop.permute.xlu0 %4109
  %4113 = vset.pattern.permute.xlu0 0
  %4114 = vperm.xlu0 %4113, %v2892
  %v4115 = vpop.permute.xlu0 %4114
  %4118 = vset.pattern.permute.xlu0 0
  %4119 = vperm.xlu0 %4118, %v2894
  %v4120 = vpop.permute.xlu0 %4119
  %4123 = vset.pattern.permute.xlu0 0
  %4124 = vperm.xlu0 %4123, %v2896
  %v4125 = vpop.permute.xlu0 %4124
  %4128 = vset.pattern.permute.xlu0 0
  %4129 = vperm.xlu0 %4128, %v2898
  %v4130 = vpop.permute.xlu0 %4129
  %4133 = vset.pattern.permute.xlu0 0
  %4134 = vperm.xlu0 %4133, %v2900
  %v4135 = vpop.permute.xlu0 %4134
  %4138 = vset.pattern.permute.xlu0 0
  %4139 = vperm.xlu0 %4138, %v2902
  %v4140 = vpop.permute.xlu0 %4139
  %4143 = vset.pattern.permute.xlu0 0
  %4144 = vperm.xlu0 %4143, %v2904
  %v4145 = vpop.permute.xlu0 %4144
  %4148 = vset.pattern.permute.xlu0 0
  %4149 = vperm.xlu0 %4148, %v2906
  %v4150 = vpop.permute.xlu0 %4149
  %4153 = vset.pattern.permute.xlu0 0
  %4154 = vperm.xlu0 %4153, %v2908
  %v4155 = vpop.permute.xlu0 %4154
  %4158 = vset.pattern.permute.xlu0 0
  %4159 = vperm.xlu0 %4158, %v2910
  %v4160 = vpop.permute.xlu0 %4159
  %4163 = vset.pattern.permute.xlu0 0
  %4164 = vperm.xlu0 %4163, %v2912
  %v4165 = vpop.permute.xlu0 %4164
  %4168 = vset.pattern.permute.xlu0 0
  %4169 = vperm.xlu0 %4168, %v2914
  %v4170 = vpop.permute.xlu0 %4169
  %4173 = vset.pattern.permute.xlu0 0
  %4174 = vperm.xlu0 %4173, %v2916
  %v4175 = vpop.permute.xlu0 %4174
  %4178 = vset.pattern.permute.xlu0 0
  %4179 = vperm.xlu0 %4178, %v2918
  %v4180 = vpop.permute.xlu0 %4179
  %4183 = vset.pattern.permute.xlu0 0
  %4184 = vperm.xlu0 %4183, %v2920
  %v4185 = vpop.permute.xlu0 %4184
  %4188 = vset.pattern.permute.xlu0 0
  %4189 = vperm.xlu0 %4188, %v2922
  %v4190 = vpop.permute.xlu0 %4189
  %4193 = vset.pattern.permute.xlu0 0
  %4194 = vperm.xlu0 %4193, %v2924
  %v4195 = vpop.permute.xlu0 %4194
  %4198 = vset.pattern.permute.xlu0 0
  %4199 = vperm.xlu0 %4198, %v2926
  %v4200 = vpop.permute.xlu0 %4199
  %4203 = vset.pattern.permute.xlu0 0
  %4204 = vperm.xlu0 %4203, %v2928
  %v4205 = vpop.permute.xlu0 %4204
  %4208 = vset.pattern.permute.xlu0 0
  %4209 = vperm.xlu0 %4208, %v2930
  %v4210 = vpop.permute.xlu0 %4209
  %4213 = vset.pattern.permute.xlu0 0
  %4214 = vperm.xlu0 %4213, %v2932
  %v4215 = vpop.permute.xlu0 %4214
  %4218 = vset.pattern.permute.xlu0 0
  %4219 = vperm.xlu0 %4218, %v2934
  %v4220 = vpop.permute.xlu0 %4219
  %4223 = vset.pattern.permute.xlu0 0
  %4224 = vperm.xlu0 %4223, %v2936
  %v4225 = vpop.permute.xlu0 %4224
  %4228 = vset.pattern.permute.xlu0 0
  %4229 = vperm.xlu0 %4228, %v2938
  %v4230 = vpop.permute.xlu0 %4229
  %4233 = vset.pattern.permute.xlu0 0
  %4234 = vperm.xlu0 %4233, %v2940
  %v4235 = vpop.permute.xlu0 %4234
  %4238 = vset.pattern.permute.xlu0 0
  %4239 = vperm.xlu0 %4238, %v2942
  %v4240 = vpop.permute.xlu0 %4239
  %4243 = vset.pattern.permute.xlu0 0
  %4244 = vperm.xlu0 %4243, %v2944
  %v4245 = vpop.permute.xlu0 %4244
  %4248 = vset.pattern.permute.xlu0 0
  %4249 = vperm.xlu0 %4248, %v2946
  %v4250 = vpop.permute.xlu0 %4249
  %4253 = vset.pattern.permute.xlu0 0
  %4254 = vperm.xlu0 %4253, %v2948
  %v4255 = vpop.permute.xlu0 %4254
  %4258 = vset.pattern.permute.xlu0 0
  %4259 = vperm.xlu0 %4258, %v2950
  %v4260 = vpop.permute.xlu0 %4259
  %4263 = vset.pattern.permute.xlu0 0
  %4264 = vperm.xlu0 %4263, %v2952
  %v4265 = vpop.permute.xlu0 %4264
  %4268 = vset.pattern.permute.xlu0 0
  %4269 = vperm.xlu0 %4268, %v2954
  %v4270 = vpop.permute.xlu0 %4269
  %4273 = vset.pattern.permute.xlu0 0
  %4274 = vperm.xlu0 %4273, %v2956
  %v4275 = vpop.permute.xlu0 %4274
  %4278 = vset.pattern.permute.xlu0 0
  %4279 = vperm.xlu0 %4278, %v2958
  %v4280 = vpop.permute.xlu0 %4279
  %4283 = vset.pattern.permute.xlu0 0
  %4284 = vperm.xlu0 %4283, %v2960
  %v4285 = vpop.permute.xlu0 %4284
  %4288 = vset.pattern.permute.xlu0 0
  %4289 = vperm.xlu0 %4288, %v2962
  %v4290 = vpop.permute.xlu0 %4289
  %4293 = vset.pattern.permute.xlu0 0
  %4294 = vperm.xlu0 %4293, %v2964
  %v4295 = vpop.permute.xlu0 %4294
  %4298 = vset.pattern.permute.xlu0 0
  %4299 = vperm.xlu0 %4298, %v2966
  %v4300 = vpop.permute.xlu0 %4299
  %4303 = vset.pattern.permute.xlu0 0
  %4304 = vperm.xlu0 %4303, %v2968
  %v4305 = vpop.permute.xlu0 %4304
  %4308 = vset.pattern.permute.xlu0 0
  %4309 = vperm.xlu0 %4308, %v2970
  %v4310 = vpop.permute.xlu0 %4309
  %4313 = vset.pattern.permute.xlu0 0
  %4314 = vperm.xlu0 %4313, %v2972
  %v4315 = vpop.permute.xlu0 %4314
  %4318 = vset.pattern.permute.xlu0 0
  %4319 = vperm.xlu0 %4318, %v2974
  %v4320 = vpop.permute.xlu0 %4319
  %4323 = vset.pattern.permute.xlu0 0
  %4324 = vperm.xlu0 %4323, %v2976
  %v4325 = vpop.permute.xlu0 %4324
  %4328 = vset.pattern.permute.xlu0 0
  %4329 = vperm.xlu0 %4328, %v2978
  %v4330 = vpop.permute.xlu0 %4329
  %4333 = vset.pattern.permute.xlu0 0
  %4334 = vperm.xlu0 %4333, %v2980
  %v4335 = vpop.permute.xlu0 %4334
  %4338 = vset.pattern.permute.xlu0 0
  %4339 = vperm.xlu0 %4338, %v2982
  %v4340 = vpop.permute.xlu0 %4339
  %4343 = vset.pattern.permute.xlu0 0
  %4344 = vperm.xlu0 %4343, %v2984
  %v4345 = vpop.permute.xlu0 %4344
  %4348 = vset.pattern.permute.xlu0 0
  %4349 = vperm.xlu0 %4348, %v2986
  %v4350 = vpop.permute.xlu0 %4349
  %4353 = vset.pattern.permute.xlu0 0
  %4354 = vperm.xlu0 %4353, %v2988
  %v4355 = vpop.permute.xlu0 %4354
  %v4357 = vmul.f32 %v2989, %v3220
  %v4358 = vmul.f32 %v2990, %v3225
  %v4359 = vmul.f32 %v2991, %v3230
  %v4360 = vmul.f32 %v2992, %v3235
  %v4361 = vmul.f32 %v2993, %v3240
  %v4362 = vmul.f32 %v2994, %v3245
  %v4363 = vmul.f32 %v2995, %v3250
  %v4364 = vmul.f32 %v2996, %v3255
  %v4365 = vmul.f32 %v2997, %v3260
  %v4366 = vmul.f32 %v2998, %v3265
  %v4367 = vmul.f32 %v2999, %v3270
  %v4368 = vmul.f32 %v3000, %v3275
  %v4369 = vmul.f32 %v3001, %v3280
  %v4370 = vmul.f32 %v3002, %v3285
  %v4371 = vmul.f32 %v3003, %v3290
  %v4372 = vmul.f32 %v3004, %v3295
  %v4373 = vmul.f32 %v3005, %v3300
  %v4374 = vmul.f32 %v3006, %v3305
  %v4375 = vmul.f32 %v3007, %v3310
  %v4376 = vmul.f32 %v3008, %v3315
  %v4377 = vmul.f32 %v3009, %v3320
  %v4378 = vmul.f32 %v3010, %v3325
  %v4379 = vmul.f32 %v3011, %v3330
  %v4380 = vmul.f32 %v3012, %v3335
  %v4381 = vmul.f32 %v3013, %v3340
  %v4382 = vmul.f32 %v3014, %v3345
  %v4383 = vmul.f32 %v3015, %v3350
  %v4384 = vmul.f32 %v3016, %v3355
  %v4385 = vmul.f32 %v3017, %v3360
  %v4386 = vmul.f32 %v3018, %v3365
  %v4387 = vmul.f32 %v3019, %v3370
  %v4388 = vmul.f32 %v3020, %v3375
  %v4389 = vmul.f32 %v3021, %v3380
  %v4390 = vmul.f32 %v3022, %v3385
  %v4391 = vmul.f32 %v3023, %v3390
  %v4392 = vmul.f32 %v3024, %v3395
  %v4393 = vmul.f32 %v3025, %v3400
  %v4394 = vmul.f32 %v3026, %v3405
  %v4395 = vmul.f32 %v3027, %v3410
  %v4396 = vmul.f32 %v3028, %v3415
  %v4397 = vmul.f32 %v3029, %v3420
  %v4398 = vmul.f32 %v3030, %v3425
  %v4399 = vmul.f32 %v3031, %v3430
  %v4400 = vmul.f32 %v3032, %v3435
  %v4401 = vmul.f32 %v3033, %v3440
  %v4402 = vmul.f32 %v3034, %v3445
  %v4403 = vmul.f32 %v3035, %v3450
  %v4404 = vmul.f32 %v3036, %v3455
  %v4405 = vmul.f32 %v3037, %v3460
  %v4406 = vmul.f32 %v3038, %v3465
  %v4407 = vmul.f32 %v3039, %v3470
  %v4408 = vmul.f32 %v3040, %v3475
  %v4409 = vmul.f32 %v3041, %v3480
  %v4410 = vmul.f32 %v3042, %v3485
  %v4411 = vmul.f32 %v3043, %v3490
  %v4412 = vmul.f32 %v3044, %v3495
  %v4413 = vmul.f32 %v3045, %v3500
  %v4414 = vmul.f32 %v3046, %v3505
  %v4415 = vmul.f32 %v3047, %v3510
  %v4416 = vmul.f32 %v3048, %v3515
  %v4417 = vmul.f32 %v3049, %v3520
  %v4418 = vmul.f32 %v3050, %v3525
  %v4419 = vmul.f32 %v3051, %v3530
  %v4420 = vmul.f32 %v3052, %v3535
  %v4421 = vmul.f32 %v3053, %v3540
  %v4422 = vmul.f32 %v3054, %v3545
  %v4423 = vmul.f32 %v3055, %v3550
  %v4424 = vmul.f32 %v3056, %v3555
  %v4425 = vmul.f32 %v3057, %v3560
  %v4426 = vmul.f32 %v3058, %v3565
  %v4427 = vmul.f32 %v3059, %v3570
  %v4428 = vmul.f32 %v3060, %v3575
  %v4429 = vmul.f32 %v3061, %v3580
  %v4430 = vmul.f32 %v3062, %v3585
  %v4431 = vmul.f32 %v3063, %v3590
  %v4432 = vmul.f32 %v3064, %v3595
  %v4433 = vmul.f32 %v3065, %v3600
  %v4434 = vmul.f32 %v3066, %v3605
  %v4435 = vmul.f32 %v3067, %v3610
  %v4436 = vmul.f32 %v3068, %v3615
  %v4437 = vmul.f32 %v3069, %v3620
  %v4438 = vmul.f32 %v3070, %v3625
  %v4439 = vmul.f32 %v3071, %v3630
  %v4440 = vmul.f32 %v3072, %v3635
  %v4441 = vmul.f32 %v3073, %v3640
  %v4442 = vmul.f32 %v3074, %v3645
  %v4443 = vmul.f32 %v3075, %v3650
  %v4444 = vmul.f32 %v3076, %v3655
  %v4445 = vmul.f32 %v3077, %v3660
  %v4446 = vmul.f32 %v3078, %v3665
  %v4447 = vmul.f32 %v3079, %v3670
  %v4448 = vmul.f32 %v3080, %v3675
  %v4449 = vmul.f32 %v3081, %v3680
  %v4450 = vmul.f32 %v3082, %v3685
  %v4451 = vmul.f32 %v3083, %v3690
  %v4452 = vmul.f32 %v3084, %v3695
  %v4453 = vmul.f32 %v3085, %v3700
  %v4454 = vmul.f32 %v3086, %v3705
  %v4455 = vmul.f32 %v3087, %v3710
  %v4456 = vmul.f32 %v3088, %v3715
  %v4457 = vmul.f32 %v3089, %v3720
  %v4458 = vmul.f32 %v3090, %v3725
  %v4459 = vmul.f32 %v3091, %v3730
  %v4460 = vmul.f32 %v3092, %v3735
  %v4461 = vmul.f32 %v3093, %v3740
  %v4462 = vmul.f32 %v3094, %v3745
  %v4463 = vmul.f32 %v3095, %v3750
  %v4464 = vmul.f32 %v3096, %v3755
  %v4465 = vmul.f32 %v3097, %v3760
  %v4466 = vmul.f32 %v3098, %v3765
  %v4467 = vmul.f32 %v3099, %v3770
  %v4468 = vmul.f32 %v3100, %v3775
  %v4469 = vmul.f32 %v3101, %v3780
  %v4470 = vmul.f32 %v3102, %v3785
  %v4471 = vmul.f32 %v3103, %v3790
  %v4472 = vmul.f32 %v3104, %v3795
  %v4473 = vmul.f32 %v3105, %v3800
  %v4474 = vmul.f32 %v3106, %v3805
  %v4475 = vmul.f32 %v3107, %v3810
  %v4476 = vmul.f32 %v3108, %v3815
  %v4477 = vmul.f32 %v3109, %v3820
  %v4478 = vmul.f32 %v3110, %v3825
  %v4479 = vmul.f32 %v3111, %v3830
  %v4480 = vmul.f32 %v3112, %v3835
  %v4481 = vmul.f32 %v3113, %v3840
  %v4482 = vmul.f32 %v3114, %v3845
  %v4483 = vmul.f32 %v3115, %v3850
  %v4484 = vmul.f32 %v3116, %v3855
  %v4485 = vmul.f32 %v3117, %v3860
  %v4486 = vmul.f32 %v3118, %v3865
  %v4487 = vmul.f32 %v3119, %v3870
  %v4488 = vmul.f32 %v3120, %v3875
  %v4489 = vmul.f32 %v3121, %v3880
  %v4490 = vmul.f32 %v3122, %v3885
  %v4491 = vmul.f32 %v3123, %v3890
  %v4492 = vmul.f32 %v3124, %v3895
  %v4493 = vmul.f32 %v3125, %v3900
  %v4494 = vmul.f32 %v3126, %v3905
  %v4495 = vmul.f32 %v3127, %v3910
  %v4496 = vmul.f32 %v3128, %v3915
  %v4497 = vmul.f32 %v3129, %v3920
  %v4498 = vmul.f32 %v3130, %v3925
  %v4499 = vmul.f32 %v3131, %v3930
  %v4500 = vmul.f32 %v3132, %v3935
  %v4501 = vmul.f32 %v3133, %v3940
  %v4502 = vmul.f32 %v3134, %v3945
  %v4503 = vmul.f32 %v3135, %v3950
  %v4504 = vmul.f32 %v3136, %v3955
  %v4505 = vmul.f32 %v3137, %v3960
  %v4506 = vmul.f32 %v3138, %v3965
  %v4507 = vmul.f32 %v3139, %v3970
  %v4508 = vmul.f32 %v3140, %v3975
  %v4509 = vmul.f32 %v3141, %v3980
  %v4510 = vmul.f32 %v3142, %v3985
  %v4511 = vmul.f32 %v3143, %v3990
  %v4512 = vmul.f32 %v3144, %v3995
  %v4513 = vmul.f32 %v3145, %v4000
  %v4514 = vmul.f32 %v3146, %v4005
  %v4515 = vmul.f32 %v3147, %v4010
  %v4516 = vmul.f32 %v3148, %v4015
  %v4517 = vmul.f32 %v3149, %v4020
  %v4518 = vmul.f32 %v3150, %v4025
  %v4519 = vmul.f32 %v3151, %v4030
  %v4520 = vmul.f32 %v3152, %v4035
  %v4521 = vmul.f32 %v3153, %v4040
  %v4522 = vmul.f32 %v3154, %v4045
  %v4523 = vmul.f32 %v3155, %v4050
  %v4524 = vmul.f32 %v3156, %v4055
  %v4525 = vmul.f32 %v3157, %v4060
  %v4526 = vmul.f32 %v3158, %v4065
  %v4527 = vmul.f32 %v3159, %v4070
  %v4528 = vmul.f32 %v3160, %v4075
  %v4529 = vmul.f32 %v3161, %v4080
  %v4530 = vmul.f32 %v3162, %v4085
  %v4531 = vmul.f32 %v3163, %v4090
  %v4532 = vmul.f32 %v3164, %v4095
  %v4533 = vmul.f32 %v3165, %v4100
  %v4534 = vmul.f32 %v3166, %v4105
  %v4535 = vmul.f32 %v3167, %v4110
  %v4536 = vmul.f32 %v3168, %v4115
  %v4537 = vmul.f32 %v3169, %v4120
  %v4538 = vmul.f32 %v3170, %v4125
  %v4539 = vmul.f32 %v3171, %v4130
  %v4540 = vmul.f32 %v3172, %v4135
  %v4541 = vmul.f32 %v3173, %v4140
  %v4542 = vmul.f32 %v3174, %v4145
  %v4543 = vmul.f32 %v3175, %v4150
  %v4544 = vmul.f32 %v3176, %v4155
  %v4545 = vmul.f32 %v3177, %v4160
  %v4546 = vmul.f32 %v3178, %v4165
  %v4547 = vmul.f32 %v3179, %v4170
  %v4548 = vmul.f32 %v3180, %v4175
  %v4549 = vmul.f32 %v3181, %v4180
  %v4550 = vmul.f32 %v3182, %v4185
  %v4551 = vmul.f32 %v3183, %v4190
  %v4552 = vmul.f32 %v3184, %v4195
  %v4553 = vmul.f32 %v3185, %v4200
  %v4554 = vmul.f32 %v3186, %v4205
  %v4555 = vmul.f32 %v3187, %v4210
  %v4556 = vmul.f32 %v3188, %v4215
  %v4557 = vmul.f32 %v3189, %v4220
  %v4558 = vmul.f32 %v3190, %v4225
  %v4559 = vmul.f32 %v3191, %v4230
  %v4560 = vmul.f32 %v3192, %v4235
  %v4561 = vmul.f32 %v3193, %v4240
  %v4562 = vmul.f32 %v3194, %v4245
  %v4563 = vmul.f32 %v3195, %v4250
  %v4564 = vmul.f32 %v3196, %v4255
  %v4565 = vmul.f32 %v3197, %v4260
  %v4566 = vmul.f32 %v3198, %v4265
  %v4567 = vmul.f32 %v3199, %v4270
  %v4568 = vmul.f32 %v3200, %v4275
  %v4569 = vmul.f32 %v3201, %v4280
  %v4570 = vmul.f32 %v3202, %v4285
  %v4571 = vmul.f32 %v3203, %v4290
  %v4572 = vmul.f32 %v3204, %v4295
  %v4573 = vmul.f32 %v3205, %v4300
  %v4574 = vmul.f32 %v3206, %v4305
  %v4575 = vmul.f32 %v3207, %v4310
  %v4576 = vmul.f32 %v3208, %v4315
  %v4577 = vmul.f32 %v3209, %v4320
  %v4578 = vmul.f32 %v3210, %v4325
  %v4579 = vmul.f32 %v3211, %v4330
  %v4580 = vmul.f32 %v3212, %v4335
  %v4581 = vmul.f32 %v3213, %v4340
  %v4582 = vmul.f32 %v3214, %v4345
  %v4583 = vmul.f32 %v3215, %v4350
  %v4584 = vmul.f32 %v3216, %v4355
  %vm4585 = vcmask 400384
  %4586 = vst.msk [vmem:[%s4] sm:$0xff] %vm4585, %v4357
  %4587 = vst.msk [vmem:[%s4 + $0x8] sm:$0xff] %vm4585, %v4358
  %4588 = vst.msk [vmem:[%s4 + $0x10] sm:$0xff] %vm4585, %v4359
  %4589 = vst.msk [vmem:[%s4 + $0x18] sm:$0xff] %vm4585, %v4360
  %4590 = vst.msk [vmem:[%s4 + $0x20] sm:$0xff] %vm4585, %v4361
  %4591 = vst.msk [vmem:[%s4 + $0x28] sm:$0xff] %vm4585, %v4362
  %4592 = vst.msk [vmem:[%s4 + $0x30] sm:$0xff] %vm4585, %v4363
  %4593 = vst.msk [vmem:[%s4 + $0x38] sm:$0xff] %vm4585, %v4364
  %4594 = vst.msk [vmem:[%s4 + $0x40] sm:$0xff] %vm4585, %v4365
  %4595 = vst.msk [vmem:[%s4 + $0x48] sm:$0xff] %vm4585, %v4366
  %4596 = vst.msk [vmem:[%s4 + $0x50] sm:$0xff] %vm4585, %v4367
  %4597 = vst.msk [vmem:[%s4 + $0x58] sm:$0xff] %vm4585, %v4368
  %4598 = vst.msk [vmem:[%s4 + $0x60] sm:$0xff] %vm4585, %v4369
  %4599 = vst.msk [vmem:[%s4 + $0x68] sm:$0xff] %vm4585, %v4370
  %4600 = vst.msk [vmem:[%s4 + $0x70] sm:$0xff] %vm4585, %v4371
  %4601 = vst.msk [vmem:[%s4 + $0x78] sm:$0xff] %vm4585, %v4372
  %4602 = vst.msk [vmem:[%s4 + $0x80] sm:$0xff] %vm4585, %v4373
  %4603 = vst.msk [vmem:[%s4 + $0x88] sm:$0xff] %vm4585, %v4374
  %4604 = vst.msk [vmem:[%s4 + $0x90] sm:$0xff] %vm4585, %v4375
  %4605 = vst.msk [vmem:[%s4 + $0x98] sm:$0xff] %vm4585, %v4376
  %4606 = vst.msk [vmem:[%s4 + $0xa0] sm:$0xff] %vm4585, %v4377
  %4607 = vst.msk [vmem:[%s4 + $0xa8] sm:$0xff] %vm4585, %v4378
  %4608 = vst.msk [vmem:[%s4 + $0xb0] sm:$0xff] %vm4585, %v4379
  %4609 = vst.msk [vmem:[%s4 + $0xb8] sm:$0xff] %vm4585, %v4380
  %4610 = vst.msk [vmem:[%s4 + $0xc0] sm:$0xff] %vm4585, %v4381
  %4611 = vst.msk [vmem:[%s4 + $0xc8] sm:$0xff] %vm4585, %v4382
  %4612 = vst.msk [vmem:[%s4 + $0xd0] sm:$0xff] %vm4585, %v4383
  %4613 = vst.msk [vmem:[%s4 + $0xd8] sm:$0xff] %vm4585, %v4384
  %4614 = vst.msk [vmem:[%s4 + $0xe0] sm:$0xff] %vm4585, %v4385
  %4615 = vst.msk [vmem:[%s4 + $0xe8] sm:$0xff] %vm4585, %v4386
  %4616 = vst.msk [vmem:[%s4 + $0xf0] sm:$0xff] %vm4585, %v4387
  %4617 = vst.msk [vmem:[%s4 + $0xf8] sm:$0xff] %vm4585, %v4388
  %4618 = vst.msk [vmem:[%s4 + $0x100] sm:$0xff] %vm4585, %v4389
  %4619 = vst.msk [vmem:[%s4 + $0x108] sm:$0xff] %vm4585, %v4390
  %4620 = vst.msk [vmem:[%s4 + $0x110] sm:$0xff] %vm4585, %v4391
  %4621 = vst.msk [vmem:[%s4 + $0x118] sm:$0xff] %vm4585, %v4392
  %4622 = vst.msk [vmem:[%s4 + $0x120] sm:$0xff] %vm4585, %v4393
  %4623 = vst.msk [vmem:[%s4 + $0x128] sm:$0xff] %vm4585, %v4394
  %4624 = vst.msk [vmem:[%s4 + $0x130] sm:$0xff] %vm4585, %v4395
  %4625 = vst.msk [vmem:[%s4 + $0x138] sm:$0xff] %vm4585, %v4396
  %4626 = vst.msk [vmem:[%s4 + $0x140] sm:$0xff] %vm4585, %v4397
  %4627 = vst.msk [vmem:[%s4 + $0x148] sm:$0xff] %vm4585, %v4398
  %4628 = vst.msk [vmem:[%s4 + $0x150] sm:$0xff] %vm4585, %v4399
  %4629 = vst.msk [vmem:[%s4 + $0x158] sm:$0xff] %vm4585, %v4400
  %4630 = vst.msk [vmem:[%s4 + $0x160] sm:$0xff] %vm4585, %v4401
  %4631 = vst.msk [vmem:[%s4 + $0x168] sm:$0xff] %vm4585, %v4402
  %4632 = vst.msk [vmem:[%s4 + $0x170] sm:$0xff] %vm4585, %v4403
  %4633 = vst.msk [vmem:[%s4 + $0x178] sm:$0xff] %vm4585, %v4404
  %4634 = vst.msk [vmem:[%s4 + $0x180] sm:$0xff] %vm4585, %v4405
  %4635 = vst.msk [vmem:[%s4 + $0x188] sm:$0xff] %vm4585, %v4406
  %4636 = vst.msk [vmem:[%s4 + $0x190] sm:$0xff] %vm4585, %v4407
  %4637 = vst.msk [vmem:[%s4 + $0x198] sm:$0xff] %vm4585, %v4408
  %4638 = vst.msk [vmem:[%s4 + $0x1a0] sm:$0xff] %vm4585, %v4409
  %4639 = vst.msk [vmem:[%s4 + $0x1a8] sm:$0xff] %vm4585, %v4410
  %4640 = vst.msk [vmem:[%s4 + $0x1b0] sm:$0xff] %vm4585, %v4411
  %4641 = vst.msk [vmem:[%s4 + $0x1b8] sm:$0xff] %vm4585, %v4412
  %4642 = vst.msk [vmem:[%s4 + $0x1c0] sm:$0xff] %vm4585, %v4413
  %4643 = vst.msk [vmem:[%s4 + $0x1c8] sm:$0xff] %vm4585, %v4414
  %4644 = vst.msk [vmem:[%s4 + $0x1d0] sm:$0xff] %vm4585, %v4415
  %4645 = vst.msk [vmem:[%s4 + $0x1d8] sm:$0xff] %vm4585, %v4416
  %4646 = vst.msk [vmem:[%s4 + $0x1e0] sm:$0xff] %vm4585, %v4417
  %4647 = vst.msk [vmem:[%s4 + $0x1e8] sm:$0xff] %vm4585, %v4418
  %4648 = vst.msk [vmem:[%s4 + $0x1f0] sm:$0xff] %vm4585, %v4419
  %4649 = vst.msk [vmem:[%s4 + $0x1f8] sm:$0xff] %vm4585, %v4420
  %4650 = vst.msk [vmem:[%s4 + $0x200] sm:$0xff] %vm4585, %v4421
  %4651 = vst.msk [vmem:[%s4 + $0x208] sm:$0xff] %vm4585, %v4422
  %4652 = vst.msk [vmem:[%s4 + $0x210] sm:$0xff] %vm4585, %v4423
  %4653 = vst.msk [vmem:[%s4 + $0x218] sm:$0xff] %vm4585, %v4424
  %4654 = vst.msk [vmem:[%s4 + $0x220] sm:$0xff] %vm4585, %v4425
  %4655 = vst.msk [vmem:[%s4 + $0x228] sm:$0xff] %vm4585, %v4426
  %4656 = vst.msk [vmem:[%s4 + $0x230] sm:$0xff] %vm4585, %v4427
  %4657 = vst.msk [vmem:[%s4 + $0x238] sm:$0xff] %vm4585, %v4428
  %4658 = vst.msk [vmem:[%s4 + $0x240] sm:$0xff] %vm4585, %v4429
  %4659 = vst.msk [vmem:[%s4 + $0x248] sm:$0xff] %vm4585, %v4430
  %4660 = vst.msk [vmem:[%s4 + $0x250] sm:$0xff] %vm4585, %v4431
  %4661 = vst.msk [vmem:[%s4 + $0x258] sm:$0xff] %vm4585, %v4432
  %4662 = vst.msk [vmem:[%s4 + $0x260] sm:$0xff] %vm4585, %v4433
  %4663 = vst.msk [vmem:[%s4 + $0x268] sm:$0xff] %vm4585, %v4434
  %4664 = vst.msk [vmem:[%s4 + $0x270] sm:$0xff] %vm4585, %v4435
  %4665 = vst.msk [vmem:[%s4 + $0x278] sm:$0xff] %vm4585, %v4436
  %4666 = vst.msk [vmem:[%s4 + $0x280] sm:$0xff] %vm4585, %v4437
  %4667 = vst.msk [vmem:[%s4 + $0x288] sm:$0xff] %vm4585, %v4438
  %4668 = vst.msk [vmem:[%s4 + $0x290] sm:$0xff] %vm4585, %v4439
  %4669 = vst.msk [vmem:[%s4 + $0x298] sm:$0xff] %vm4585, %v4440
  %4670 = vst.msk [vmem:[%s4 + $0x2a0] sm:$0xff] %vm4585, %v4441
  %4671 = vst.msk [vmem:[%s4 + $0x2a8] sm:$0xff] %vm4585, %v4442
  %4672 = vst.msk [vmem:[%s4 + $0x2b0] sm:$0xff] %vm4585, %v4443
  %4673 = vst.msk [vmem:[%s4 + $0x2b8] sm:$0xff] %vm4585, %v4444
  %4674 = vst.msk [vmem:[%s4 + $0x2c0] sm:$0xff] %vm4585, %v4445
  %4675 = vst.msk [vmem:[%s4 + $0x2c8] sm:$0xff] %vm4585, %v4446
  %4676 = vst.msk [vmem:[%s4 + $0x2d0] sm:$0xff] %vm4585, %v4447
  %4677 = vst.msk [vmem:[%s4 + $0x2d8] sm:$0xff] %vm4585, %v4448
  %4678 = vst.msk [vmem:[%s4 + $0x2e0] sm:$0xff] %vm4585, %v4449
  %4679 = vst.msk [vmem:[%s4 + $0x2e8] sm:$0xff] %vm4585, %v4450
  %4680 = vst.msk [vmem:[%s4 + $0x2f0] sm:$0xff] %vm4585, %v4451
  %4681 = vst.msk [vmem:[%s4 + $0x2f8] sm:$0xff] %vm4585, %v4452
  %4682 = vst.msk [vmem:[%s4 + $0x300] sm:$0xff] %vm4585, %v4453
  %4683 = vst.msk [vmem:[%s4 + $0x308] sm:$0xff] %vm4585, %v4454
  %4684 = vst.msk [vmem:[%s4 + $0x310] sm:$0xff] %vm4585, %v4455
  %4685 = vst.msk [vmem:[%s4 + $0x318] sm:$0xff] %vm4585, %v4456
  %4686 = vst.msk [vmem:[%s4 + $0x320] sm:$0xff] %vm4585, %v4457
  %4687 = vst.msk [vmem:[%s4 + $0x328] sm:$0xff] %vm4585, %v4458
  %4688 = vst.msk [vmem:[%s4 + $0x330] sm:$0xff] %vm4585, %v4459
  %4689 = vst.msk [vmem:[%s4 + $0x338] sm:$0xff] %vm4585, %v4460
  %4690 = vst.msk [vmem:[%s4 + $0x340] sm:$0xff] %vm4585, %v4461
  %4691 = vst.msk [vmem:[%s4 + $0x348] sm:$0xff] %vm4585, %v4462
  %4692 = vst.msk [vmem:[%s4 + $0x350] sm:$0xff] %vm4585, %v4463
  %4693 = vst.msk [vmem:[%s4 + $0x358] sm:$0xff] %vm4585, %v4464
  %4694 = vst.msk [vmem:[%s4 + $0x360] sm:$0xff] %vm4585, %v4465
  %4695 = vst.msk [vmem:[%s4 + $0x368] sm:$0xff] %vm4585, %v4466
  %4696 = vst.msk [vmem:[%s4 + $0x370] sm:$0xff] %vm4585, %v4467
  %4697 = vst.msk [vmem:[%s4 + $0x378] sm:$0xff] %vm4585, %v4468
  %4698 = vst.msk [vmem:[%s4 + $0x380] sm:$0xff] %vm4585, %v4469
  %4699 = vst.msk [vmem:[%s4 + $0x388] sm:$0xff] %vm4585, %v4470
  %4700 = vst.msk [vmem:[%s4 + $0x390] sm:$0xff] %vm4585, %v4471
  %4701 = vst.msk [vmem:[%s4 + $0x398] sm:$0xff] %vm4585, %v4472
  %4702 = vst.msk [vmem:[%s4 + $0x3a0] sm:$0xff] %vm4585, %v4473
  %4703 = vst.msk [vmem:[%s4 + $0x3a8] sm:$0xff] %vm4585, %v4474
  %4704 = vst.msk [vmem:[%s4 + $0x3b0] sm:$0xff] %vm4585, %v4475
  %4705 = vst.msk [vmem:[%s4 + $0x3b8] sm:$0xff] %vm4585, %v4476
  %4706 = vst.msk [vmem:[%s4 + $0x3c0] sm:$0xff] %vm4585, %v4477
  %4707 = vst.msk [vmem:[%s4 + $0x3c8] sm:$0xff] %vm4585, %v4478
  %4708 = vst.msk [vmem:[%s4 + $0x3d0] sm:$0xff] %vm4585, %v4479
  %4709 = vst.msk [vmem:[%s4 + $0x3d8] sm:$0xff] %vm4585, %v4480
  %4710 = vst.msk [vmem:[%s4 + $0x3e0] sm:$0xff] %vm4585, %v4481
  %4711 = vst.msk [vmem:[%s4 + $0x3e8] sm:$0xff] %vm4585, %v4482
  %4712 = vst.msk [vmem:[%s4 + $0x3f0] sm:$0xff] %vm4585, %v4483
  %4713 = vst.msk [vmem:[%s4 + $0x3f8] sm:$0xff] %vm4585, %v4484
  %4714 = vst.msk [vmem:[%s4 + $0x400] sm:$0xff] %vm4585, %v4485
  %4715 = vst.msk [vmem:[%s4 + $0x408] sm:$0xff] %vm4585, %v4486
  %4716 = vst.msk [vmem:[%s4 + $0x410] sm:$0xff] %vm4585, %v4487
  %4717 = vst.msk [vmem:[%s4 + $0x418] sm:$0xff] %vm4585, %v4488
  %4718 = vst.msk [vmem:[%s4 + $0x420] sm:$0xff] %vm4585, %v4489
  %4719 = vst.msk [vmem:[%s4 + $0x428] sm:$0xff] %vm4585, %v4490
  %4720 = vst.msk [vmem:[%s4 + $0x430] sm:$0xff] %vm4585, %v4491
  %4721 = vst.msk [vmem:[%s4 + $0x438] sm:$0xff] %vm4585, %v4492
  %4722 = vst.msk [vmem:[%s4 + $0x440] sm:$0xff] %vm4585, %v4493
  %4723 = vst.msk [vmem:[%s4 + $0x448] sm:$0xff] %vm4585, %v4494
  %4724 = vst.msk [vmem:[%s4 + $0x450] sm:$0xff] %vm4585, %v4495
  %4725 = vst.msk [vmem:[%s4 + $0x458] sm:$0xff] %vm4585, %v4496
  %4726 = vst.msk [vmem:[%s4 + $0x460] sm:$0xff] %vm4585, %v4497
  %4727 = vst.msk [vmem:[%s4 + $0x468] sm:$0xff] %vm4585, %v4498
  %4728 = vst.msk [vmem:[%s4 + $0x470] sm:$0xff] %vm4585, %v4499
  %4729 = vst.msk [vmem:[%s4 + $0x478] sm:$0xff] %vm4585, %v4500
  %4730 = vst.msk [vmem:[%s4 + $0x480] sm:$0xff] %vm4585, %v4501
  %4731 = vst.msk [vmem:[%s4 + $0x488] sm:$0xff] %vm4585, %v4502
  %4732 = vst.msk [vmem:[%s4 + $0x490] sm:$0xff] %vm4585, %v4503
  %4733 = vst.msk [vmem:[%s4 + $0x498] sm:$0xff] %vm4585, %v4504
  %4734 = vst.msk [vmem:[%s4 + $0x4a0] sm:$0xff] %vm4585, %v4505
  %4735 = vst.msk [vmem:[%s4 + $0x4a8] sm:$0xff] %vm4585, %v4506
  %4736 = vst.msk [vmem:[%s4 + $0x4b0] sm:$0xff] %vm4585, %v4507
  %4737 = vst.msk [vmem:[%s4 + $0x4b8] sm:$0xff] %vm4585, %v4508
  %4738 = vst.msk [vmem:[%s4 + $0x4c0] sm:$0xff] %vm4585, %v4509
  %4739 = vst.msk [vmem:[%s4 + $0x4c8] sm:$0xff] %vm4585, %v4510
  %4740 = vst.msk [vmem:[%s4 + $0x4d0] sm:$0xff] %vm4585, %v4511
  %4741 = vst.msk [vmem:[%s4 + $0x4d8] sm:$0xff] %vm4585, %v4512
  %4742 = vst.msk [vmem:[%s4 + $0x4e0] sm:$0xff] %vm4585, %v4513
  %4743 = vst.msk [vmem:[%s4 + $0x4e8] sm:$0xff] %vm4585, %v4514
  %4744 = vst.msk [vmem:[%s4 + $0x4f0] sm:$0xff] %vm4585, %v4515
  %4745 = vst.msk [vmem:[%s4 + $0x4f8] sm:$0xff] %vm4585, %v4516
  %4746 = vst.msk [vmem:[%s4 + $0x500] sm:$0xff] %vm4585, %v4517
  %4747 = vst.msk [vmem:[%s4 + $0x508] sm:$0xff] %vm4585, %v4518
  %4748 = vst.msk [vmem:[%s4 + $0x510] sm:$0xff] %vm4585, %v4519
  %4749 = vst.msk [vmem:[%s4 + $0x518] sm:$0xff] %vm4585, %v4520
  %4750 = vst.msk [vmem:[%s4 + $0x520] sm:$0xff] %vm4585, %v4521
  %4751 = vst.msk [vmem:[%s4 + $0x528] sm:$0xff] %vm4585, %v4522
  %4752 = vst.msk [vmem:[%s4 + $0x530] sm:$0xff] %vm4585, %v4523
  %4753 = vst.msk [vmem:[%s4 + $0x538] sm:$0xff] %vm4585, %v4524
  %4754 = vst.msk [vmem:[%s4 + $0x540] sm:$0xff] %vm4585, %v4525
  %4755 = vst.msk [vmem:[%s4 + $0x548] sm:$0xff] %vm4585, %v4526
  %4756 = vst.msk [vmem:[%s4 + $0x550] sm:$0xff] %vm4585, %v4527
  %4757 = vst.msk [vmem:[%s4 + $0x558] sm:$0xff] %vm4585, %v4528
  %4758 = vst.msk [vmem:[%s4 + $0x560] sm:$0xff] %vm4585, %v4529
  %4759 = vst.msk [vmem:[%s4 + $0x568] sm:$0xff] %vm4585, %v4530
  %4760 = vst.msk [vmem:[%s4 + $0x570] sm:$0xff] %vm4585, %v4531
  %4761 = vst.msk [vmem:[%s4 + $0x578] sm:$0xff] %vm4585, %v4532
  %4762 = vst.msk [vmem:[%s4 + $0x580] sm:$0xff] %vm4585, %v4533
  %4763 = vst.msk [vmem:[%s4 + $0x588] sm:$0xff] %vm4585, %v4534
  %4764 = vst.msk [vmem:[%s4 + $0x590] sm:$0xff] %vm4585, %v4535
  %4765 = vst.msk [vmem:[%s4 + $0x598] sm:$0xff] %vm4585, %v4536
  %4766 = vst.msk [vmem:[%s4 + $0x5a0] sm:$0xff] %vm4585, %v4537
  %4767 = vst.msk [vmem:[%s4 + $0x5a8] sm:$0xff] %vm4585, %v4538
  %4768 = vst.msk [vmem:[%s4 + $0x5b0] sm:$0xff] %vm4585, %v4539
  %4769 = vst.msk [vmem:[%s4 + $0x5b8] sm:$0xff] %vm4585, %v4540
  %4770 = vst.msk [vmem:[%s4 + $0x5c0] sm:$0xff] %vm4585, %v4541
  %4771 = vst.msk [vmem:[%s4 + $0x5c8] sm:$0xff] %vm4585, %v4542
  %4772 = vst.msk [vmem:[%s4 + $0x5d0] sm:$0xff] %vm4585, %v4543
  %4773 = vst.msk [vmem:[%s4 + $0x5d8] sm:$0xff] %vm4585, %v4544
  %4774 = vst.msk [vmem:[%s4 + $0x5e0] sm:$0xff] %vm4585, %v4545
  %4775 = vst.msk [vmem:[%s4 + $0x5e8] sm:$0xff] %vm4585, %v4546
  %4776 = vst.msk [vmem:[%s4 + $0x5f0] sm:$0xff] %vm4585, %v4547
  %4777 = vst.msk [vmem:[%s4 + $0x5f8] sm:$0xff] %vm4585, %v4548
  %4778 = vst.msk [vmem:[%s4 + $0x600] sm:$0xff] %vm4585, %v4549
  %4779 = vst.msk [vmem:[%s4 + $0x608] sm:$0xff] %vm4585, %v4550
  %4780 = vst.msk [vmem:[%s4 + $0x610] sm:$0xff] %vm4585, %v4551
  %4781 = vst.msk [vmem:[%s4 + $0x618] sm:$0xff] %vm4585, %v4552
  %4782 = vst.msk [vmem:[%s4 + $0x620] sm:$0xff] %vm4585, %v4553
  %4783 = vst.msk [vmem:[%s4 + $0x628] sm:$0xff] %vm4585, %v4554
  %4784 = vst.msk [vmem:[%s4 + $0x630] sm:$0xff] %vm4585, %v4555
  %4785 = vst.msk [vmem:[%s4 + $0x638] sm:$0xff] %vm4585, %v4556
  %4786 = vst.msk [vmem:[%s4 + $0x640] sm:$0xff] %vm4585, %v4557
  %4787 = vst.msk [vmem:[%s4 + $0x648] sm:$0xff] %vm4585, %v4558
  %4788 = vst.msk [vmem:[%s4 + $0x650] sm:$0xff] %vm4585, %v4559
  %4789 = vst.msk [vmem:[%s4 + $0x658] sm:$0xff] %vm4585, %v4560
  %4790 = vst.msk [vmem:[%s4 + $0x660] sm:$0xff] %vm4585, %v4561
  %4791 = vst.msk [vmem:[%s4 + $0x668] sm:$0xff] %vm4585, %v4562
  %4792 = vst.msk [vmem:[%s4 + $0x670] sm:$0xff] %vm4585, %v4563
  %4793 = vst.msk [vmem:[%s4 + $0x678] sm:$0xff] %vm4585, %v4564
  %4794 = vst.msk [vmem:[%s4 + $0x680] sm:$0xff] %vm4585, %v4565
  %4795 = vst.msk [vmem:[%s4 + $0x688] sm:$0xff] %vm4585, %v4566
  %4796 = vst.msk [vmem:[%s4 + $0x690] sm:$0xff] %vm4585, %v4567
  %4797 = vst.msk [vmem:[%s4 + $0x698] sm:$0xff] %vm4585, %v4568
  %4798 = vst.msk [vmem:[%s4 + $0x6a0] sm:$0xff] %vm4585, %v4569
  %4799 = vst.msk [vmem:[%s4 + $0x6a8] sm:$0xff] %vm4585, %v4570
  %4800 = vst.msk [vmem:[%s4 + $0x6b0] sm:$0xff] %vm4585, %v4571
  %4801 = vst.msk [vmem:[%s4 + $0x6b8] sm:$0xff] %vm4585, %v4572
  %4802 = vst.msk [vmem:[%s4 + $0x6c0] sm:$0xff] %vm4585, %v4573
  %4803 = vst.msk [vmem:[%s4 + $0x6c8] sm:$0xff] %vm4585, %v4574
  %4804 = vst.msk [vmem:[%s4 + $0x6d0] sm:$0xff] %vm4585, %v4575
  %4805 = vst.msk [vmem:[%s4 + $0x6d8] sm:$0xff] %vm4585, %v4576
  %4806 = vst.msk [vmem:[%s4 + $0x6e0] sm:$0xff] %vm4585, %v4577
  %4807 = vst.msk [vmem:[%s4 + $0x6e8] sm:$0xff] %vm4585, %v4578
  %4808 = vst.msk [vmem:[%s4 + $0x6f0] sm:$0xff] %vm4585, %v4579
  %4809 = vst.msk [vmem:[%s4 + $0x6f8] sm:$0xff] %vm4585, %v4580
  %4810 = vst.msk [vmem:[%s4 + $0x700] sm:$0xff] %vm4585, %v4581
  %4811 = vst.msk [vmem:[%s4 + $0x708] sm:$0xff] %vm4585, %v4582
  %4812 = vst.msk [vmem:[%s4 + $0x710] sm:$0xff] %vm4585, %v4583
  %4813 = vst.msk [vmem:[%s4 + $0x718] sm:$0xff] %vm4585, %v4584
  // Predicated region
  $region18: #{tpu_custom_call.1} parent=0 // pred_check
    _
  $region19: #{tpu_custom_call.1} parent=0 // pred_check_branch
    %4815 = sbr.rel (0) target = $region21
  $region20: #{tpu_custom_call.1} parent=0 // pred_region
    _
  $region21: #{tpu_custom_call.1} parent=0 // pred_fallthru
    _
  // Predicated region
  $region22: #{tpu_custom_call.1} parent=0 // pred_check
    _
  $region23: #{tpu_custom_call.1} parent=0 // pred_check_branch
    %4817 = sbr.rel (0) target = $region25
  $region24: #{tpu_custom_call.1} parent=0 // pred_region
    _
  $region25: #{tpu_custom_call.1} parent=0 // pred_fallthru
    _

</llo_original>
